<compile_context>
chip_gen: v6e
topology: v6e:2x2x1
jax: 0.10.0
libtpu: 0.0.40
codegen_flags: <defaults>
</compile_context>

<pallas_src>
import jax
import jax.numpy as jnp
from jax.experimental import pallas as pl
from jax.experimental.pallas import tpu as pltpu


_C1_PAD = 128   # conv1 output channels zero-padded 64 -> 128 (lane-dense stores)


def _wants_two_core_split():
    """True on TPU generations with 2 TensorCores per chip (v7x)."""
    try:
        kind = (getattr(jax.devices()[0], "device_kind", "") or "").lower()
        return "v7" in kind
    except Exception:
        return False


# ----------------------------------------------------------------------------
# Pallas kernels
# ----------------------------------------------------------------------------
def _matmul_bias_relu_kernel(x_ref, w_ref, b_ref, o_ref):
    acc = jnp.dot(x_ref[...], w_ref[...], preferred_element_type=jnp.float32)
    o_ref[...] = jnp.maximum(acc + b_ref[...], 0.0).astype(o_ref.dtype)


def matmul_bias_relu(x, w, b_row, out_dtype=jnp.bfloat16):
    """relu((M, K) @ (K, N) + b).  Single lane-dense N block; M tiled if large."""
    M, K = x.shape
    K2, N = w.shape
    assert K == K2 and b_row.shape == (1, N)
    m_tile = M if M <= 512 else 512            # M grid axis only when it matters
    grid = (pl.cdiv(M, m_tile),)
    return pl.pallas_call(
        _matmul_bias_relu_kernel,
        grid=grid,
        in_specs=[
            pl.BlockSpec((m_tile, K), lambda i: (i, 0)),
            pl.BlockSpec((K, N), lambda i: (0, 0)),
            pl.BlockSpec((1, N), lambda i: (0, 0)),
        ],
        out_specs=pl.BlockSpec((m_tile, N), lambda i: (i, 0)),
        out_shape=jax.ShapeDtypeStruct((M, N), out_dtype),
        compiler_params=pltpu.CompilerParams(dimension_semantics=("parallel",)),
    )(x, w, b_row)


def _tail_kernel(p_ref, w3_ref, b3_ref, wl_ref, bl_ref, o_ref):
    """conv3 matmul + bias + ReLU + 2x2 maxpool (to 1x1) + Linear + ReLU."""
    # conv3 matmul for all B*2*2 output positions; rows are ordered (i, j, b).
    acc = jnp.dot(p_ref[...], w3_ref[...], preferred_element_type=jnp.float32)
    B = o_ref.shape[0]
    n_pos = p_ref.shape[0] // B                # 2*2 spatial positions per image
    # MaxPool2d(2) -> 1x1: max over the n_pos position-groups of B rows each.
    # Per-channel bias + monotone ReLU commute with max, so apply them after.
    m = acc[0:B, :]
    for q in range(1, n_pos):
        m = jnp.maximum(m, acc[q * B:(q + 1) * B, :])
    h = jnp.maximum(m + b3_ref[...], 0.0)                      # (B, 256) f32
    # flatten (spatial is 1x1) + Linear + ReLU
    out = jnp.dot(h.astype(wl_ref.dtype), wl_ref[...],
                  preferred_element_type=jnp.float32)
    o_ref[...] = jnp.maximum(out + bl_ref[...], 0.0)


# ----------------------------------------------------------------------------
# Glue: im2col / pooling (jitted XLA, fuses with surrounding gathers)
# ----------------------------------------------------------------------------
def _im2col(x_nhwc, k):
    B, H, W, C = x_nhwc.shape
    Ho, Wo = H - k + 1, W - k + 1
    cols = [x_nhwc[:, di:di + Ho, dj:dj + Wo, :]
            for di in range(k) for dj in range(k)]
    p = jnp.concatenate(cols, axis=-1)         # (B, Ho, Wo, k*k*C), K = (di, dj, c)
    return p.reshape(B * Ho * Wo, k * k * C), (B, Ho, Wo)


def conv2d_relu(x_nhwc, w_mat, b_row, k):
    """Valid conv (kernel k) + bias + ReLU; weight pre-laid-out as (k*k*Cin, Cout)."""
    B, H, W, C = x_nhwc.shape
    if k == 1:                                 # pointwise conv: no im2col needed
        Ho, Wo = H, W
        patches = x_nhwc.reshape(B * H * W, C)
    else:
        patches, (_, Ho, Wo) = _im2col(x_nhwc, k)
    out = matmul_bias_relu(patches, w_mat, b_row)
    return out.reshape(B, Ho, Wo, w_mat.shape[1])


def maxpool2_nhwc(x):
    """MaxPool2d(2) (floor semantics), NHWC, in the XLA glue."""
    B, H, W, C = x.shape
    Ho, Wo = H // 2, W // 2
    x = x[:, :2 * Ho, :2 * Wo, :]
    return jnp.maximum(
        jnp.maximum(x[:, 0::2, 0::2, :], x[:, 0::2, 1::2, :]),
        jnp.maximum(x[:, 1::2, 0::2, :], x[:, 1::2, 1::2, :]))


def conv3_pool_linear(x_nhwc, w3, b3, wl, bl):
    """Fused conv3(k=2) + ReLU + MaxPool2d(2) + flatten + Linear + ReLU."""
    B, H, W, C = x_nhwc.shape
    H3, W3 = H - 1, W - 1                      # conv3 output spatial (k=2)
    K3, N3 = w3.shape
    NL = wl.shape[1]
    if H3 == 2 and W3 == 2:                    # pooled spatial == 1x1 (this model)
        assert K3 == 4 * C
        cols = [x_nhwc[:, di:di + H3, dj:dj + W3, :]
                for di in range(2) for dj in range(2)]
        p = jnp.concatenate(cols, axis=-1)                      # (B,2,2,4C)
        p = jnp.transpose(p, (1, 2, 0, 3)).reshape(H3 * W3 * B, K3)  # rows (i,j,b)
        n_split = 2 if (_wants_two_core_split() and NL % 256 == 0) else 1
        nt = NL // n_split
        return pl.pallas_call(
            _tail_kernel,
            grid=(n_split,),
            in_specs=[
                pl.BlockSpec((H3 * W3 * B, K3), lambda j: (0, 0)),
                pl.BlockSpec((K3, N3), lambda j: (0, 0)),
                pl.BlockSpec((1, N3), lambda j: (0, 0)),
                pl.BlockSpec((N3, nt), lambda j: (0, j)),
                pl.BlockSpec((1, nt), lambda j: (0, j)),
            ],
            out_specs=pl.BlockSpec((B, nt), lambda j: (0, j)),
            out_shape=jax.ShapeDtypeStruct((B, NL), jnp.float32),
            compiler_params=pltpu.CompilerParams(
                dimension_semantics=("parallel",)),
        )(p.astype(jnp.bfloat16), w3, b3, wl, bl)
    # Generic fallback (other image sizes): unfused conv3 + XLA pool + Linear.
    h = conv2d_relu(x_nhwc, w3, b3, 2)
    h = maxpool2_nhwc(h)
    flat = jnp.transpose(h, (0, 3, 1, 2)).reshape(B, -1)        # NCHW flatten order
    return matmul_bias_relu(flat.astype(jnp.bfloat16), wl, bl,
                            out_dtype=jnp.float32)


# ----------------------------------------------------------------------------
# Parameters (PyTorch-like uniform(-1/sqrt(fan_in), ...), pre-laid-out)
# ----------------------------------------------------------------------------
def init_private_params(key, ncha, size, ntasks):
    k1, k2 = size // 8, size // 10
    s = (size - k1 + 1) // 2
    s = (s - k2 + 1) // 2
    s = (s - 2 + 1) // 2
    feat = 256 * s * s

    def uni(k, shape, fan_in):
        bound = 1.0 / float(fan_in) ** 0.5
        return jax.random.uniform(k, shape, jnp.float32, -bound, bound)

    def conv_mat(k, cout, cin, ksz, cin_pad=0, cout_pad=0):
        fan_in = cin * ksz * ksz
        w = uni(k, (cout, cin, ksz, ksz), fan_in)               # torch OIHW
        w = jnp.transpose(w, (2, 3, 1, 0))                      # (kh, kw, Cin, Cout)
        w = jnp.pad(w, ((0, 0), (0, 0), (0, cin_pad), (0, cout_pad)))
        return w.reshape(ksz * ksz * (cin + cin_pad),
                         cout + cout_pad).astype(jnp.bfloat16)

    def bias_row(k, cout, fan_in, cout_pad=0):
        b = uni(k, (cout,), fan_in)
        return jnp.pad(b, (0, cout_pad)).reshape(1, cout + cout_pad)   # f32

    params = []
    for t in range(ntasks):
        ks = jax.random.split(jax.random.fold_in(key, t), 8)
        params.append(dict(
            conv1_w=conv_mat(ks[0], 64, ncha, k1, cout_pad=_C1_PAD - 64),
            conv1_b=bias_row(ks[1], 64, ncha * k1 * k1, cout_pad=_C1_PAD - 64),
            conv2_w=conv_mat(ks[2], 128, 64, k2, cin_pad=_C1_PAD - 64),
            conv2_b=bias_row(ks[3], 128, 64 * k2 * k2),
            conv3_w=conv_mat(ks[4], 256, 128, 2),
            conv3_b=bias_row(ks[5], 256, 128 * 2 * 2),
            lin_w=uni(ks[6], (feat, 2048), feat).astype(jnp.bfloat16),
            lin_b=bias_row(ks[7], 2048, feat),
        ))
    meta = dict(k1=k1, k2=k2, feat=feat)
    return params, meta


# ----------------------------------------------------------------------------
# Forward pass (== Private.forward(x, t); dropout == identity in eval mode)
# ----------------------------------------------------------------------------
def private_forward(params, x_nchw, t, k1, k2):
    p = params[t]                                               # task selection
    x = jnp.transpose(x_nchw, (0, 2, 3, 1)).astype(jnp.bfloat16)  # NCHW -> NHWC

    x = conv2d_relu(x, p["conv1_w"], p["conv1_b"], k1)  # (B,.,.,128): 64 real + 64 zero
    x = maxpool2_nhwc(x)
    x = conv2d_relu(x, p["conv2_w"], p["conv2_b"], k2)  # (B,.,.,128)
    x = maxpool2_nhwc(x)
    # conv3 + ReLU + MaxPool2d(2) + flatten + Linear + ReLU fused in one kernel.
    return conv3_pool_linear(x, p["conv3_w"], p["conv3_b"],
                             p["lin_w"], p["lin_b"])


if __name__ == "__main__":
    # args: image_channel=4, image_size=16, ntasks=2; batch=2
    ncha, size, ntasks, batch = 4, 16, 2, 2
    key = jax.random.PRNGKey(0)
    kx, kp = jax.random.split(key)

    params, meta = init_private_params(kp, ncha, size, ntasks)
    x = jax.random.normal(kx, (batch, ncha, size, size), dtype=jnp.float32)

    fwd = jax.jit(private_forward, static_argnums=(2, 3, 4))
    out = jax.block_until_ready(fwd(params, x, 1, meta["k1"], meta["k2"]))

    assert out.shape == (batch, 2048), out.shape
    assert bool(jnp.all(out >= 0.0))   # final ReLU
    print("KERNEL_OK")
</pallas_src>

<mosaic_0001>
module attributes {stable_mosaic.version = 11 : i64} {
  func.func @_matmul_bias_relu_kernel(%arg0: i32, %arg1: memref<450x16xbf16, #tpu.memory_space<vmem>>, %arg2: memref<16x128xbf16, #tpu.memory_space<vmem>>, %arg3: memref<1x128xf32, #tpu.memory_space<vmem>>, %arg4: memref<450x128xbf16, #tpu.memory_space<vmem>>) attributes {dimension_semantics = [#tpu.dimension_semantics<parallel>], iteration_bounds = array<i64: 1>, scalar_prefetch = 0 : i64, scratch_operands = 0 : i64, tpu.core_type = #tpu.core_type<tc>, window_params = [{transform_indices = @transform_0, window_bounds = array<i64: 450, 16>}, {pipeline_mode = #tpu.pipeline_mode<synchronous>, transform_indices = @transform_1, window_bounds = array<i64: 16, 128>}, {pipeline_mode = #tpu.pipeline_mode<synchronous>, transform_indices = @transform_2, window_bounds = array<i64: 1, 128>}, {transform_indices = @transform_3, window_bounds = array<i64: 450, 128>}]} {
    %c0 = arith.constant 0 : index
    %c0_0 = arith.constant 0 : index
    %0 = vector.load %arg1[%c0, %c0_0] : memref<450x16xbf16, #tpu.memory_space<vmem>>, vector<450x16xbf16>
    %c0_1 = arith.constant 0 : index
    %c0_2 = arith.constant 0 : index
    %1 = vector.load %arg2[%c0_1, %c0_2] : memref<16x128xbf16, #tpu.memory_space<vmem>>, vector<16x128xbf16>
    %cst = arith.constant dense<0.000000e+00> : vector<450x128xf32>
    %2 = tpu.matmul %0, %1, %cst {dimension_numbers = #tpu.dot_dimension_numbers<[1], [0], [0], [1], [0, 0, 1, 1], [], []>} : vector<450x16xbf16>, vector<16x128xbf16>, vector<450x128xf32> -> vector<450x128xf32>
    %c0_3 = arith.constant 0 : index
    %c0_4 = arith.constant 0 : index
    %3 = vector.load %arg3[%c0_3, %c0_4] : memref<1x128xf32, #tpu.memory_space<vmem>>, vector<1x128xf32>
    %4 = vector.broadcast %3 : vector<1x128xf32> to vector<450x128xf32>
    %5 = arith.addf %2, %4 : vector<450x128xf32>
    %cst_5 = arith.constant 0.000000e+00 : f32
    %6 = vector.broadcast %cst_5 : f32 to vector<450x128xf32>
    %7 = arith.maximumf %5, %6 : vector<450x128xf32>
    %8 = arith.truncf %7 : vector<450x128xf32> to vector<450x128xbf16>
    %c0_6 = arith.constant 0 : index
    %c0_7 = arith.constant 0 : index
    %9 = vector.load %arg4[%c0_6, %c0_7] : memref<450x128xbf16, #tpu.memory_space<vmem>>, vector<450x128xbf16>
    tpu.vector_store %arg4[%c0_6, %c0_7], %8 {strides = array<i32>} : memref<450x128xbf16, #tpu.memory_space<vmem>>, vector<450x128xbf16>,
    return
  }
  func.func @transform_0(%arg0: i32) -> (i32, i32) {
    %c0_i32 = arith.constant 0 : i32
    %c0_i32_0 = arith.constant 0 : i32
    return %arg0, %c0_i32 : i32, i32
  }
  func.func @transform_1(%arg0: i32) -> (i32, i32) {
    %c0_i32 = arith.constant 0 : i32
    %c0_i32_0 = arith.constant 0 : i32
    %c0_i32_1 = arith.constant 0 : i32
    return %c0_i32, %c0_i32_0 : i32, i32
  }
  func.func @transform_2(%arg0: i32) -> (i32, i32) {
    %c0_i32 = arith.constant 0 : i32
    %c0_i32_0 = arith.constant 0 : i32
    %c0_i32_1 = arith.constant 0 : i32
    return %c0_i32, %c0_i32_0 : i32, i32
  }
  func.func @transform_3(%arg0: i32) -> (i32, i32) {
    %c0_i32 = arith.constant 0 : i32
    %c0_i32_0 = arith.constant 0 : i32
    return %arg0, %c0_i32 : i32, i32
  }
}

module attributes {stable_mosaic.version = 11 : i64} {
  func.func @_matmul_bias_relu_kernel(%arg0: i32, %arg1: memref<98x128xbf16, #tpu.memory_space<vmem>>, %arg2: memref<128x128xbf16, #tpu.memory_space<vmem>>, %arg3: memref<1x128xf32, #tpu.memory_space<vmem>>, %arg4: memref<98x128xbf16, #tpu.memory_space<vmem>>) attributes {dimension_semantics = [#tpu.dimension_semantics<parallel>], iteration_bounds = array<i64: 1>, scalar_prefetch = 0 : i64, scratch_operands = 0 : i64, tpu.core_type = #tpu.core_type<tc>, window_params = [{transform_indices = @transform_0, window_bounds = array<i64: 98, 128>}, {pipeline_mode = #tpu.pipeline_mode<synchronous>, transform_indices = @transform_1, window_bounds = array<i64: 128, 128>}, {pipeline_mode = #tpu.pipeline_mode<synchronous>, transform_indices = @transform_2, window_bounds = array<i64: 1, 128>}, {transform_indices = @transform_3, window_bounds = array<i64: 98, 128>}]} {
    %c0 = arith.constant 0 : index
    %c0_0 = arith.constant 0 : index
    %0 = vector.load %arg1[%c0, %c0_0] : memref<98x128xbf16, #tpu.memory_space<vmem>>, vector<98x128xbf16>
    %c0_1 = arith.constant 0 : index
    %c0_2 = arith.constant 0 : index
    %1 = vector.load %arg2[%c0_1, %c0_2] : memref<128x128xbf16, #tpu.memory_space<vmem>>, vector<128x128xbf16>
    %cst = arith.constant dense<0.000000e+00> : vector<98x128xf32>
    %2 = tpu.matmul %0, %1, %cst {dimension_numbers = #tpu.dot_dimension_numbers<[1], [0], [0], [1], [0, 0, 1, 1], [], []>} : vector<98x128xbf16>, vector<128x128xbf16>, vector<98x128xf32> -> vector<98x128xf32>
    %c0_3 = arith.constant 0 : index
    %c0_4 = arith.constant 0 : index
    %3 = vector.load %arg3[%c0_3, %c0_4] : memref<1x128xf32, #tpu.memory_space<vmem>>, vector<1x128xf32>
    %4 = vector.broadcast %3 : vector<1x128xf32> to vector<98x128xf32>
    %5 = arith.addf %2, %4 : vector<98x128xf32>
    %cst_5 = arith.constant 0.000000e+00 : f32
    %6 = vector.broadcast %cst_5 : f32 to vector<98x128xf32>
    %7 = arith.maximumf %5, %6 : vector<98x128xf32>
    %8 = arith.truncf %7 : vector<98x128xf32> to vector<98x128xbf16>
    %c0_6 = arith.constant 0 : index
    %c0_7 = arith.constant 0 : index
    %9 = vector.load %arg4[%c0_6, %c0_7] : memref<98x128xbf16, #tpu.memory_space<vmem>>, vector<98x128xbf16>
    tpu.vector_store %arg4[%c0_6, %c0_7], %8 {strides = array<i32>} : memref<98x128xbf16, #tpu.memory_space<vmem>>, vector<98x128xbf16>,
    return
  }
  func.func @transform_0(%arg0: i32) -> (i32, i32) {
    %c0_i32 = arith.constant 0 : i32
    %c0_i32_0 = arith.constant 0 : i32
    return %arg0, %c0_i32 : i32, i32
  }
  func.func @transform_1(%arg0: i32) -> (i32, i32) {
    %c0_i32 = arith.constant 0 : i32
    %c0_i32_0 = arith.constant 0 : i32
    %c0_i32_1 = arith.constant 0 : i32
    return %c0_i32, %c0_i32_0 : i32, i32
  }
  func.func @transform_2(%arg0: i32) -> (i32, i32) {
    %c0_i32 = arith.constant 0 : i32
    %c0_i32_0 = arith.constant 0 : i32
    %c0_i32_1 = arith.constant 0 : i32
    return %c0_i32, %c0_i32_0 : i32, i32
  }
  func.func @transform_3(%arg0: i32) -> (i32, i32) {
    %c0_i32 = arith.constant 0 : i32
    %c0_i32_0 = arith.constant 0 : i32
    return %arg0, %c0_i32 : i32, i32
  }
}

module attributes {stable_mosaic.version = 11 : i64} {
  func.func @_tail_kernel(%arg0: i32, %arg1: memref<8x512xbf16, #tpu.memory_space<vmem>>, %arg2: memref<512x256xbf16, #tpu.memory_space<vmem>>, %arg3: memref<1x256xf32, #tpu.memory_space<vmem>>, %arg4: memref<256x2048xbf16, #tpu.memory_space<vmem>>, %arg5: memref<1x2048xf32, #tpu.memory_space<vmem>>, %arg6: memref<2x2048xf32, #tpu.memory_space<vmem>>) attributes {dimension_semantics = [#tpu.dimension_semantics<parallel>], iteration_bounds = array<i64: 1>, scalar_prefetch = 0 : i64, scratch_operands = 0 : i64, tpu.core_type = #tpu.core_type<tc>, window_params = [{pipeline_mode = #tpu.pipeline_mode<synchronous>, transform_indices = @transform_0, window_bounds = array<i64: 8, 512>}, {pipeline_mode = #tpu.pipeline_mode<synchronous>, transform_indices = @transform_1, window_bounds = array<i64: 512, 256>}, {pipeline_mode = #tpu.pipeline_mode<synchronous>, transform_indices = @transform_2, window_bounds = array<i64: 1, 256>}, {transform_indices = @transform_3, window_bounds = array<i64: 256, 2048>}, {transform_indices = @transform_4, window_bounds = array<i64: 1, 2048>}, {transform_indices = @transform_5, window_bounds = array<i64: 2, 2048>}]} {
    %c0 = arith.constant 0 : index
    %c0_0 = arith.constant 0 : index
    %0 = vector.load %arg1[%c0, %c0_0] : memref<8x512xbf16, #tpu.memory_space<vmem>>, vector<8x512xbf16>
    %c0_1 = arith.constant 0 : index
    %c0_2 = arith.constant 0 : index
    %1 = vector.load %arg2[%c0_1, %c0_2] : memref<512x256xbf16, #tpu.memory_space<vmem>>, vector<512x256xbf16>
    %cst = arith.constant dense<0.000000e+00> : vector<8x256xf32>
    %2 = tpu.matmul %0, %1, %cst {dimension_numbers = #tpu.dot_dimension_numbers<[1], [0], [0], [1], [0, 0, 1, 1], [], []>} : vector<8x512xbf16>, vector<512x256xbf16>, vector<8x256xf32> -> vector<8x256xf32>
    %3 = vector.extract_strided_slice %2 {offsets = [0, 0], sizes = [2, 256], strides = [1, 1]} : vector<8x256xf32> to vector<2x256xf32>
    %4 = vector.extract_strided_slice %2 {offsets = [2, 0], sizes = [2, 256], strides = [1, 1]} : vector<8x256xf32> to vector<2x256xf32>
    %5 = arith.maximumf %3, %4 : vector<2x256xf32>
    %6 = vector.extract_strided_slice %2 {offsets = [4, 0], sizes = [2, 256], strides = [1, 1]} : vector<8x256xf32> to vector<2x256xf32>
    %7 = arith.maximumf %5, %6 : vector<2x256xf32>
    %8 = vector.extract_strided_slice %2 {offsets = [6, 0], sizes = [2, 256], strides = [1, 1]} : vector<8x256xf32> to vector<2x256xf32>
    %9 = arith.maximumf %7, %8 : vector<2x256xf32>
    %c0_3 = arith.constant 0 : index
    %c0_4 = arith.constant 0 : index
    %10 = vector.load %arg3[%c0_3, %c0_4] : memref<1x256xf32, #tpu.memory_space<vmem>>, vector<1x256xf32>
    %11 = vector.broadcast %10 : vector<1x256xf32> to vector<2x256xf32>
    %12 = arith.addf %9, %11 : vector<2x256xf32>
    %cst_5 = arith.constant 0.000000e+00 : f32
    %13 = vector.broadcast %cst_5 : f32 to vector<2x256xf32>
    %14 = arith.maximumf %12, %13 : vector<2x256xf32>
    %15 = arith.truncf %14 : vector<2x256xf32> to vector<2x256xbf16>
    %c0_6 = arith.constant 0 : index
    %c0_7 = arith.constant 0 : index
    %16 = vector.load %arg4[%c0_6, %c0_7] : memref<256x2048xbf16, #tpu.memory_space<vmem>>, vector<256x2048xbf16>
    %cst_8 = arith.constant dense<0.000000e+00> : vector<2x2048xf32>
    %17 = tpu.matmul %15, %16, %cst_8 {dimension_numbers = #tpu.dot_dimension_numbers<[1], [0], [0], [1], [0, 0, 1, 1], [], []>} : vector<2x256xbf16>, vector<256x2048xbf16>, vector<2x2048xf32> -> vector<2x2048xf32>
    %c0_9 = arith.constant 0 : index
    %c0_10 = arith.constant 0 : index
    %18 = vector.load %arg5[%c0_9, %c0_10] : memref<1x2048xf32, #tpu.memory_space<vmem>>, vector<1x2048xf32>
    %19 = vector.broadcast %18 : vector<1x2048xf32> to vector<2x2048xf32>
    %20 = arith.addf %17, %19 : vector<2x2048xf32>
    %cst_11 = arith.constant 0.000000e+00 : f32
    %21 = vector.broadcast %cst_11 : f32 to vector<2x2048xf32>
    %22 = arith.maximumf %20, %21 : vector<2x2048xf32>
    %c0_12 = arith.constant 0 : index
    %c0_13 = arith.constant 0 : index
    %23 = vector.load %arg6[%c0_12, %c0_13] : memref<2x2048xf32, #tpu.memory_space<vmem>>, vector<2x2048xf32>
    tpu.vector_store %arg6[%c0_12, %c0_13], %22 {strides = array<i32>} : memref<2x2048xf32, #tpu.memory_space<vmem>>, vector<2x2048xf32>,
    return
  }
  func.func @transform_0(%arg0: i32) -> (i32, i32) {
    %c0_i32 = arith.constant 0 : i32
    %c0_i32_0 = arith.constant 0 : i32
    %c0_i32_1 = arith.constant 0 : i32
    return %c0_i32, %c0_i32_0 : i32, i32
  }
  func.func @transform_1(%arg0: i32) -> (i32, i32) {
    %c0_i32 = arith.constant 0 : i32
    %c0_i32_0 = arith.constant 0 : i32
    %c0_i32_1 = arith.constant 0 : i32
    return %c0_i32, %c0_i32_0 : i32, i32
  }
  func.func @transform_2(%arg0: i32) -> (i32, i32) {
    %c0_i32 = arith.constant 0 : i32
    %c0_i32_0 = arith.constant 0 : i32
    %c0_i32_1 = arith.constant 0 : i32
    return %c0_i32, %c0_i32_0 : i32, i32
  }
  func.func @transform_3(%arg0: i32) -> (i32, i32) {
    %c0_i32 = arith.constant 0 : i32
    %c0_i32_0 = arith.constant 0 : i32
    return %c0_i32, %arg0 : i32, i32
  }
  func.func @transform_4(%arg0: i32) -> (i32, i32) {
    %c0_i32 = arith.constant 0 : i32
    %c0_i32_0 = arith.constant 0 : i32
    return %c0_i32, %arg0 : i32, i32
  }
  func.func @transform_5(%arg0: i32) -> (i32, i32) {
    %c0_i32 = arith.constant 0 : i32
    %c0_i32_0 = arith.constant 0 : i32
    return %c0_i32, %arg0 : i32, i32
  }
}

</mosaic_0001>

<llo_original>
// kernel: private_forward.4
$region0: #{private_forward.4}
  #allocation0 [shape = 'u32[]', space=smem, size = 0x4, offset = 0x4, fixed_abs, tag = 'smem constant byte address 0x4 - core index']
  #allocation1 [shape = 'u32[144,128]{1,0:T(1,128)}', space=vmem, size = 0x12000, scoped, tag = 'internal scratch']
  %s0 = inlined_call_operand.vmem [shape: bf16[98,128], index: 0, kind: input, shape index: {}]
  %s1 = inlined_call_operand.vmem [shape: bf16[128,128], index: 1, kind: input, shape index: {}]
  %s2 = inlined_call_operand.vmem [shape: f32[1,128], index: 2, kind: input, shape index: {}]
  %s3 = inlined_call_operand.vmem [shape: bf16[98,128], index: 3, kind: output, shape index: {}]
  %s4 = sld [smem:[#allocation0]]
  $region22: #{private_forward.4} parent=0
    _
  %s6 = ssub.s32 1, %s4
  %s7 = scalar_select 0, %s6, %s4
  // Predicated region
  $region2: #{private_forward.4} parent=0 // pred_check
    _
  $region3: #{private_forward.4} parent=0 // pred_check_branch
    %9 = sbr.rel (0) target = $region5
  $region4: #{private_forward.4} parent=0 // pred_region
    _
  $region5: #{private_forward.4} parent=0 // pred_fallthru
    _
  // Predicated region
  $region6: #{private_forward.4} parent=0 // pred_check
    _
  $region7: #{private_forward.4} parent=0 // pred_check_branch
    %11 = sbr.rel (0) target = $region9
  $region8: #{private_forward.4} parent=0 // pred_region
    _
  $region9: #{private_forward.4} parent=0 // pred_fallthru
    _
  // Predicated region
  $region10: #{private_forward.4} parent=0 // pred_check
    _
  $region11: #{private_forward.4} parent=0 // pred_check_branch
    %13 = sbr.rel (0) target = $region13
  $region12: #{private_forward.4} parent=0 // pred_region
    _
  $region13: #{private_forward.4} parent=0 // pred_fallthru
    _
  %v15 = vld [vmem:[%s0] sm:$0xf]
  %v16 = vld [vmem:[%s0 + $0x4] sm:$0xf]
  %v17 = vld [vmem:[%s0 + $0x8] sm:$0xf]
  %v18 = vld [vmem:[%s0 + $0xc] sm:$0xf]
  %v19 = vld [vmem:[%s0 + $0x10] sm:$0xf]
  %v20 = vld [vmem:[%s0 + $0x14] sm:$0xf]
  %v21 = vld [vmem:[%s0 + $0x18] sm:$0xf]
  %v22 = vld [vmem:[%s0 + $0x1c] sm:$0xf]
  %v23 = vld [vmem:[%s0 + $0x20] sm:$0xf]
  %v24 = vld [vmem:[%s0 + $0x24] sm:$0xf]
  %v25 = vld [vmem:[%s0 + $0x28] sm:$0xf]
  %v26 = vld [vmem:[%s0 + $0x2c] sm:$0xf]
  %v27 = vld [vmem:[%s0 + $0x30] sm:$0x1]
  %v28 = vld [vmem:[%s1] sm:$0xf]
  %v29 = vld [vmem:[%s1 + $0x4] sm:$0xf]
  %v30 = vld [vmem:[%s1 + $0x8] sm:$0xf]
  %v31 = vld [vmem:[%s1 + $0xc] sm:$0xf]
  %v32 = vld [vmem:[%s1 + $0x10] sm:$0xf]
  %v33 = vld [vmem:[%s1 + $0x14] sm:$0xf]
  %v34 = vld [vmem:[%s1 + $0x18] sm:$0xf]
  %v35 = vld [vmem:[%s1 + $0x1c] sm:$0xf]
  %v36 = vld [vmem:[%s1 + $0x20] sm:$0xf]
  %v37 = vld [vmem:[%s1 + $0x24] sm:$0xf]
  %v38 = vld [vmem:[%s1 + $0x28] sm:$0xf]
  %v39 = vld [vmem:[%s1 + $0x2c] sm:$0xf]
  %v40 = vld [vmem:[%s1 + $0x30] sm:$0xf]
  %v41 = vld [vmem:[%s1 + $0x34] sm:$0xf]
  %v42 = vld [vmem:[%s1 + $0x38] sm:$0xf]
  %v43 = vld [vmem:[%s1 + $0x3c] sm:$0xf]
  %v44 = vld [vmem:[%s2] sm:$0x1]
  %v46 = vlaneseq
  %v47 = vshrl.u32 %v46, 7
  %v48 = vsub.s32 0, %v47
  %v49 = vrot.slane %v44, %v48
  %v64 = vunpack.c.l.b16 %v15
  %v65 = vunpack.c.l.b16 %v16
  %v66 = vunpack.c.l.b16 %v17
  %v67 = vunpack.c.l.b16 %v18
  %v68 = vunpack.c.l.b16 %v19
  %v69 = vunpack.c.l.b16 %v20
  %v70 = vunpack.c.l.b16 %v21
  %v71 = vunpack.c.l.b16 %v22
  %v72 = vunpack.c.l.b16 %v23
  %v73 = vunpack.c.l.b16 %v24
  %v74 = vunpack.c.l.b16 %v25
  %v75 = vunpack.c.l.b16 %v26
  %v76 = vunpack.c.l.b16 %v27
  %v77 = vpack.c.b16 %v65, %v64
  %v78 = vpack.c.b16 %v67, %v66
  %v79 = vpack.c.b16 %v69, %v68
  %v80 = vpack.c.b16 %v71, %v70
  %v81 = vpack.c.b16 %v73, %v72
  %v82 = vpack.c.b16 %v75, %v74
  %v83 = vpack.c.b16 %v76, %v76
  %v107 = vunpack.c.l.b16 %v28
  %v108 = vunpack.c.l.b16 %v29
  %v109 = vunpack.c.l.b16 %v30
  %v110 = vunpack.c.l.b16 %v31
  %v111 = vunpack.c.l.b16 %v32
  %v112 = vunpack.c.l.b16 %v33
  %v113 = vunpack.c.l.b16 %v34
  %v114 = vunpack.c.l.b16 %v35
  %v115 = vunpack.c.l.b16 %v36
  %v116 = vunpack.c.l.b16 %v37
  %v117 = vunpack.c.l.b16 %v38
  %v118 = vunpack.c.l.b16 %v39
  %v119 = vunpack.c.l.b16 %v40
  %v120 = vunpack.c.l.b16 %v41
  %v121 = vunpack.c.l.b16 %v42
  %v122 = vunpack.c.l.b16 %v43
  %v123 = vpack.c.b16 %v108, %v107
  %v124 = vpack.c.b16 %v110, %v109
  %v125 = vpack.c.b16 %v112, %v111
  %v126 = vpack.c.b16 %v114, %v113
  %v127 = vpack.c.b16 %v116, %v115
  %v128 = vpack.c.b16 %v118, %v117
  %v129 = vpack.c.b16 %v120, %v119
  %v130 = vpack.c.b16 %v122, %v121
  %139 = vmatprep.subr.bf16.mxu0 0
  %140 = vmatpush1.bf16.msra.mxu0 %v130
  %141 = vmatprep.subr.bf16.mxu0 0
  %142 = vmatpush1.bf16.msra.mxu0 %v129
  %143 = vmatprep.subr.bf16.mxu0 0
  %144 = vmatpush1.bf16.msra.mxu0 %v128
  %145 = vmatprep.subr.bf16.mxu0 0
  %146 = vmatpush1.bf16.msra.mxu0 %v127
  %147 = vmatprep.subr.bf16.mxu0 0
  %148 = vmatpush1.bf16.msra.mxu0 %v126
  %149 = vmatprep.subr.bf16.mxu0 0
  %150 = vmatpush1.bf16.msra.mxu0 %v125
  %151 = vmatprep.subr.bf16.mxu0 0
  %152 = vmatpush1.bf16.msra.mxu0 %v124
  %153 = vmatprep.subr.bf16.mxu0 0
  %154 = vmatpush1.bf16.msra.mxu0 %v123
  %155 = vmatprep.subr.bf16.mxu0 0
  %156 = vmatpush2.bf16.msra.mxu0 0
  %157 = vmatprep.subr.bf16.mxu0 0
  %158 = vmatpush2.bf16.msra.mxu0 0
  %159 = vmatprep.subr.bf16.mxu0 0
  %160 = vmatpush2.bf16.msra.mxu0 0
  %161 = vmatprep.subr.bf16.mxu0 0
  %162 = vmatpush2.bf16.msra.mxu0 0
  %163 = vmatprep.subr.bf16.mxu0 0
  %164 = vmatpush2.bf16.msra.mxu0 0
  %165 = vmatprep.subr.bf16.mxu0 0
  %166 = vmatpush2.bf16.msra.mxu0 0
  %167 = vmatprep.subr.bf16.mxu0 0
  %168 = vmatpush2.bf16.msra.mxu0 0
  %169 = vmatprep.subr.bf16.mxu0 0
  %170 = vmatpush2.bf16.msra.mxu0 0
  %171 = vmatprep.mubr.bf16.mxu0 0
  %172 = vmatmul.mubr.bf16.gmra.mxu0 %v77
  %v173 = vpop.f32.mrf.mxu0
  %v174 = vadd.f32 %v49, %v173
  %v175 = vpop.f32.mrf.mxu0
  %v176 = vpop.f32.mrf.mxu0
  %v177 = vadd.f32 %v49, %v176
  %v178 = vpop.f32.mrf.mxu0
  %179 = vmatprep.mubr.bf16.mxu0 0
  %180 = vmatmul.mubr.bf16.gmra.mxu0 %v78
  %v181 = vpop.f32.mrf.mxu0
  %v182 = vadd.f32 %v49, %v181
  %v183 = vpop.f32.mrf.mxu0
  %v184 = vpop.f32.mrf.mxu0
  %v185 = vadd.f32 %v49, %v184
  %v186 = vpop.f32.mrf.mxu0
  %187 = vmatprep.mubr.bf16.mxu0 0
  %188 = vmatmul.mubr.bf16.gmra.mxu0 %v79
  %v189 = vpop.f32.mrf.mxu0
  %v190 = vadd.f32 %v49, %v189
  %v191 = vpop.f32.mrf.mxu0
  %v192 = vpop.f32.mrf.mxu0
  %v193 = vadd.f32 %v49, %v192
  %v194 = vpop.f32.mrf.mxu0
  %195 = vmatprep.mubr.bf16.mxu0 0
  %196 = vmatmul.mubr.bf16.gmra.mxu0 %v80
  %v197 = vpop.f32.mrf.mxu0
  %v198 = vadd.f32 %v49, %v197
  %v199 = vpop.f32.mrf.mxu0
  %v200 = vpop.f32.mrf.mxu0
  %v201 = vadd.f32 %v49, %v200
  %v202 = vpop.f32.mrf.mxu0
  %203 = vmatprep.mubr.bf16.mxu0 0
  %204 = vmatmul.mubr.bf16.gmra.mxu0 %v81
  %v205 = vpop.f32.mrf.mxu0
  %v206 = vadd.f32 %v49, %v205
  %v207 = vpop.f32.mrf.mxu0
  %v208 = vpop.f32.mrf.mxu0
  %v209 = vadd.f32 %v49, %v208
  %v210 = vpop.f32.mrf.mxu0
  %211 = vmatprep.mubr.bf16.mxu0 0
  %212 = vmatmul.mubr.bf16.gmra.mxu0 %v82
  %v213 = vpop.f32.mrf.mxu0
  %v214 = vadd.f32 %v49, %v213
  %v215 = vpop.f32.mrf.mxu0
  %v216 = vpop.f32.mrf.mxu0
  %v217 = vadd.f32 %v49, %v216
  %v218 = vpop.f32.mrf.mxu0
  %219 = vmatprep.mubr.bf16.mxu0 0
  %220 = vmatmul.mubr.bf16.gmra.mxu0 %v83
  %v221 = vpop.f32.mrf.mxu0
  %v222 = vadd.f32 %v49, %v221
  %v223 = vpop.f32.mrf.mxu0
  %v224 = vpop.f32.mrf.mxu0
  %v225 = vpop.f32.mrf.mxu0
  %226 = vdwg.mxu0
  %v227 = vmax.f32 %v174, 0.0
  %v228 = vmax.f32 %v177, 0.0
  %v229 = vmax.f32 %v182, 0.0
  %v230 = vmax.f32 %v185, 0.0
  %v231 = vmax.f32 %v190, 0.0
  %v232 = vmax.f32 %v193, 0.0
  %v233 = vmax.f32 %v198, 0.0
  %v234 = vmax.f32 %v201, 0.0
  %v235 = vmax.f32 %v206, 0.0
  %v236 = vmax.f32 %v209, 0.0
  %v237 = vmax.f32 %v214, 0.0
  %v238 = vmax.f32 %v217, 0.0
  %v239 = vmax.f32 %v222, 0.0
  %v240 = vpack.c.bf16 %v228, %v227
  %v241 = vpack.c.bf16 %v230, %v229
  %v242 = vpack.c.bf16 %v232, %v231
  %v243 = vpack.c.bf16 %v234, %v233
  %v244 = vpack.c.bf16 %v236, %v235
  %v245 = vpack.c.bf16 %v238, %v237
  %v246 = vpack.c.bf16 %v239, %v239
  %v254 = vunpack.c.l.b16 %v240
  %v255 = vunpack.c.h.b16 %v240
  %v256 = vunpack.c.l.b16 %v241
  %v257 = vunpack.c.h.b16 %v241
  %v258 = vunpack.c.l.b16 %v242
  %v259 = vunpack.c.h.b16 %v242
  %v260 = vunpack.c.l.b16 %v243
  %v261 = vunpack.c.h.b16 %v243
  %v262 = vunpack.c.l.b16 %v244
  %v263 = vunpack.c.h.b16 %v244
  %v264 = vunpack.c.l.b16 %v245
  %v265 = vunpack.c.h.b16 %v245
  %v266 = vunpack.c.l.b16 %v246
  %v267 = vpack.c.b16 %v254, %v254
  %v268 = vpack.c.b16 %v255, %v255
  %v269 = vpack.c.b16 %v256, %v256
  %v270 = vpack.c.b16 %v257, %v257
  %v271 = vpack.c.b16 %v258, %v258
  %v272 = vpack.c.b16 %v259, %v259
  %v273 = vpack.c.b16 %v260, %v260
  %v274 = vpack.c.b16 %v261, %v261
  %v275 = vpack.c.b16 %v262, %v262
  %v276 = vpack.c.b16 %v263, %v263
  %v277 = vpack.c.b16 %v264, %v264
  %v278 = vpack.c.b16 %v265, %v265
  %v279 = vpack.c.b16 %v266, %v266
  %293 = vst [vmem:[%s3] sm:$0xf] %v267
  %294 = vst [vmem:[%s3 + $0x4] sm:$0xf] %v268
  %295 = vst [vmem:[%s3 + $0x8] sm:$0xf] %v269
  %296 = vst [vmem:[%s3 + $0xc] sm:$0xf] %v270
  %297 = vst [vmem:[%s3 + $0x10] sm:$0xf] %v271
  %298 = vst [vmem:[%s3 + $0x14] sm:$0xf] %v272
  %299 = vst [vmem:[%s3 + $0x18] sm:$0xf] %v273
  %300 = vst [vmem:[%s3 + $0x1c] sm:$0xf] %v274
  %301 = vst [vmem:[%s3 + $0x20] sm:$0xf] %v275
  %302 = vst [vmem:[%s3 + $0x24] sm:$0xf] %v276
  %303 = vst [vmem:[%s3 + $0x28] sm:$0xf] %v277
  %304 = vst [vmem:[%s3 + $0x2c] sm:$0xf] %v278
  %305 = vst [vmem:[%s3 + $0x30] sm:$0x1] %v279
  // Predicated region
  $region14: #{private_forward.4} parent=0 // pred_check
    _
  $region15: #{private_forward.4} parent=0 // pred_check_branch
    %307 = sbr.rel (0) target = $region17
  $region16: #{private_forward.4} parent=0 // pred_region
    _
  $region17: #{private_forward.4} parent=0 // pred_fallthru
    _
  // Predicated region
  $region18: #{private_forward.4} parent=0 // pred_check
    _
  $region19: #{private_forward.4} parent=0 // pred_check_branch
    %309 = sbr.rel (0) target = $region21
  $region20: #{private_forward.4} parent=0 // pred_region
    _
  $region21: #{private_forward.4} parent=0 // pred_fallthru
    _

// kernel: private_forward.3
$region0: #{private_forward.3}
  #allocation0 [shape = 'u32[]', space=smem, size = 0x4, offset = 0x4, fixed_abs, tag = 'smem constant byte address 0x4 - core index']
  #allocation1 [shape = 'u32[144,128]{1,0:T(1,128)}', space=vmem, size = 0x12000, scoped, tag = 'internal scratch']
  %s0 = inlined_call_operand.vmem [shape: bf16[450,16], index: 0, kind: input, shape index: {}]
  %s1 = inlined_call_operand.vmem [shape: bf16[16,128], index: 1, kind: input, shape index: {}]
  %s2 = inlined_call_operand.vmem [shape: f32[1,128], index: 2, kind: input, shape index: {}]
  %s3 = inlined_call_operand.vmem [shape: bf16[450,128], index: 3, kind: output, shape index: {}]
  %s4 = sld [smem:[#allocation0]]
  $region22: #{private_forward.3} parent=0
    _
  %s6 = ssub.s32 1, %s4
  %s7 = scalar_select 0, %s6, %s4
  // Predicated region
  $region2: #{private_forward.3} parent=0 // pred_check
    _
  $region3: #{private_forward.3} parent=0 // pred_check_branch
    %9 = sbr.rel (0) target = $region5
  $region4: #{private_forward.3} parent=0 // pred_region
    _
  $region5: #{private_forward.3} parent=0 // pred_fallthru
    _
  // Predicated region
  $region6: #{private_forward.3} parent=0 // pred_check
    _
  $region7: #{private_forward.3} parent=0 // pred_check_branch
    %11 = sbr.rel (0) target = $region9
  $region8: #{private_forward.3} parent=0 // pred_region
    _
  $region9: #{private_forward.3} parent=0 // pred_fallthru
    _
  // Predicated region
  $region10: #{private_forward.3} parent=0 // pred_check
    _
  $region11: #{private_forward.3} parent=0 // pred_check_branch
    %13 = sbr.rel (0) target = $region13
  $region12: #{private_forward.3} parent=0 // pred_region
    _
  $region13: #{private_forward.3} parent=0 // pred_fallthru
    _
  %v15 = vld [vmem:[%s0] sm:$0xf]
  %v16 = vld [vmem:[%s0 + $0x4] sm:$0xf]
  %v17 = vld [vmem:[%s0 + $0x8] sm:$0xf]
  %v18 = vld [vmem:[%s0 + $0xc] sm:$0xf]
  %v19 = vld [vmem:[%s0 + $0x10] sm:$0xf]
  %v20 = vld [vmem:[%s0 + $0x14] sm:$0xf]
  %v21 = vld [vmem:[%s0 + $0x18] sm:$0xf]
  %v22 = vld [vmem:[%s0 + $0x1c] sm:$0xf]
  %v23 = vld [vmem:[%s0 + $0x20] sm:$0xf]
  %v24 = vld [vmem:[%s0 + $0x24] sm:$0xf]
  %v25 = vld [vmem:[%s0 + $0x28] sm:$0xf]
  %v26 = vld [vmem:[%s0 + $0x2c] sm:$0xf]
  %v27 = vld [vmem:[%s0 + $0x30] sm:$0xf]
  %v28 = vld [vmem:[%s0 + $0x34] sm:$0xf]
  %v29 = vld [vmem:[%s0 + $0x38] sm:$0xf]
  %v30 = vld [vmem:[%s0 + $0x3c] sm:$0xf]
  %v31 = vld [vmem:[%s0 + $0x40] sm:$0xf]
  %v32 = vld [vmem:[%s0 + $0x44] sm:$0xf]
  %v33 = vld [vmem:[%s0 + $0x48] sm:$0xf]
  %v34 = vld [vmem:[%s0 + $0x4c] sm:$0xf]
  %v35 = vld [vmem:[%s0 + $0x50] sm:$0xf]
  %v36 = vld [vmem:[%s0 + $0x54] sm:$0xf]
  %v37 = vld [vmem:[%s0 + $0x58] sm:$0xf]
  %v38 = vld [vmem:[%s0 + $0x5c] sm:$0xf]
  %v39 = vld [vmem:[%s0 + $0x60] sm:$0xf]
  %v40 = vld [vmem:[%s0 + $0x64] sm:$0xf]
  %v41 = vld [vmem:[%s0 + $0x68] sm:$0xf]
  %v42 = vld [vmem:[%s0 + $0x6c] sm:$0xf]
  %v43 = vld [vmem:[%s0 + $0x70] sm:$0xf]
  %v44 = vld [vmem:[%s0 + $0x74] sm:$0xf]
  %v45 = vld [vmem:[%s0 + $0x78] sm:$0xf]
  %v46 = vld [vmem:[%s0 + $0x7c] sm:$0xf]
  %v47 = vld [vmem:[%s0 + $0x80] sm:$0xf]
  %v48 = vld [vmem:[%s0 + $0x84] sm:$0xf]
  %v49 = vld [vmem:[%s0 + $0x88] sm:$0xf]
  %v50 = vld [vmem:[%s0 + $0x8c] sm:$0xf]
  %v51 = vld [vmem:[%s0 + $0x90] sm:$0xf]
  %v52 = vld [vmem:[%s0 + $0x94] sm:$0xf]
  %v53 = vld [vmem:[%s0 + $0x98] sm:$0xf]
  %v54 = vld [vmem:[%s0 + $0x9c] sm:$0xf]
  %v55 = vld [vmem:[%s0 + $0xa0] sm:$0xf]
  %v56 = vld [vmem:[%s0 + $0xa4] sm:$0xf]
  %v57 = vld [vmem:[%s0 + $0xa8] sm:$0xf]
  %v58 = vld [vmem:[%s0 + $0xac] sm:$0xf]
  %v59 = vld [vmem:[%s0 + $0xb0] sm:$0xf]
  %v60 = vld [vmem:[%s0 + $0xb4] sm:$0xf]
  %v61 = vld [vmem:[%s0 + $0xb8] sm:$0xf]
  %v62 = vld [vmem:[%s0 + $0xbc] sm:$0xf]
  %v63 = vld [vmem:[%s0 + $0xc0] sm:$0xf]
  %v64 = vld [vmem:[%s0 + $0xc4] sm:$0xf]
  %v65 = vld [vmem:[%s0 + $0xc8] sm:$0xf]
  %v66 = vld [vmem:[%s0 + $0xcc] sm:$0xf]
  %v67 = vld [vmem:[%s0 + $0xd0] sm:$0xf]
  %v68 = vld [vmem:[%s0 + $0xd4] sm:$0xf]
  %v69 = vld [vmem:[%s0 + $0xd8] sm:$0xf]
  %v70 = vld [vmem:[%s0 + $0xdc] sm:$0xf]
  %v71 = vld [vmem:[%s0 + $0xe0] sm:$0x1]
  %v72 = vld [vmem:[%s1] sm:$0xf]
  %v73 = vld [vmem:[%s1 + $0x4] sm:$0xf]
  %v74 = vld [vmem:[%s2] sm:$0x1]
  %v76 = vlaneseq
  %v77 = vshrl.u32 %v76, 7
  %v78 = vsub.s32 0, %v77
  %v79 = vrot.slane %v74, %v78
  %v138 = vunpack.c.l.b16 %v15
  %v139 = vunpack.c.l.b16 %v16
  %v140 = vunpack.c.l.b16 %v17
  %v141 = vunpack.c.l.b16 %v18
  %v142 = vunpack.c.l.b16 %v19
  %v143 = vunpack.c.l.b16 %v20
  %v144 = vunpack.c.l.b16 %v21
  %v145 = vunpack.c.l.b16 %v22
  %v146 = vunpack.c.l.b16 %v23
  %v147 = vunpack.c.l.b16 %v24
  %v148 = vunpack.c.l.b16 %v25
  %v149 = vunpack.c.l.b16 %v26
  %v150 = vunpack.c.l.b16 %v27
  %v151 = vunpack.c.l.b16 %v28
  %v152 = vunpack.c.l.b16 %v29
  %v153 = vunpack.c.l.b16 %v30
  %v154 = vunpack.c.l.b16 %v31
  %v155 = vunpack.c.l.b16 %v32
  %v156 = vunpack.c.l.b16 %v33
  %v157 = vunpack.c.l.b16 %v34
  %v158 = vunpack.c.l.b16 %v35
  %v159 = vunpack.c.l.b16 %v36
  %v160 = vunpack.c.l.b16 %v37
  %v161 = vunpack.c.l.b16 %v38
  %v162 = vunpack.c.l.b16 %v39
  %v163 = vunpack.c.l.b16 %v40
  %v164 = vunpack.c.l.b16 %v41
  %v165 = vunpack.c.l.b16 %v42
  %v166 = vunpack.c.l.b16 %v43
  %v167 = vunpack.c.l.b16 %v44
  %v168 = vunpack.c.l.b16 %v45
  %v169 = vunpack.c.l.b16 %v46
  %v170 = vunpack.c.l.b16 %v47
  %v171 = vunpack.c.l.b16 %v48
  %v172 = vunpack.c.l.b16 %v49
  %v173 = vunpack.c.l.b16 %v50
  %v174 = vunpack.c.l.b16 %v51
  %v175 = vunpack.c.l.b16 %v52
  %v176 = vunpack.c.l.b16 %v53
  %v177 = vunpack.c.l.b16 %v54
  %v178 = vunpack.c.l.b16 %v55
  %v179 = vunpack.c.l.b16 %v56
  %v180 = vunpack.c.l.b16 %v57
  %v181 = vunpack.c.l.b16 %v58
  %v182 = vunpack.c.l.b16 %v59
  %v183 = vunpack.c.l.b16 %v60
  %v184 = vunpack.c.l.b16 %v61
  %v185 = vunpack.c.l.b16 %v62
  %v186 = vunpack.c.l.b16 %v63
  %v187 = vunpack.c.l.b16 %v64
  %v188 = vunpack.c.l.b16 %v65
  %v189 = vunpack.c.l.b16 %v66
  %v190 = vunpack.c.l.b16 %v67
  %v191 = vunpack.c.l.b16 %v68
  %v192 = vunpack.c.l.b16 %v69
  %v193 = vunpack.c.l.b16 %v70
  %v194 = vunpack.c.l.b16 %v71
  %v195 = vpack.c.b16 %v139, %v138
  %v196 = vpack.c.b16 %v141, %v140
  %v197 = vpack.c.b16 %v143, %v142
  %v198 = vpack.c.b16 %v145, %v144
  %v199 = vpack.c.b16 %v147, %v146
  %v200 = vpack.c.b16 %v149, %v148
  %v201 = vpack.c.b16 %v151, %v150
  %v202 = vpack.c.b16 %v153, %v152
  %v203 = vpack.c.b16 %v155, %v154
  %v204 = vpack.c.b16 %v157, %v156
  %v205 = vpack.c.b16 %v159, %v158
  %v206 = vpack.c.b16 %v161, %v160
  %v207 = vpack.c.b16 %v163, %v162
  %v208 = vpack.c.b16 %v165, %v164
  %v209 = vpack.c.b16 %v167, %v166
  %v210 = vpack.c.b16 %v169, %v168
  %v211 = vpack.c.b16 %v171, %v170
  %v212 = vpack.c.b16 %v173, %v172
  %v213 = vpack.c.b16 %v175, %v174
  %v214 = vpack.c.b16 %v177, %v176
  %v215 = vpack.c.b16 %v179, %v178
  %v216 = vpack.c.b16 %v181, %v180
  %v217 = vpack.c.b16 %v183, %v182
  %v218 = vpack.c.b16 %v185, %v184
  %v219 = vpack.c.b16 %v187, %v186
  %v220 = vpack.c.b16 %v189, %v188
  %v221 = vpack.c.b16 %v191, %v190
  %v222 = vpack.c.b16 %v193, %v192
  %v223 = vpack.c.b16 %v194, %v194
  %v226 = vunpack.c.l.b16 %v72
  %v227 = vunpack.c.l.b16 %v73
  %v228 = vpack.c.b16 %v227, %v226
  %vm230 = vcmask 130048
  %v232 = vsel %vm230, %v195, 0
  %v235 = vsel %vm230, %v196, 0
  %v238 = vsel %vm230, %v197, 0
  %v241 = vsel %vm230, %v198, 0
  %v244 = vsel %vm230, %v199, 0
  %v247 = vsel %vm230, %v200, 0
  %v250 = vsel %vm230, %v201, 0
  %v253 = vsel %vm230, %v202, 0
  %v256 = vsel %vm230, %v203, 0
  %v259 = vsel %vm230, %v204, 0
  %v262 = vsel %vm230, %v205, 0
  %v265 = vsel %vm230, %v206, 0
  %v268 = vsel %vm230, %v207, 0
  %v271 = vsel %vm230, %v208, 0
  %v274 = vsel %vm230, %v209, 0
  %v277 = vsel %vm230, %v210, 0
  %v280 = vsel %vm230, %v211, 0
  %v283 = vsel %vm230, %v212, 0
  %v286 = vsel %vm230, %v213, 0
  %v289 = vsel %vm230, %v214, 0
  %v292 = vsel %vm230, %v215, 0
  %v295 = vsel %vm230, %v216, 0
  %v298 = vsel %vm230, %v217, 0
  %v301 = vsel %vm230, %v218, 0
  %v304 = vsel %vm230, %v219, 0
  %v307 = vsel %vm230, %v220, 0
  %v310 = vsel %vm230, %v221, 0
  %v313 = vsel %vm230, %v222, 0
  %v316 = vsel %vm230, %v223, 0
  %318 = vmatprep.subr.bf16.mxu0 0
  %319 = vmatpush1.bf16.msra.mxu0 0
  %320 = vmatprep.subr.bf16.mxu0 0
  %321 = vmatpush1.bf16.msra.mxu0 0
  %322 = vmatprep.subr.bf16.mxu0 0
  %323 = vmatpush1.bf16.msra.mxu0 0
  %324 = vmatprep.subr.bf16.mxu0 0
  %325 = vmatpush1.bf16.msra.mxu0 0
  %326 = vmatprep.subr.bf16.mxu0 0
  %327 = vmatpush1.bf16.msra.mxu0 0
  %328 = vmatprep.subr.bf16.mxu0 0
  %329 = vmatpush1.bf16.msra.mxu0 0
  %330 = vmatprep.subr.bf16.mxu0 0
  %331 = vmatpush1.bf16.msra.mxu0 0
  %332 = vmatprep.subr.bf16.mxu0 0
  %333 = vmatpush1.bf16.msra.mxu0 %v228
  %334 = vmatprep.subr.bf16.mxu0 0
  %335 = vmatpush2.bf16.msra.mxu0 0
  %336 = vmatprep.subr.bf16.mxu0 0
  %337 = vmatpush2.bf16.msra.mxu0 0
  %338 = vmatprep.subr.bf16.mxu0 0
  %339 = vmatpush2.bf16.msra.mxu0 0
  %340 = vmatprep.subr.bf16.mxu0 0
  %341 = vmatpush2.bf16.msra.mxu0 0
  %342 = vmatprep.subr.bf16.mxu0 0
  %343 = vmatpush2.bf16.msra.mxu0 0
  %344 = vmatprep.subr.bf16.mxu0 0
  %345 = vmatpush2.bf16.msra.mxu0 0
  %346 = vmatprep.subr.bf16.mxu0 0
  %347 = vmatpush2.bf16.msra.mxu0 0
  %348 = vmatprep.subr.bf16.mxu0 0
  %349 = vmatpush2.bf16.msra.mxu0 0
  %350 = vmatprep.mubr.bf16.mxu0 0
  %351 = vmatmul.mubr.bf16.gmra.mxu0 %v232
  %v352 = vpop.f32.mrf.mxu0
  %v353 = vadd.f32 %v79, %v352
  %v354 = vpop.f32.mrf.mxu0
  %v355 = vpop.f32.mrf.mxu0
  %v356 = vadd.f32 %v79, %v355
  %v357 = vpop.f32.mrf.mxu0
  %358 = vmatprep.mubr.bf16.mxu0 0
  %359 = vmatmul.mubr.bf16.gmra.mxu0 %v235
  %v360 = vpop.f32.mrf.mxu0
  %v361 = vadd.f32 %v79, %v360
  %v362 = vpop.f32.mrf.mxu0
  %v363 = vpop.f32.mrf.mxu0
  %v364 = vadd.f32 %v79, %v363
  %v365 = vpop.f32.mrf.mxu0
  %366 = vmatprep.mubr.bf16.mxu0 0
  %367 = vmatmul.mubr.bf16.gmra.mxu0 %v238
  %v368 = vpop.f32.mrf.mxu0
  %v369 = vadd.f32 %v79, %v368
  %v370 = vpop.f32.mrf.mxu0
  %v371 = vpop.f32.mrf.mxu0
  %v372 = vadd.f32 %v79, %v371
  %v373 = vpop.f32.mrf.mxu0
  %374 = vmatprep.mubr.bf16.mxu0 0
  %375 = vmatmul.mubr.bf16.gmra.mxu0 %v241
  %v376 = vpop.f32.mrf.mxu0
  %v377 = vadd.f32 %v79, %v376
  %v378 = vpop.f32.mrf.mxu0
  %v379 = vpop.f32.mrf.mxu0
  %v380 = vadd.f32 %v79, %v379
  %v381 = vpop.f32.mrf.mxu0
  %382 = vmatprep.mubr.bf16.mxu0 0
  %383 = vmatmul.mubr.bf16.gmra.mxu0 %v244
  %v384 = vpop.f32.mrf.mxu0
  %v385 = vadd.f32 %v79, %v384
  %v386 = vpop.f32.mrf.mxu0
  %v387 = vpop.f32.mrf.mxu0
  %v388 = vadd.f32 %v79, %v387
  %v389 = vpop.f32.mrf.mxu0
  %390 = vmatprep.mubr.bf16.mxu0 0
  %391 = vmatmul.mubr.bf16.gmra.mxu0 %v247
  %v392 = vpop.f32.mrf.mxu0
  %v393 = vadd.f32 %v79, %v392
  %v394 = vpop.f32.mrf.mxu0
  %v395 = vpop.f32.mrf.mxu0
  %v396 = vadd.f32 %v79, %v395
  %v397 = vpop.f32.mrf.mxu0
  %398 = vmatprep.mubr.bf16.mxu0 0
  %399 = vmatmul.mubr.bf16.gmra.mxu0 %v250
  %v400 = vpop.f32.mrf.mxu0
  %v401 = vadd.f32 %v79, %v400
  %v402 = vpop.f32.mrf.mxu0
  %v403 = vpop.f32.mrf.mxu0
  %v404 = vadd.f32 %v79, %v403
  %v405 = vpop.f32.mrf.mxu0
  %406 = vmatprep.mubr.bf16.mxu0 0
  %407 = vmatmul.mubr.bf16.gmra.mxu0 %v253
  %v408 = vpop.f32.mrf.mxu0
  %v409 = vadd.f32 %v79, %v408
  %v410 = vpop.f32.mrf.mxu0
  %v411 = vpop.f32.mrf.mxu0
  %v412 = vadd.f32 %v79, %v411
  %v413 = vpop.f32.mrf.mxu0
  %414 = vmatprep.mubr.bf16.mxu0 0
  %415 = vmatmul.mubr.bf16.gmra.mxu0 %v256
  %v416 = vpop.f32.mrf.mxu0
  %v417 = vadd.f32 %v79, %v416
  %v418 = vpop.f32.mrf.mxu0
  %v419 = vpop.f32.mrf.mxu0
  %v420 = vadd.f32 %v79, %v419
  %v421 = vpop.f32.mrf.mxu0
  %422 = vmatprep.mubr.bf16.mxu0 0
  %423 = vmatmul.mubr.bf16.gmra.mxu0 %v259
  %v424 = vpop.f32.mrf.mxu0
  %v425 = vadd.f32 %v79, %v424
  %v426 = vpop.f32.mrf.mxu0
  %v427 = vpop.f32.mrf.mxu0
  %v428 = vadd.f32 %v79, %v427
  %v429 = vpop.f32.mrf.mxu0
  %430 = vmatprep.mubr.bf16.mxu0 0
  %431 = vmatmul.mubr.bf16.gmra.mxu0 %v262
  %v432 = vpop.f32.mrf.mxu0
  %v433 = vadd.f32 %v79, %v432
  %v434 = vpop.f32.mrf.mxu0
  %v435 = vpop.f32.mrf.mxu0
  %v436 = vadd.f32 %v79, %v435
  %v437 = vpop.f32.mrf.mxu0
  %438 = vmatprep.mubr.bf16.mxu0 0
  %439 = vmatmul.mubr.bf16.gmra.mxu0 %v265
  %v440 = vpop.f32.mrf.mxu0
  %v441 = vadd.f32 %v79, %v440
  %v442 = vpop.f32.mrf.mxu0
  %v443 = vpop.f32.mrf.mxu0
  %v444 = vadd.f32 %v79, %v443
  %v445 = vpop.f32.mrf.mxu0
  %446 = vmatprep.mubr.bf16.mxu0 0
  %447 = vmatmul.mubr.bf16.gmra.mxu0 %v268
  %v448 = vpop.f32.mrf.mxu0
  %v449 = vadd.f32 %v79, %v448
  %v450 = vpop.f32.mrf.mxu0
  %v451 = vpop.f32.mrf.mxu0
  %v452 = vadd.f32 %v79, %v451
  %v453 = vpop.f32.mrf.mxu0
  %454 = vmatprep.mubr.bf16.mxu0 0
  %455 = vmatmul.mubr.bf16.gmra.mxu0 %v271
  %v456 = vpop.f32.mrf.mxu0
  %v457 = vadd.f32 %v79, %v456
  %v458 = vpop.f32.mrf.mxu0
  %v459 = vpop.f32.mrf.mxu0
  %v460 = vadd.f32 %v79, %v459
  %v461 = vpop.f32.mrf.mxu0
  %462 = vmatprep.mubr.bf16.mxu0 0
  %463 = vmatmul.mubr.bf16.gmra.mxu0 %v274
  %v464 = vpop.f32.mrf.mxu0
  %v465 = vadd.f32 %v79, %v464
  %v466 = vpop.f32.mrf.mxu0
  %v467 = vpop.f32.mrf.mxu0
  %v468 = vadd.f32 %v79, %v467
  %v469 = vpop.f32.mrf.mxu0
  %470 = vmatprep.mubr.bf16.mxu0 0
  %471 = vmatmul.mubr.bf16.gmra.mxu0 %v277
  %v472 = vpop.f32.mrf.mxu0
  %v473 = vadd.f32 %v79, %v472
  %v474 = vpop.f32.mrf.mxu0
  %v475 = vpop.f32.mrf.mxu0
  %v476 = vadd.f32 %v79, %v475
  %v477 = vpop.f32.mrf.mxu0
  %478 = vmatprep.mubr.bf16.mxu0 0
  %479 = vmatmul.mubr.bf16.gmra.mxu0 %v280
  %v480 = vpop.f32.mrf.mxu0
  %v481 = vadd.f32 %v79, %v480
  %v482 = vpop.f32.mrf.mxu0
  %v483 = vpop.f32.mrf.mxu0
  %v484 = vadd.f32 %v79, %v483
  %v485 = vpop.f32.mrf.mxu0
  %486 = vmatprep.mubr.bf16.mxu0 0
  %487 = vmatmul.mubr.bf16.gmra.mxu0 %v283
  %v488 = vpop.f32.mrf.mxu0
  %v489 = vadd.f32 %v79, %v488
  %v490 = vpop.f32.mrf.mxu0
  %v491 = vpop.f32.mrf.mxu0
  %v492 = vadd.f32 %v79, %v491
  %v493 = vpop.f32.mrf.mxu0
  %494 = vmatprep.mubr.bf16.mxu0 0
  %495 = vmatmul.mubr.bf16.gmra.mxu0 %v286
  %v496 = vpop.f32.mrf.mxu0
  %v497 = vadd.f32 %v79, %v496
  %v498 = vpop.f32.mrf.mxu0
  %v499 = vpop.f32.mrf.mxu0
  %v500 = vadd.f32 %v79, %v499
  %v501 = vpop.f32.mrf.mxu0
  %502 = vmatprep.mubr.bf16.mxu0 0
  %503 = vmatmul.mubr.bf16.gmra.mxu0 %v289
  %v504 = vpop.f32.mrf.mxu0
  %v505 = vadd.f32 %v79, %v504
  %v506 = vpop.f32.mrf.mxu0
  %v507 = vpop.f32.mrf.mxu0
  %v508 = vadd.f32 %v79, %v507
  %v509 = vpop.f32.mrf.mxu0
  %510 = vmatprep.mubr.bf16.mxu0 0
  %511 = vmatmul.mubr.bf16.gmra.mxu0 %v292
  %v512 = vpop.f32.mrf.mxu0
  %v513 = vadd.f32 %v79, %v512
  %v514 = vpop.f32.mrf.mxu0
  %v515 = vpop.f32.mrf.mxu0
  %v516 = vadd.f32 %v79, %v515
  %v517 = vpop.f32.mrf.mxu0
  %518 = vmatprep.mubr.bf16.mxu0 0
  %519 = vmatmul.mubr.bf16.gmra.mxu0 %v295
  %v520 = vpop.f32.mrf.mxu0
  %v521 = vadd.f32 %v79, %v520
  %v522 = vpop.f32.mrf.mxu0
  %v523 = vpop.f32.mrf.mxu0
  %v524 = vadd.f32 %v79, %v523
  %v525 = vpop.f32.mrf.mxu0
  %526 = vmatprep.mubr.bf16.mxu0 0
  %527 = vmatmul.mubr.bf16.gmra.mxu0 %v298
  %v528 = vpop.f32.mrf.mxu0
  %v529 = vadd.f32 %v79, %v528
  %v530 = vpop.f32.mrf.mxu0
  %v531 = vpop.f32.mrf.mxu0
  %v532 = vadd.f32 %v79, %v531
  %v533 = vpop.f32.mrf.mxu0
  %534 = vmatprep.mubr.bf16.mxu0 0
  %535 = vmatmul.mubr.bf16.gmra.mxu0 %v301
  %v536 = vpop.f32.mrf.mxu0
  %v537 = vadd.f32 %v79, %v536
  %v538 = vpop.f32.mrf.mxu0
  %v539 = vpop.f32.mrf.mxu0
  %v540 = vadd.f32 %v79, %v539
  %v541 = vpop.f32.mrf.mxu0
  %542 = vmatprep.mubr.bf16.mxu0 0
  %543 = vmatmul.mubr.bf16.gmra.mxu0 %v304
  %v544 = vpop.f32.mrf.mxu0
  %v545 = vadd.f32 %v79, %v544
  %v546 = vpop.f32.mrf.mxu0
  %v547 = vpop.f32.mrf.mxu0
  %v548 = vadd.f32 %v79, %v547
  %v549 = vpop.f32.mrf.mxu0
  %550 = vmatprep.mubr.bf16.mxu0 0
  %551 = vmatmul.mubr.bf16.gmra.mxu0 %v307
  %v552 = vpop.f32.mrf.mxu0
  %v553 = vadd.f32 %v79, %v552
  %v554 = vpop.f32.mrf.mxu0
  %v555 = vpop.f32.mrf.mxu0
  %v556 = vadd.f32 %v79, %v555
  %v557 = vpop.f32.mrf.mxu0
  %558 = vmatprep.mubr.bf16.mxu0 0
  %559 = vmatmul.mubr.bf16.gmra.mxu0 %v310
  %v560 = vpop.f32.mrf.mxu0
  %v561 = vadd.f32 %v79, %v560
  %v562 = vpop.f32.mrf.mxu0
  %v563 = vpop.f32.mrf.mxu0
  %v564 = vadd.f32 %v79, %v563
  %v565 = vpop.f32.mrf.mxu0
  %566 = vmatprep.mubr.bf16.mxu0 0
  %567 = vmatmul.mubr.bf16.gmra.mxu0 %v313
  %v568 = vpop.f32.mrf.mxu0
  %v569 = vadd.f32 %v79, %v568
  %v570 = vpop.f32.mrf.mxu0
  %v571 = vpop.f32.mrf.mxu0
  %v572 = vadd.f32 %v79, %v571
  %v573 = vpop.f32.mrf.mxu0
  %574 = vmatprep.mubr.bf16.mxu0 0
  %575 = vmatmul.mubr.bf16.gmra.mxu0 %v316
  %v576 = vpop.f32.mrf.mxu0
  %v577 = vadd.f32 %v79, %v576
  %v578 = vpop.f32.mrf.mxu0
  %v579 = vpop.f32.mrf.mxu0
  %v580 = vpop.f32.mrf.mxu0
  %581 = vdwg.mxu0
  %v582 = vmax.f32 %v353, 0.0
  %v583 = vmax.f32 %v356, 0.0
  %v584 = vmax.f32 %v361, 0.0
  %v585 = vmax.f32 %v364, 0.0
  %v586 = vmax.f32 %v369, 0.0
  %v587 = vmax.f32 %v372, 0.0
  %v588 = vmax.f32 %v377, 0.0
  %v589 = vmax.f32 %v380, 0.0
  %v590 = vmax.f32 %v385, 0.0
  %v591 = vmax.f32 %v388, 0.0
  %v592 = vmax.f32 %v393, 0.0
  %v593 = vmax.f32 %v396, 0.0
  %v594 = vmax.f32 %v401, 0.0
  %v595 = vmax.f32 %v404, 0.0
  %v596 = vmax.f32 %v409, 0.0
  %v597 = vmax.f32 %v412, 0.0
  %v598 = vmax.f32 %v417, 0.0
  %v599 = vmax.f32 %v420, 0.0
  %v600 = vmax.f32 %v425, 0.0
  %v601 = vmax.f32 %v428, 0.0
  %v602 = vmax.f32 %v433, 0.0
  %v603 = vmax.f32 %v436, 0.0
  %v604 = vmax.f32 %v441, 0.0
  %v605 = vmax.f32 %v444, 0.0
  %v606 = vmax.f32 %v449, 0.0
  %v607 = vmax.f32 %v452, 0.0
  %v608 = vmax.f32 %v457, 0.0
  %v609 = vmax.f32 %v460, 0.0
  %v610 = vmax.f32 %v465, 0.0
  %v611 = vmax.f32 %v468, 0.0
  %v612 = vmax.f32 %v473, 0.0
  %v613 = vmax.f32 %v476, 0.0
  %v614 = vmax.f32 %v481, 0.0
  %v615 = vmax.f32 %v484, 0.0
  %v616 = vmax.f32 %v489, 0.0
  %v617 = vmax.f32 %v492, 0.0
  %v618 = vmax.f32 %v497, 0.0
  %v619 = vmax.f32 %v500, 0.0
  %v620 = vmax.f32 %v505, 0.0
  %v621 = vmax.f32 %v508, 0.0
  %v622 = vmax.f32 %v513, 0.0
  %v623 = vmax.f32 %v516, 0.0
  %v624 = vmax.f32 %v521, 0.0
  %v625 = vmax.f32 %v524, 0.0
  %v626 = vmax.f32 %v529, 0.0
  %v627 = vmax.f32 %v532, 0.0
  %v628 = vmax.f32 %v537, 0.0
  %v629 = vmax.f32 %v540, 0.0
  %v630 = vmax.f32 %v545, 0.0
  %v631 = vmax.f32 %v548, 0.0
  %v632 = vmax.f32 %v553, 0.0
  %v633 = vmax.f32 %v556, 0.0
  %v634 = vmax.f32 %v561, 0.0
  %v635 = vmax.f32 %v564, 0.0
  %v636 = vmax.f32 %v569, 0.0
  %v637 = vmax.f32 %v572, 0.0
  %v638 = vmax.f32 %v577, 0.0
  %v639 = vpack.c.bf16 %v583, %v582
  %v640 = vpack.c.bf16 %v585, %v584
  %v641 = vpack.c.bf16 %v587, %v586
  %v642 = vpack.c.bf16 %v589, %v588
  %v643 = vpack.c.bf16 %v591, %v590
  %v644 = vpack.c.bf16 %v593, %v592
  %v645 = vpack.c.bf16 %v595, %v594
  %v646 = vpack.c.bf16 %v597, %v596
  %v647 = vpack.c.bf16 %v599, %v598
  %v648 = vpack.c.bf16 %v601, %v600
  %v649 = vpack.c.bf16 %v603, %v602
  %v650 = vpack.c.bf16 %v605, %v604
  %v651 = vpack.c.bf16 %v607, %v606
  %v652 = vpack.c.bf16 %v609, %v608
  %v653 = vpack.c.bf16 %v611, %v610
  %v654 = vpack.c.bf16 %v613, %v612
  %v655 = vpack.c.bf16 %v615, %v614
  %v656 = vpack.c.bf16 %v617, %v616
  %v657 = vpack.c.bf16 %v619, %v618
  %v658 = vpack.c.bf16 %v621, %v620
  %v659 = vpack.c.bf16 %v623, %v622
  %v660 = vpack.c.bf16 %v625, %v624
  %v661 = vpack.c.bf16 %v627, %v626
  %v662 = vpack.c.bf16 %v629, %v628
  %v663 = vpack.c.bf16 %v631, %v630
  %v664 = vpack.c.bf16 %v633, %v632
  %v665 = vpack.c.bf16 %v635, %v634
  %v666 = vpack.c.bf16 %v637, %v636
  %v667 = vpack.c.bf16 %v638, %v638
  %v697 = vunpack.c.l.b16 %v639
  %v698 = vunpack.c.h.b16 %v639
  %v699 = vunpack.c.l.b16 %v640
  %v700 = vunpack.c.h.b16 %v640
  %v701 = vunpack.c.l.b16 %v641
  %v702 = vunpack.c.h.b16 %v641
  %v703 = vunpack.c.l.b16 %v642
  %v704 = vunpack.c.h.b16 %v642
  %v705 = vunpack.c.l.b16 %v643
  %v706 = vunpack.c.h.b16 %v643
  %v707 = vunpack.c.l.b16 %v644
  %v708 = vunpack.c.h.b16 %v644
  %v709 = vunpack.c.l.b16 %v645
  %v710 = vunpack.c.h.b16 %v645
  %v711 = vunpack.c.l.b16 %v646
  %v712 = vunpack.c.h.b16 %v646
  %v713 = vunpack.c.l.b16 %v647
  %v714 = vunpack.c.h.b16 %v647
  %v715 = vunpack.c.l.b16 %v648
  %v716 = vunpack.c.h.b16 %v648
  %v717 = vunpack.c.l.b16 %v649
  %v718 = vunpack.c.h.b16 %v649
  %v719 = vunpack.c.l.b16 %v650
  %v720 = vunpack.c.h.b16 %v650
  %v721 = vunpack.c.l.b16 %v651
  %v722 = vunpack.c.h.b16 %v651
  %v723 = vunpack.c.l.b16 %v652
  %v724 = vunpack.c.h.b16 %v652
  %v725 = vunpack.c.l.b16 %v653
  %v726 = vunpack.c.h.b16 %v653
  %v727 = vunpack.c.l.b16 %v654
  %v728 = vunpack.c.h.b16 %v654
  %v729 = vunpack.c.l.b16 %v655
  %v730 = vunpack.c.h.b16 %v655
  %v731 = vunpack.c.l.b16 %v656
  %v732 = vunpack.c.h.b16 %v656
  %v733 = vunpack.c.l.b16 %v657
  %v734 = vunpack.c.h.b16 %v657
  %v735 = vunpack.c.l.b16 %v658
  %v736 = vunpack.c.h.b16 %v658
  %v737 = vunpack.c.l.b16 %v659
  %v738 = vunpack.c.h.b16 %v659
  %v739 = vunpack.c.l.b16 %v660
  %v740 = vunpack.c.h.b16 %v660
  %v741 = vunpack.c.l.b16 %v661
  %v742 = vunpack.c.h.b16 %v661
  %v743 = vunpack.c.l.b16 %v662
  %v744 = vunpack.c.h.b16 %v662
  %v745 = vunpack.c.l.b16 %v663
  %v746 = vunpack.c.h.b16 %v663
  %v747 = vunpack.c.l.b16 %v664
  %v748 = vunpack.c.h.b16 %v664
  %v749 = vunpack.c.l.b16 %v665
  %v750 = vunpack.c.h.b16 %v665
  %v751 = vunpack.c.l.b16 %v666
  %v752 = vunpack.c.h.b16 %v666
  %v753 = vunpack.c.l.b16 %v667
  %v754 = vpack.c.b16 %v697, %v697
  %v755 = vpack.c.b16 %v698, %v698
  %v756 = vpack.c.b16 %v699, %v699
  %v757 = vpack.c.b16 %v700, %v700
  %v758 = vpack.c.b16 %v701, %v701
  %v759 = vpack.c.b16 %v702, %v702
  %v760 = vpack.c.b16 %v703, %v703
  %v761 = vpack.c.b16 %v704, %v704
  %v762 = vpack.c.b16 %v705, %v705
  %v763 = vpack.c.b16 %v706, %v706
  %v764 = vpack.c.b16 %v707, %v707
  %v765 = vpack.c.b16 %v708, %v708
  %v766 = vpack.c.b16 %v709, %v709
  %v767 = vpack.c.b16 %v710, %v710
  %v768 = vpack.c.b16 %v711, %v711
  %v769 = vpack.c.b16 %v712, %v712
  %v770 = vpack.c.b16 %v713, %v713
  %v771 = vpack.c.b16 %v714, %v714
  %v772 = vpack.c.b16 %v715, %v715
  %v773 = vpack.c.b16 %v716, %v716
  %v774 = vpack.c.b16 %v717, %v717
  %v775 = vpack.c.b16 %v718, %v718
  %v776 = vpack.c.b16 %v719, %v719
  %v777 = vpack.c.b16 %v720, %v720
  %v778 = vpack.c.b16 %v721, %v721
  %v779 = vpack.c.b16 %v722, %v722
  %v780 = vpack.c.b16 %v723, %v723
  %v781 = vpack.c.b16 %v724, %v724
  %v782 = vpack.c.b16 %v725, %v725
  %v783 = vpack.c.b16 %v726, %v726
  %v784 = vpack.c.b16 %v727, %v727
  %v785 = vpack.c.b16 %v728, %v728
  %v786 = vpack.c.b16 %v729, %v729
  %v787 = vpack.c.b16 %v730, %v730
  %v788 = vpack.c.b16 %v731, %v731
  %v789 = vpack.c.b16 %v732, %v732
  %v790 = vpack.c.b16 %v733, %v733
  %v791 = vpack.c.b16 %v734, %v734
  %v792 = vpack.c.b16 %v735, %v735
  %v793 = vpack.c.b16 %v736, %v736
  %v794 = vpack.c.b16 %v737, %v737
  %v795 = vpack.c.b16 %v738, %v738
  %v796 = vpack.c.b16 %v739, %v739
  %v797 = vpack.c.b16 %v740, %v740
  %v798 = vpack.c.b16 %v741, %v741
  %v799 = vpack.c.b16 %v742, %v742
  %v800 = vpack.c.b16 %v743, %v743
  %v801 = vpack.c.b16 %v744, %v744
  %v802 = vpack.c.b16 %v745, %v745
  %v803 = vpack.c.b16 %v746, %v746
  %v804 = vpack.c.b16 %v747, %v747
  %v805 = vpack.c.b16 %v748, %v748
  %v806 = vpack.c.b16 %v749, %v749
  %v807 = vpack.c.b16 %v750, %v750
  %v808 = vpack.c.b16 %v751, %v751
  %v809 = vpack.c.b16 %v752, %v752
  %v810 = vpack.c.b16 %v753, %v753
  %868 = vst [vmem:[%s3] sm:$0xf] %v754
  %869 = vst [vmem:[%s3 + $0x4] sm:$0xf] %v755
  %870 = vst [vmem:[%s3 + $0x8] sm:$0xf] %v756
  %871 = vst [vmem:[%s3 + $0xc] sm:$0xf] %v757
  %872 = vst [vmem:[%s3 + $0x10] sm:$0xf] %v758
  %873 = vst [vmem:[%s3 + $0x14] sm:$0xf] %v759
  %874 = vst [vmem:[%s3 + $0x18] sm:$0xf] %v760
  %875 = vst [vmem:[%s3 + $0x1c] sm:$0xf] %v761
  %876 = vst [vmem:[%s3 + $0x20] sm:$0xf] %v762
  %877 = vst [vmem:[%s3 + $0x24] sm:$0xf] %v763
  %878 = vst [vmem:[%s3 + $0x28] sm:$0xf] %v764
  %879 = vst [vmem:[%s3 + $0x2c] sm:$0xf] %v765
  %880 = vst [vmem:[%s3 + $0x30] sm:$0xf] %v766
  %881 = vst [vmem:[%s3 + $0x34] sm:$0xf] %v767
  %882 = vst [vmem:[%s3 + $0x38] sm:$0xf] %v768
  %883 = vst [vmem:[%s3 + $0x3c] sm:$0xf] %v769
  %884 = vst [vmem:[%s3 + $0x40] sm:$0xf] %v770
  %885 = vst [vmem:[%s3 + $0x44] sm:$0xf] %v771
  %886 = vst [vmem:[%s3 + $0x48] sm:$0xf] %v772
  %887 = vst [vmem:[%s3 + $0x4c] sm:$0xf] %v773
  %888 = vst [vmem:[%s3 + $0x50] sm:$0xf] %v774
  %889 = vst [vmem:[%s3 + $0x54] sm:$0xf] %v775
  %890 = vst [vmem:[%s3 + $0x58] sm:$0xf] %v776
  %891 = vst [vmem:[%s3 + $0x5c] sm:$0xf] %v777
  %892 = vst [vmem:[%s3 + $0x60] sm:$0xf] %v778
  %893 = vst [vmem:[%s3 + $0x64] sm:$0xf] %v779
  %894 = vst [vmem:[%s3 + $0x68] sm:$0xf] %v780
  %895 = vst [vmem:[%s3 + $0x6c] sm:$0xf] %v781
  %896 = vst [vmem:[%s3 + $0x70] sm:$0xf] %v782
  %897 = vst [vmem:[%s3 + $0x74] sm:$0xf] %v783
  %898 = vst [vmem:[%s3 + $0x78] sm:$0xf] %v784
  %899 = vst [vmem:[%s3 + $0x7c] sm:$0xf] %v785
  %900 = vst [vmem:[%s3 + $0x80] sm:$0xf] %v786
  %901 = vst [vmem:[%s3 + $0x84] sm:$0xf] %v787
  %902 = vst [vmem:[%s3 + $0x88] sm:$0xf] %v788
  %903 = vst [vmem:[%s3 + $0x8c] sm:$0xf] %v789
  %904 = vst [vmem:[%s3 + $0x90] sm:$0xf] %v790
  %905 = vst [vmem:[%s3 + $0x94] sm:$0xf] %v791
  %906 = vst [vmem:[%s3 + $0x98] sm:$0xf] %v792
  %907 = vst [vmem:[%s3 + $0x9c] sm:$0xf] %v793
  %908 = vst [vmem:[%s3 + $0xa0] sm:$0xf] %v794
  %909 = vst [vmem:[%s3 + $0xa4] sm:$0xf] %v795
  %910 = vst [vmem:[%s3 + $0xa8] sm:$0xf] %v796
  %911 = vst [vmem:[%s3 + $0xac] sm:$0xf] %v797
  %912 = vst [vmem:[%s3 + $0xb0] sm:$0xf] %v798
  %913 = vst [vmem:[%s3 + $0xb4] sm:$0xf] %v799
  %914 = vst [vmem:[%s3 + $0xb8] sm:$0xf] %v800
  %915 = vst [vmem:[%s3 + $0xbc] sm:$0xf] %v801
  %916 = vst [vmem:[%s3 + $0xc0] sm:$0xf] %v802
  %917 = vst [vmem:[%s3 + $0xc4] sm:$0xf] %v803
  %918 = vst [vmem:[%s3 + $0xc8] sm:$0xf] %v804
  %919 = vst [vmem:[%s3 + $0xcc] sm:$0xf] %v805
  %920 = vst [vmem:[%s3 + $0xd0] sm:$0xf] %v806
  %921 = vst [vmem:[%s3 + $0xd4] sm:$0xf] %v807
  %922 = vst [vmem:[%s3 + $0xd8] sm:$0xf] %v808
  %923 = vst [vmem:[%s3 + $0xdc] sm:$0xf] %v809
  %924 = vst [vmem:[%s3 + $0xe0] sm:$0x1] %v810
  // Predicated region
  $region14: #{private_forward.3} parent=0 // pred_check
    _
  $region15: #{private_forward.3} parent=0 // pred_check_branch
    %926 = sbr.rel (0) target = $region17
  $region16: #{private_forward.3} parent=0 // pred_region
    _
  $region17: #{private_forward.3} parent=0 // pred_fallthru
    _
  // Predicated region
  $region18: #{private_forward.3} parent=0 // pred_check
    _
  $region19: #{private_forward.3} parent=0 // pred_check_branch
    %928 = sbr.rel (0) target = $region21
  $region20: #{private_forward.3} parent=0 // pred_region
    _
  $region21: #{private_forward.3} parent=0 // pred_fallthru
    _

// kernel: private_forward.5
$region0: #{private_forward.5}
  #allocation0 [shape = 'u32[]', space=smem, size = 0x4, offset = 0x4, fixed_abs, tag = 'smem constant byte address 0x4 - core index']
  #allocation1 [shape = 'u32[144,128]{1,0:T(1,128)}', space=vmem, size = 0x12000, scoped, tag = 'internal scratch']
  %s0 = inlined_call_operand.vmem [shape: bf16[8,512], index: 0, kind: input, shape index: {}]
  %s1 = inlined_call_operand.vmem [shape: bf16[512,256], index: 1, kind: input, shape index: {}]
  %s2 = inlined_call_operand.vmem [shape: f32[1,256], index: 2, kind: input, shape index: {}]
  %s3 = inlined_call_operand.vmem [shape: bf16[256,2048], index: 3, kind: input, shape index: {}]
  %s4 = inlined_call_operand.vmem [shape: f32[1,2048], index: 4, kind: input, shape index: {}]
  %s5 = inlined_call_operand.hbm [shape: f32[2,2048], index: 5, kind: output, shape index: {}]
  %s6 = sld [smem:[#allocation0]]
  $region30: #{private_forward.5} parent=0
    _
  %s8 = ssub.s32 1, %s6
  %s9 = scalar_select 0, %s8, %s6
  $region1: #{private_forward.5} parent=0
    #allocation2 [shape = 'u8[16384]{0}', space=vmem, size = 0x4000, scoped, tag = 'output window, operand 0, single buffered']
    #allocation3 [shape = 's32[1]{0}', space=sflag, size = 0x4, scoped, tag = 'scoped memory for private_forward.5']
    %10 = vsyncpa [#allocation3], 0
    // Predicated region
    $region2: #{private_forward.5} parent=1 // pred_check
      _
    $region3: #{private_forward.5} parent=1 // pred_check_branch
      %12 = sbr.rel (0) target = $region5
    $region4: #{private_forward.5} parent=1 // pred_region
      _
    $region5: #{private_forward.5} parent=1 // pred_fallthru
      _
    // Predicated region
    $region6: #{private_forward.5} parent=1 // pred_check
      _
    $region7: #{private_forward.5} parent=1 // pred_check_branch
      %14 = sbr.rel (0) target = $region9
    $region8: #{private_forward.5} parent=1 // pred_region
      _
    $region9: #{private_forward.5} parent=1 // pred_fallthru
      _
    // Predicated region
    $region10: #{private_forward.5} parent=1 // pred_check
      _
    $region11: #{private_forward.5} parent=1 // pred_check_branch
      %16 = sbr.rel (0) target = $region13
    $region12: #{private_forward.5} parent=1 // pred_region
      _
    $region13: #{private_forward.5} parent=1 // pred_fallthru
      _
    // Predicated region
    $region14: #{private_forward.5} parent=1 // pred_check
      _
    $region15: #{private_forward.5} parent=1 // pred_check_branch
      %18 = sbr.rel (0) target = $region17
    $region16: #{private_forward.5} parent=1 // pred_region
      _
    $region17: #{private_forward.5} parent=1 // pred_fallthru
      _
    // Predicated region
    $region18: #{private_forward.5} parent=1 // pred_check
      _
    $region19: #{private_forward.5} parent=1 // pred_check_branch
      %20 = sbr.rel (0) target = $region21
    $region20: #{private_forward.5} parent=1 // pred_region
      _
    $region21: #{private_forward.5} parent=1 // pred_fallthru
      _
    %v21 = vld [vmem:[%s0] sm:$0xff]
    %v22 = vld [vmem:[%s0 + $0x8] sm:$0xff]
    %v23 = vld [vmem:[%s1] sm:$0xff]
    %v24 = vld [vmem:[%s1 + $0x8] sm:$0xff]
    %v25 = vld [vmem:[%s1 + $0x10] sm:$0xff]
    %v26 = vld [vmem:[%s1 + $0x18] sm:$0xff]
    %v27 = vld [vmem:[%s1 + $0x20] sm:$0xff]
    %v28 = vld [vmem:[%s1 + $0x28] sm:$0xff]
    %v29 = vld [vmem:[%s1 + $0x30] sm:$0xff]
    %v30 = vld [vmem:[%s1 + $0x38] sm:$0xff]
    %v31 = vld [vmem:[%s1 + $0x40] sm:$0xff]
    %v32 = vld [vmem:[%s1 + $0x48] sm:$0xff]
    %v33 = vld [vmem:[%s1 + $0x50] sm:$0xff]
    %v34 = vld [vmem:[%s1 + $0x58] sm:$0xff]
    %v35 = vld [vmem:[%s1 + $0x60] sm:$0xff]
    %v36 = vld [vmem:[%s1 + $0x68] sm:$0xff]
    %v37 = vld [vmem:[%s1 + $0x70] sm:$0xff]
    %v38 = vld [vmem:[%s1 + $0x78] sm:$0xff]
    %v39 = vld [vmem:[%s1 + $0x80] sm:$0xff]
    %v40 = vld [vmem:[%s1 + $0x88] sm:$0xff]
    %v41 = vld [vmem:[%s1 + $0x90] sm:$0xff]
    %v42 = vld [vmem:[%s1 + $0x98] sm:$0xff]
    %v43 = vld [vmem:[%s1 + $0xa0] sm:$0xff]
    %v44 = vld [vmem:[%s1 + $0xa8] sm:$0xff]
    %v45 = vld [vmem:[%s1 + $0xb0] sm:$0xff]
    %v46 = vld [vmem:[%s1 + $0xb8] sm:$0xff]
    %v47 = vld [vmem:[%s1 + $0xc0] sm:$0xff]
    %v48 = vld [vmem:[%s1 + $0xc8] sm:$0xff]
    %v49 = vld [vmem:[%s1 + $0xd0] sm:$0xff]
    %v50 = vld [vmem:[%s1 + $0xd8] sm:$0xff]
    %v51 = vld [vmem:[%s1 + $0xe0] sm:$0xff]
    %v52 = vld [vmem:[%s1 + $0xe8] sm:$0xff]
    %v53 = vld [vmem:[%s1 + $0xf0] sm:$0xff]
    %v54 = vld [vmem:[%s1 + $0xf8] sm:$0xff]
    %v55 = vld [vmem:[%s1 + $0x100] sm:$0xff]
    %v56 = vld [vmem:[%s1 + $0x108] sm:$0xff]
    %v57 = vld [vmem:[%s1 + $0x110] sm:$0xff]
    %v58 = vld [vmem:[%s1 + $0x118] sm:$0xff]
    %v59 = vld [vmem:[%s1 + $0x120] sm:$0xff]
    %v60 = vld [vmem:[%s1 + $0x128] sm:$0xff]
    %v61 = vld [vmem:[%s1 + $0x130] sm:$0xff]
    %v62 = vld [vmem:[%s1 + $0x138] sm:$0xff]
    %v63 = vld [vmem:[%s1 + $0x140] sm:$0xff]
    %v64 = vld [vmem:[%s1 + $0x148] sm:$0xff]
    %v65 = vld [vmem:[%s1 + $0x150] sm:$0xff]
    %v66 = vld [vmem:[%s1 + $0x158] sm:$0xff]
    %v67 = vld [vmem:[%s1 + $0x160] sm:$0xff]
    %v68 = vld [vmem:[%s1 + $0x168] sm:$0xff]
    %v69 = vld [vmem:[%s1 + $0x170] sm:$0xff]
    %v70 = vld [vmem:[%s1 + $0x178] sm:$0xff]
    %v71 = vld [vmem:[%s1 + $0x180] sm:$0xff]
    %v72 = vld [vmem:[%s1 + $0x188] sm:$0xff]
    %v73 = vld [vmem:[%s1 + $0x190] sm:$0xff]
    %v74 = vld [vmem:[%s1 + $0x198] sm:$0xff]
    %v75 = vld [vmem:[%s1 + $0x1a0] sm:$0xff]
    %v76 = vld [vmem:[%s1 + $0x1a8] sm:$0xff]
    %v77 = vld [vmem:[%s1 + $0x1b0] sm:$0xff]
    %v78 = vld [vmem:[%s1 + $0x1b8] sm:$0xff]
    %v79 = vld [vmem:[%s1 + $0x1c0] sm:$0xff]
    %v80 = vld [vmem:[%s1 + $0x1c8] sm:$0xff]
    %v81 = vld [vmem:[%s1 + $0x1d0] sm:$0xff]
    %v82 = vld [vmem:[%s1 + $0x1d8] sm:$0xff]
    %v83 = vld [vmem:[%s1 + $0x1e0] sm:$0xff]
    %v84 = vld [vmem:[%s1 + $0x1e8] sm:$0xff]
    %v85 = vld [vmem:[%s1 + $0x1f0] sm:$0xff]
    %v86 = vld [vmem:[%s1 + $0x1f8] sm:$0xff]
    %v89 = vunpack.c.l.b16 %v21
    %v90 = vunpack.c.h.b16 %v21
    %v91 = vunpack.c.l.b16 %v22
    %v92 = vunpack.c.h.b16 %v22
    %v93 = vpack.c.b16 %v89, %v89
    %v94 = vpack.c.b16 %v90, %v90
    %v95 = vpack.c.b16 %v91, %v91
    %v96 = vpack.c.b16 %v92, %v92
    %v165 = vunpack.c.l.b16 %v23
    %v166 = vunpack.c.h.b16 %v23
    %v167 = vunpack.c.l.b16 %v24
    %v168 = vunpack.c.h.b16 %v24
    %v169 = vunpack.c.l.b16 %v25
    %v170 = vunpack.c.h.b16 %v25
    %v171 = vunpack.c.l.b16 %v26
    %v172 = vunpack.c.h.b16 %v26
    %v173 = vunpack.c.l.b16 %v27
    %v174 = vunpack.c.h.b16 %v27
    %v175 = vunpack.c.l.b16 %v28
    %v176 = vunpack.c.h.b16 %v28
    %v177 = vunpack.c.l.b16 %v29
    %v178 = vunpack.c.h.b16 %v29
    %v179 = vunpack.c.l.b16 %v30
    %v180 = vunpack.c.h.b16 %v30
    %v181 = vunpack.c.l.b16 %v31
    %v182 = vunpack.c.h.b16 %v31
    %v183 = vunpack.c.l.b16 %v32
    %v184 = vunpack.c.h.b16 %v32
    %v185 = vunpack.c.l.b16 %v33
    %v186 = vunpack.c.h.b16 %v33
    %v187 = vunpack.c.l.b16 %v34
    %v188 = vunpack.c.h.b16 %v34
    %v189 = vunpack.c.l.b16 %v35
    %v190 = vunpack.c.h.b16 %v35
    %v191 = vunpack.c.l.b16 %v36
    %v192 = vunpack.c.h.b16 %v36
    %v193 = vunpack.c.l.b16 %v37
    %v194 = vunpack.c.h.b16 %v37
    %v195 = vunpack.c.l.b16 %v38
    %v196 = vunpack.c.h.b16 %v38
    %v197 = vunpack.c.l.b16 %v39
    %v198 = vunpack.c.h.b16 %v39
    %v199 = vunpack.c.l.b16 %v40
    %v200 = vunpack.c.h.b16 %v40
    %v201 = vunpack.c.l.b16 %v41
    %v202 = vunpack.c.h.b16 %v41
    %v203 = vunpack.c.l.b16 %v42
    %v204 = vunpack.c.h.b16 %v42
    %v205 = vunpack.c.l.b16 %v43
    %v206 = vunpack.c.h.b16 %v43
    %v207 = vunpack.c.l.b16 %v44
    %v208 = vunpack.c.h.b16 %v44
    %v209 = vunpack.c.l.b16 %v45
    %v210 = vunpack.c.h.b16 %v45
    %v211 = vunpack.c.l.b16 %v46
    %v212 = vunpack.c.h.b16 %v46
    %v213 = vunpack.c.l.b16 %v47
    %v214 = vunpack.c.h.b16 %v47
    %v215 = vunpack.c.l.b16 %v48
    %v216 = vunpack.c.h.b16 %v48
    %v217 = vunpack.c.l.b16 %v49
    %v218 = vunpack.c.h.b16 %v49
    %v219 = vunpack.c.l.b16 %v50
    %v220 = vunpack.c.h.b16 %v50
    %v221 = vunpack.c.l.b16 %v51
    %v222 = vunpack.c.h.b16 %v51
    %v223 = vunpack.c.l.b16 %v52
    %v224 = vunpack.c.h.b16 %v52
    %v225 = vunpack.c.l.b16 %v53
    %v226 = vunpack.c.h.b16 %v53
    %v227 = vunpack.c.l.b16 %v54
    %v228 = vunpack.c.h.b16 %v54
    %v229 = vunpack.c.l.b16 %v55
    %v230 = vunpack.c.h.b16 %v55
    %v231 = vunpack.c.l.b16 %v56
    %v232 = vunpack.c.h.b16 %v56
    %v233 = vunpack.c.l.b16 %v57
    %v234 = vunpack.c.h.b16 %v57
    %v235 = vunpack.c.l.b16 %v58
    %v236 = vunpack.c.h.b16 %v58
    %v237 = vunpack.c.l.b16 %v59
    %v238 = vunpack.c.h.b16 %v59
    %v239 = vunpack.c.l.b16 %v60
    %v240 = vunpack.c.h.b16 %v60
    %v241 = vunpack.c.l.b16 %v61
    %v242 = vunpack.c.h.b16 %v61
    %v243 = vunpack.c.l.b16 %v62
    %v244 = vunpack.c.h.b16 %v62
    %v245 = vunpack.c.l.b16 %v63
    %v246 = vunpack.c.h.b16 %v63
    %v247 = vunpack.c.l.b16 %v64
    %v248 = vunpack.c.h.b16 %v64
    %v249 = vunpack.c.l.b16 %v65
    %v250 = vunpack.c.h.b16 %v65
    %v251 = vunpack.c.l.b16 %v66
    %v252 = vunpack.c.h.b16 %v66
    %v253 = vunpack.c.l.b16 %v67
    %v254 = vunpack.c.h.b16 %v67
    %v255 = vunpack.c.l.b16 %v68
    %v256 = vunpack.c.h.b16 %v68
    %v257 = vunpack.c.l.b16 %v69
    %v258 = vunpack.c.h.b16 %v69
    %v259 = vunpack.c.l.b16 %v70
    %v260 = vunpack.c.h.b16 %v70
    %v261 = vunpack.c.l.b16 %v71
    %v262 = vunpack.c.h.b16 %v71
    %v263 = vunpack.c.l.b16 %v72
    %v264 = vunpack.c.h.b16 %v72
    %v265 = vunpack.c.l.b16 %v73
    %v266 = vunpack.c.h.b16 %v73
    %v267 = vunpack.c.l.b16 %v74
    %v268 = vunpack.c.h.b16 %v74
    %v269 = vunpack.c.l.b16 %v75
    %v270 = vunpack.c.h.b16 %v75
    %v271 = vunpack.c.l.b16 %v76
    %v272 = vunpack.c.h.b16 %v76
    %v273 = vunpack.c.l.b16 %v77
    %v274 = vunpack.c.h.b16 %v77
    %v275 = vunpack.c.l.b16 %v78
    %v276 = vunpack.c.h.b16 %v78
    %v277 = vunpack.c.l.b16 %v79
    %v278 = vunpack.c.h.b16 %v79
    %v279 = vunpack.c.l.b16 %v80
    %v280 = vunpack.c.h.b16 %v80
    %v281 = vunpack.c.l.b16 %v81
    %v282 = vunpack.c.h.b16 %v81
    %v283 = vunpack.c.l.b16 %v82
    %v284 = vunpack.c.h.b16 %v82
    %v285 = vunpack.c.l.b16 %v83
    %v286 = vunpack.c.h.b16 %v83
    %v287 = vunpack.c.l.b16 %v84
    %v288 = vunpack.c.h.b16 %v84
    %v289 = vunpack.c.l.b16 %v85
    %v290 = vunpack.c.h.b16 %v85
    %v291 = vunpack.c.l.b16 %v86
    %v292 = vunpack.c.h.b16 %v86
    %v293 = vpack.c.b16 %v167, %v165
    %v294 = vpack.c.b16 %v168, %v166
    %v295 = vpack.c.b16 %v171, %v169
    %v296 = vpack.c.b16 %v172, %v170
    %v297 = vpack.c.b16 %v175, %v173
    %v298 = vpack.c.b16 %v176, %v174
    %v299 = vpack.c.b16 %v179, %v177
    %v300 = vpack.c.b16 %v180, %v178
    %v301 = vpack.c.b16 %v183, %v181
    %v302 = vpack.c.b16 %v184, %v182
    %v303 = vpack.c.b16 %v187, %v185
    %v304 = vpack.c.b16 %v188, %v186
    %v305 = vpack.c.b16 %v191, %v189
    %v306 = vpack.c.b16 %v192, %v190
    %v307 = vpack.c.b16 %v195, %v193
    %v308 = vpack.c.b16 %v196, %v194
    %v309 = vpack.c.b16 %v199, %v197
    %v310 = vpack.c.b16 %v200, %v198
    %v311 = vpack.c.b16 %v203, %v201
    %v312 = vpack.c.b16 %v204, %v202
    %v313 = vpack.c.b16 %v207, %v205
    %v314 = vpack.c.b16 %v208, %v206
    %v315 = vpack.c.b16 %v211, %v209
    %v316 = vpack.c.b16 %v212, %v210
    %v317 = vpack.c.b16 %v215, %v213
    %v318 = vpack.c.b16 %v216, %v214
    %v319 = vpack.c.b16 %v219, %v217
    %v320 = vpack.c.b16 %v220, %v218
    %v321 = vpack.c.b16 %v223, %v221
    %v322 = vpack.c.b16 %v224, %v222
    %v323 = vpack.c.b16 %v227, %v225
    %v324 = vpack.c.b16 %v228, %v226
    %v325 = vpack.c.b16 %v231, %v229
    %v326 = vpack.c.b16 %v232, %v230
    %v327 = vpack.c.b16 %v235, %v233
    %v328 = vpack.c.b16 %v236, %v234
    %v329 = vpack.c.b16 %v239, %v237
    %v330 = vpack.c.b16 %v240, %v238
    %v331 = vpack.c.b16 %v243, %v241
    %v332 = vpack.c.b16 %v244, %v242
    %v333 = vpack.c.b16 %v247, %v245
    %v334 = vpack.c.b16 %v248, %v246
    %v335 = vpack.c.b16 %v251, %v249
    %v336 = vpack.c.b16 %v252, %v250
    %v337 = vpack.c.b16 %v255, %v253
    %v338 = vpack.c.b16 %v256, %v254
    %v339 = vpack.c.b16 %v259, %v257
    %v340 = vpack.c.b16 %v260, %v258
    %v341 = vpack.c.b16 %v263, %v261
    %v342 = vpack.c.b16 %v264, %v262
    %v343 = vpack.c.b16 %v267, %v265
    %v344 = vpack.c.b16 %v268, %v266
    %v345 = vpack.c.b16 %v271, %v269
    %v346 = vpack.c.b16 %v272, %v270
    %v347 = vpack.c.b16 %v275, %v273
    %v348 = vpack.c.b16 %v276, %v274
    %v349 = vpack.c.b16 %v279, %v277
    %v350 = vpack.c.b16 %v280, %v278
    %v351 = vpack.c.b16 %v283, %v281
    %v352 = vpack.c.b16 %v284, %v282
    %v353 = vpack.c.b16 %v287, %v285
    %v354 = vpack.c.b16 %v288, %v286
    %v355 = vpack.c.b16 %v291, %v289
    %v356 = vpack.c.b16 %v292, %v290
    %421 = vmatprep.subr.bf16.mxu0 %v308
    %422 = vmatpush1.bf16.msra.mxu0 %v307
    %423 = vmatprep.subr.bf16.mxu0 %v306
    %424 = vmatpush1.bf16.msra.mxu0 %v305
    %425 = vmatprep.subr.bf16.mxu0 %v304
    %426 = vmatpush1.bf16.msra.mxu0 %v303
    %427 = vmatprep.subr.bf16.mxu0 %v302
    %428 = vmatpush1.bf16.msra.mxu0 %v301
    %429 = vmatprep.subr.bf16.mxu0 %v300
    %430 = vmatpush1.bf16.msra.mxu0 %v299
    %431 = vmatprep.subr.bf16.mxu0 %v298
    %432 = vmatpush1.bf16.msra.mxu0 %v297
    %433 = vmatprep.subr.bf16.mxu0 %v296
    %434 = vmatpush1.bf16.msra.mxu0 %v295
    %435 = vmatprep.subr.bf16.mxu0 %v294
    %436 = vmatpush1.bf16.msra.mxu0 %v293
    %437 = vmatprep.subr.bf16.mxu0 %v324
    %438 = vmatpush2.bf16.msra.mxu0 %v323
    %439 = vmatprep.subr.bf16.mxu0 %v322
    %440 = vmatpush2.bf16.msra.mxu0 %v321
    %441 = vmatprep.subr.bf16.mxu0 %v320
    %442 = vmatpush2.bf16.msra.mxu0 %v319
    %443 = vmatprep.subr.bf16.mxu0 %v318
    %444 = vmatpush2.bf16.msra.mxu0 %v317
    %445 = vmatprep.subr.bf16.mxu0 %v316
    %446 = vmatpush2.bf16.msra.mxu0 %v315
    %447 = vmatprep.subr.bf16.mxu0 %v314
    %448 = vmatpush2.bf16.msra.mxu0 %v313
    %449 = vmatprep.subr.bf16.mxu0 %v312
    %450 = vmatpush2.bf16.msra.mxu0 %v311
    %451 = vmatprep.subr.bf16.mxu0 %v310
    %452 = vmatpush2.bf16.msra.mxu0 %v309
    %453 = vmatprep.mubr.bf16.mxu0 %v94
    %454 = vmatmul.mubr.bf16.gmra.mxu0 %v93
    %v455 = vpop.f32.mrf.mxu0
    %v456 = vadd.f32 0.0, %v455
    %v457 = vpop.f32.mrf.mxu0
    %v458 = vadd.f32 0.0, %v457
    %v459 = vpop.f32.mrf.mxu0
    %v460 = vpop.f32.mrf.mxu0
    %461 = vdwg.mxu0
    %462 = vmatprep.subr.bf16.mxu0 %v340
    %463 = vmatpush1.bf16.msra.mxu0 %v339
    %464 = vmatprep.subr.bf16.mxu0 %v338
    %465 = vmatpush1.bf16.msra.mxu0 %v337
    %466 = vmatprep.subr.bf16.mxu0 %v336
    %467 = vmatpush1.bf16.msra.mxu0 %v335
    %468 = vmatprep.subr.bf16.mxu0 %v334
    %469 = vmatpush1.bf16.msra.mxu0 %v333
    %470 = vmatprep.subr.bf16.mxu0 %v332
    %471 = vmatpush1.bf16.msra.mxu0 %v331
    %472 = vmatprep.subr.bf16.mxu0 %v330
    %473 = vmatpush1.bf16.msra.mxu0 %v329
    %474 = vmatprep.subr.bf16.mxu0 %v328
    %475 = vmatpush1.bf16.msra.mxu0 %v327
    %476 = vmatprep.subr.bf16.mxu0 %v326
    %477 = vmatpush1.bf16.msra.mxu0 %v325
    %478 = vmatprep.subr.bf16.mxu0 %v356
    %479 = vmatpush2.bf16.msra.mxu0 %v355
    %480 = vmatprep.subr.bf16.mxu0 %v354
    %481 = vmatpush2.bf16.msra.mxu0 %v353
    %482 = vmatprep.subr.bf16.mxu0 %v352
    %483 = vmatpush2.bf16.msra.mxu0 %v351
    %484 = vmatprep.subr.bf16.mxu0 %v350
    %485 = vmatpush2.bf16.msra.mxu0 %v349
    %486 = vmatprep.subr.bf16.mxu0 %v348
    %487 = vmatpush2.bf16.msra.mxu0 %v347
    %488 = vmatprep.subr.bf16.mxu0 %v346
    %489 = vmatpush2.bf16.msra.mxu0 %v345
    %490 = vmatprep.subr.bf16.mxu0 %v344
    %491 = vmatpush2.bf16.msra.mxu0 %v343
    %492 = vmatprep.subr.bf16.mxu0 %v342
    %493 = vmatpush2.bf16.msra.mxu0 %v341
    %494 = vmatprep.mubr.bf16.mxu0 %v96
    %495 = vmatmul.mubr.bf16.gmra.mxu0 %v95
    %v496 = vpop.f32.mrf.mxu0
    %v497 = vadd.f32 %v456, %v496
    %v498 = vpop.f32.mrf.mxu0
    %v499 = vadd.f32 %v458, %v498
    %v500 = vpop.f32.mrf.mxu0
    %v501 = vpop.f32.mrf.mxu0
    %502 = vdwg.mxu0
    %v505 = vrot.slane %v497, 2
    %v506 = vrot.slane %v499, 2
    %v509 = vmax.f32 %v497, %v505
    %v510 = vmax.f32 %v499, %v506
    %v511 = vrot.slane %v497, 4
    %v512 = vrot.slane %v499, 4
    %v515 = vmax.f32 %v509, %v511
    %v516 = vmax.f32 %v510, %v512
    %v517 = vrot.slane %v497, 6
    %v518 = vrot.slane %v499, 6
    %v521 = vmax.f32 %v515, %v517
    %v522 = vmax.f32 %v516, %v518
    %v523 = vld [vmem:[%s2] sm:$0x3]
    %v525 = vlaneseq
    %v526 = vshrl.u32 %v525, 7
    %v527 = vsub.s32 0, %v526
    %v528 = vrot.slane %v523, %v527
    %v529 = vlaneseq
    %v530 = vshrl.u32 %v529, 7
    %v531 = vsub.s32 1, %v530
    %v532 = vrot.slane %v523, %v531
    %v535 = vadd.f32 %v521, %v528
    %v536 = vadd.f32 %v522, %v532
    %v537 = vmax.f32 %v535, 0.0
    %v538 = vmax.f32 %v536, 0.0
    %v539 = vpack.c.bf16 %v537, %v537
    %v540 = vpack.c.bf16 %v538, %v538
    %v541 = vld [vmem:[%s3] sm:$0xff]
    %v542 = vld [vmem:[%s3 + $0x8] sm:$0xff]
    %v543 = vld [vmem:[%s3 + $0x10] sm:$0xff]
    %v544 = vld [vmem:[%s3 + $0x18] sm:$0xff]
    %v545 = vld [vmem:[%s3 + $0x20] sm:$0xff]
    %v546 = vld [vmem:[%s3 + $0x28] sm:$0xff]
    %v547 = vld [vmem:[%s3 + $0x30] sm:$0xff]
    %v548 = vld [vmem:[%s3 + $0x38] sm:$0xff]
    %v549 = vld [vmem:[%s3 + $0x40] sm:$0xff]
    %v550 = vld [vmem:[%s3 + $0x48] sm:$0xff]
    %v551 = vld [vmem:[%s3 + $0x50] sm:$0xff]
    %v552 = vld [vmem:[%s3 + $0x58] sm:$0xff]
    %v553 = vld [vmem:[%s3 + $0x60] sm:$0xff]
    %v554 = vld [vmem:[%s3 + $0x68] sm:$0xff]
    %v555 = vld [vmem:[%s3 + $0x70] sm:$0xff]
    %v556 = vld [vmem:[%s3 + $0x78] sm:$0xff]
    %v557 = vld [vmem:[%s3 + $0x80] sm:$0xff]
    %v558 = vld [vmem:[%s3 + $0x88] sm:$0xff]
    %v559 = vld [vmem:[%s3 + $0x90] sm:$0xff]
    %v560 = vld [vmem:[%s3 + $0x98] sm:$0xff]
    %v561 = vld [vmem:[%s3 + $0xa0] sm:$0xff]
    %v562 = vld [vmem:[%s3 + $0xa8] sm:$0xff]
    %v563 = vld [vmem:[%s3 + $0xb0] sm:$0xff]
    %v564 = vld [vmem:[%s3 + $0xb8] sm:$0xff]
    %v565 = vld [vmem:[%s3 + $0xc0] sm:$0xff]
    %v566 = vld [vmem:[%s3 + $0xc8] sm:$0xff]
    %v567 = vld [vmem:[%s3 + $0xd0] sm:$0xff]
    %v568 = vld [vmem:[%s3 + $0xd8] sm:$0xff]
    %v569 = vld [vmem:[%s3 + $0xe0] sm:$0xff]
    %v570 = vld [vmem:[%s3 + $0xe8] sm:$0xff]
    %v571 = vld [vmem:[%s3 + $0xf0] sm:$0xff]
    %v572 = vld [vmem:[%s3 + $0xf8] sm:$0xff]
    %v573 = vld [vmem:[%s3 + $0x100] sm:$0xff]
    %v574 = vld [vmem:[%s3 + $0x108] sm:$0xff]
    %v575 = vld [vmem:[%s3 + $0x110] sm:$0xff]
    %v576 = vld [vmem:[%s3 + $0x118] sm:$0xff]
    %v577 = vld [vmem:[%s3 + $0x120] sm:$0xff]
    %v578 = vld [vmem:[%s3 + $0x128] sm:$0xff]
    %v579 = vld [vmem:[%s3 + $0x130] sm:$0xff]
    %v580 = vld [vmem:[%s3 + $0x138] sm:$0xff]
    %v581 = vld [vmem:[%s3 + $0x140] sm:$0xff]
    %v582 = vld [vmem:[%s3 + $0x148] sm:$0xff]
    %v583 = vld [vmem:[%s3 + $0x150] sm:$0xff]
    %v584 = vld [vmem:[%s3 + $0x158] sm:$0xff]
    %v585 = vld [vmem:[%s3 + $0x160] sm:$0xff]
    %v586 = vld [vmem:[%s3 + $0x168] sm:$0xff]
    %v587 = vld [vmem:[%s3 + $0x170] sm:$0xff]
    %v588 = vld [vmem:[%s3 + $0x178] sm:$0xff]
    %v589 = vld [vmem:[%s3 + $0x180] sm:$0xff]
    %v590 = vld [vmem:[%s3 + $0x188] sm:$0xff]
    %v591 = vld [vmem:[%s3 + $0x190] sm:$0xff]
    %v592 = vld [vmem:[%s3 + $0x198] sm:$0xff]
    %v593 = vld [vmem:[%s3 + $0x1a0] sm:$0xff]
    %v594 = vld [vmem:[%s3 + $0x1a8] sm:$0xff]
    %v595 = vld [vmem:[%s3 + $0x1b0] sm:$0xff]
    %v596 = vld [vmem:[%s3 + $0x1b8] sm:$0xff]
    %v597 = vld [vmem:[%s3 + $0x1c0] sm:$0xff]
    %v598 = vld [vmem:[%s3 + $0x1c8] sm:$0xff]
    %v599 = vld [vmem:[%s3 + $0x1d0] sm:$0xff]
    %v600 = vld [vmem:[%s3 + $0x1d8] sm:$0xff]
    %v601 = vld [vmem:[%s3 + $0x1e0] sm:$0xff]
    %v602 = vld [vmem:[%s3 + $0x1e8] sm:$0xff]
    %v603 = vld [vmem:[%s3 + $0x1f0] sm:$0xff]
    %v604 = vld [vmem:[%s3 + $0x1f8] sm:$0xff]
    %v605 = vld [vmem:[%s3 + $0x200] sm:$0xff]
    %v606 = vld [vmem:[%s3 + $0x208] sm:$0xff]
    %v607 = vld [vmem:[%s3 + $0x210] sm:$0xff]
    %v608 = vld [vmem:[%s3 + $0x218] sm:$0xff]
    %v609 = vld [vmem:[%s3 + $0x220] sm:$0xff]
    %v610 = vld [vmem:[%s3 + $0x228] sm:$0xff]
    %v611 = vld [vmem:[%s3 + $0x230] sm:$0xff]
    %v612 = vld [vmem:[%s3 + $0x238] sm:$0xff]
    %v613 = vld [vmem:[%s3 + $0x240] sm:$0xff]
    %v614 = vld [vmem:[%s3 + $0x248] sm:$0xff]
    %v615 = vld [vmem:[%s3 + $0x250] sm:$0xff]
    %v616 = vld [vmem:[%s3 + $0x258] sm:$0xff]
    %v617 = vld [vmem:[%s3 + $0x260] sm:$0xff]
    %v618 = vld [vmem:[%s3 + $0x268] sm:$0xff]
    %v619 = vld [vmem:[%s3 + $0x270] sm:$0xff]
    %v620 = vld [vmem:[%s3 + $0x278] sm:$0xff]
    %v621 = vld [vmem:[%s3 + $0x280] sm:$0xff]
    %v622 = vld [vmem:[%s3 + $0x288] sm:$0xff]
    %v623 = vld [vmem:[%s3 + $0x290] sm:$0xff]
    %v624 = vld [vmem:[%s3 + $0x298] sm:$0xff]
    %v625 = vld [vmem:[%s3 + $0x2a0] sm:$0xff]
    %v626 = vld [vmem:[%s3 + $0x2a8] sm:$0xff]
    %v627 = vld [vmem:[%s3 + $0x2b0] sm:$0xff]
    %v628 = vld [vmem:[%s3 + $0x2b8] sm:$0xff]
    %v629 = vld [vmem:[%s3 + $0x2c0] sm:$0xff]
    %v630 = vld [vmem:[%s3 + $0x2c8] sm:$0xff]
    %v631 = vld [vmem:[%s3 + $0x2d0] sm:$0xff]
    %v632 = vld [vmem:[%s3 + $0x2d8] sm:$0xff]
    %v633 = vld [vmem:[%s3 + $0x2e0] sm:$0xff]
    %v634 = vld [vmem:[%s3 + $0x2e8] sm:$0xff]
    %v635 = vld [vmem:[%s3 + $0x2f0] sm:$0xff]
    %v636 = vld [vmem:[%s3 + $0x2f8] sm:$0xff]
    %v637 = vld [vmem:[%s3 + $0x300] sm:$0xff]
    %v638 = vld [vmem:[%s3 + $0x308] sm:$0xff]
    %v639 = vld [vmem:[%s3 + $0x310] sm:$0xff]
    %v640 = vld [vmem:[%s3 + $0x318] sm:$0xff]
    %v641 = vld [vmem:[%s3 + $0x320] sm:$0xff]
    %v642 = vld [vmem:[%s3 + $0x328] sm:$0xff]
    %v643 = vld [vmem:[%s3 + $0x330] sm:$0xff]
    %v644 = vld [vmem:[%s3 + $0x338] sm:$0xff]
    %v645 = vld [vmem:[%s3 + $0x340] sm:$0xff]
    %v646 = vld [vmem:[%s3 + $0x348] sm:$0xff]
    %v647 = vld [vmem:[%s3 + $0x350] sm:$0xff]
    %v648 = vld [vmem:[%s3 + $0x358] sm:$0xff]
    %v649 = vld [vmem:[%s3 + $0x360] sm:$0xff]
    %v650 = vld [vmem:[%s3 + $0x368] sm:$0xff]
    %v651 = vld [vmem:[%s3 + $0x370] sm:$0xff]
    %v652 = vld [vmem:[%s3 + $0x378] sm:$0xff]
    %v653 = vld [vmem:[%s3 + $0x380] sm:$0xff]
    %v654 = vld [vmem:[%s3 + $0x388] sm:$0xff]
    %v655 = vld [vmem:[%s3 + $0x390] sm:$0xff]
    %v656 = vld [vmem:[%s3 + $0x398] sm:$0xff]
    %v657 = vld [vmem:[%s3 + $0x3a0] sm:$0xff]
    %v658 = vld [vmem:[%s3 + $0x3a8] sm:$0xff]
    %v659 = vld [vmem:[%s3 + $0x3b0] sm:$0xff]
    %v660 = vld [vmem:[%s3 + $0x3b8] sm:$0xff]
    %v661 = vld [vmem:[%s3 + $0x3c0] sm:$0xff]
    %v662 = vld [vmem:[%s3 + $0x3c8] sm:$0xff]
    %v663 = vld [vmem:[%s3 + $0x3d0] sm:$0xff]
    %v664 = vld [vmem:[%s3 + $0x3d8] sm:$0xff]
    %v665 = vld [vmem:[%s3 + $0x3e0] sm:$0xff]
    %v666 = vld [vmem:[%s3 + $0x3e8] sm:$0xff]
    %v667 = vld [vmem:[%s3 + $0x3f0] sm:$0xff]
    %v668 = vld [vmem:[%s3 + $0x3f8] sm:$0xff]
    %v669 = vld [vmem:[%s3 + $0x400] sm:$0xff]
    %v670 = vld [vmem:[%s3 + $0x408] sm:$0xff]
    %v671 = vld [vmem:[%s3 + $0x410] sm:$0xff]
    %v672 = vld [vmem:[%s3 + $0x418] sm:$0xff]
    %v673 = vld [vmem:[%s3 + $0x420] sm:$0xff]
    %v674 = vld [vmem:[%s3 + $0x428] sm:$0xff]
    %v675 = vld [vmem:[%s3 + $0x430] sm:$0xff]
    %v676 = vld [vmem:[%s3 + $0x438] sm:$0xff]
    %v677 = vld [vmem:[%s3 + $0x440] sm:$0xff]
    %v678 = vld [vmem:[%s3 + $0x448] sm:$0xff]
    %v679 = vld [vmem:[%s3 + $0x450] sm:$0xff]
    %v680 = vld [vmem:[%s3 + $0x458] sm:$0xff]
    %v681 = vld [vmem:[%s3 + $0x460] sm:$0xff]
    %v682 = vld [vmem:[%s3 + $0x468] sm:$0xff]
    %v683 = vld [vmem:[%s3 + $0x470] sm:$0xff]
    %v684 = vld [vmem:[%s3 + $0x478] sm:$0xff]
    %v685 = vld [vmem:[%s3 + $0x480] sm:$0xff]
    %v686 = vld [vmem:[%s3 + $0x488] sm:$0xff]
    %v687 = vld [vmem:[%s3 + $0x490] sm:$0xff]
    %v688 = vld [vmem:[%s3 + $0x498] sm:$0xff]
    %v689 = vld [vmem:[%s3 + $0x4a0] sm:$0xff]
    %v690 = vld [vmem:[%s3 + $0x4a8] sm:$0xff]
    %v691 = vld [vmem:[%s3 + $0x4b0] sm:$0xff]
    %v692 = vld [vmem:[%s3 + $0x4b8] sm:$0xff]
    %v693 = vld [vmem:[%s3 + $0x4c0] sm:$0xff]
    %v694 = vld [vmem:[%s3 + $0x4c8] sm:$0xff]
    %v695 = vld [vmem:[%s3 + $0x4d0] sm:$0xff]
    %v696 = vld [vmem:[%s3 + $0x4d8] sm:$0xff]
    %v697 = vld [vmem:[%s3 + $0x4e0] sm:$0xff]
    %v698 = vld [vmem:[%s3 + $0x4e8] sm:$0xff]
    %v699 = vld [vmem:[%s3 + $0x4f0] sm:$0xff]
    %v700 = vld [vmem:[%s3 + $0x4f8] sm:$0xff]
    %v701 = vld [vmem:[%s3 + $0x500] sm:$0xff]
    %v702 = vld [vmem:[%s3 + $0x508] sm:$0xff]
    %v703 = vld [vmem:[%s3 + $0x510] sm:$0xff]
    %v704 = vld [vmem:[%s3 + $0x518] sm:$0xff]
    %v705 = vld [vmem:[%s3 + $0x520] sm:$0xff]
    %v706 = vld [vmem:[%s3 + $0x528] sm:$0xff]
    %v707 = vld [vmem:[%s3 + $0x530] sm:$0xff]
    %v708 = vld [vmem:[%s3 + $0x538] sm:$0xff]
    %v709 = vld [vmem:[%s3 + $0x540] sm:$0xff]
    %v710 = vld [vmem:[%s3 + $0x548] sm:$0xff]
    %v711 = vld [vmem:[%s3 + $0x550] sm:$0xff]
    %v712 = vld [vmem:[%s3 + $0x558] sm:$0xff]
    %v713 = vld [vmem:[%s3 + $0x560] sm:$0xff]
    %v714 = vld [vmem:[%s3 + $0x568] sm:$0xff]
    %v715 = vld [vmem:[%s3 + $0x570] sm:$0xff]
    %v716 = vld [vmem:[%s3 + $0x578] sm:$0xff]
    %v717 = vld [vmem:[%s3 + $0x580] sm:$0xff]
    %v718 = vld [vmem:[%s3 + $0x588] sm:$0xff]
    %v719 = vld [vmem:[%s3 + $0x590] sm:$0xff]
    %v720 = vld [vmem:[%s3 + $0x598] sm:$0xff]
    %v721 = vld [vmem:[%s3 + $0x5a0] sm:$0xff]
    %v722 = vld [vmem:[%s3 + $0x5a8] sm:$0xff]
    %v723 = vld [vmem:[%s3 + $0x5b0] sm:$0xff]
    %v724 = vld [vmem:[%s3 + $0x5b8] sm:$0xff]
    %v725 = vld [vmem:[%s3 + $0x5c0] sm:$0xff]
    %v726 = vld [vmem:[%s3 + $0x5c8] sm:$0xff]
    %v727 = vld [vmem:[%s3 + $0x5d0] sm:$0xff]
    %v728 = vld [vmem:[%s3 + $0x5d8] sm:$0xff]
    %v729 = vld [vmem:[%s3 + $0x5e0] sm:$0xff]
    %v730 = vld [vmem:[%s3 + $0x5e8] sm:$0xff]
    %v731 = vld [vmem:[%s3 + $0x5f0] sm:$0xff]
    %v732 = vld [vmem:[%s3 + $0x5f8] sm:$0xff]
    %v733 = vld [vmem:[%s3 + $0x600] sm:$0xff]
    %v734 = vld [vmem:[%s3 + $0x608] sm:$0xff]
    %v735 = vld [vmem:[%s3 + $0x610] sm:$0xff]
    %v736 = vld [vmem:[%s3 + $0x618] sm:$0xff]
    %v737 = vld [vmem:[%s3 + $0x620] sm:$0xff]
    %v738 = vld [vmem:[%s3 + $0x628] sm:$0xff]
    %v739 = vld [vmem:[%s3 + $0x630] sm:$0xff]
    %v740 = vld [vmem:[%s3 + $0x638] sm:$0xff]
    %v741 = vld [vmem:[%s3 + $0x640] sm:$0xff]
    %v742 = vld [vmem:[%s3 + $0x648] sm:$0xff]
    %v743 = vld [vmem:[%s3 + $0x650] sm:$0xff]
    %v744 = vld [vmem:[%s3 + $0x658] sm:$0xff]
    %v745 = vld [vmem:[%s3 + $0x660] sm:$0xff]
    %v746 = vld [vmem:[%s3 + $0x668] sm:$0xff]
    %v747 = vld [vmem:[%s3 + $0x670] sm:$0xff]
    %v748 = vld [vmem:[%s3 + $0x678] sm:$0xff]
    %v749 = vld [vmem:[%s3 + $0x680] sm:$0xff]
    %v750 = vld [vmem:[%s3 + $0x688] sm:$0xff]
    %v751 = vld [vmem:[%s3 + $0x690] sm:$0xff]
    %v752 = vld [vmem:[%s3 + $0x698] sm:$0xff]
    %v753 = vld [vmem:[%s3 + $0x6a0] sm:$0xff]
    %v754 = vld [vmem:[%s3 + $0x6a8] sm:$0xff]
    %v755 = vld [vmem:[%s3 + $0x6b0] sm:$0xff]
    %v756 = vld [vmem:[%s3 + $0x6b8] sm:$0xff]
    %v757 = vld [vmem:[%s3 + $0x6c0] sm:$0xff]
    %v758 = vld [vmem:[%s3 + $0x6c8] sm:$0xff]
    %v759 = vld [vmem:[%s3 + $0x6d0] sm:$0xff]
    %v760 = vld [vmem:[%s3 + $0x6d8] sm:$0xff]
    %v761 = vld [vmem:[%s3 + $0x6e0] sm:$0xff]
    %v762 = vld [vmem:[%s3 + $0x6e8] sm:$0xff]
    %v763 = vld [vmem:[%s3 + $0x6f0] sm:$0xff]
    %v764 = vld [vmem:[%s3 + $0x6f8] sm:$0xff]
    %v765 = vld [vmem:[%s3 + $0x700] sm:$0xff]
    %v766 = vld [vmem:[%s3 + $0x708] sm:$0xff]
    %v767 = vld [vmem:[%s3 + $0x710] sm:$0xff]
    %v768 = vld [vmem:[%s3 + $0x718] sm:$0xff]
    %v769 = vld [vmem:[%s3 + $0x720] sm:$0xff]
    %v770 = vld [vmem:[%s3 + $0x728] sm:$0xff]
    %v771 = vld [vmem:[%s3 + $0x730] sm:$0xff]
    %v772 = vld [vmem:[%s3 + $0x738] sm:$0xff]
    %v773 = vld [vmem:[%s3 + $0x740] sm:$0xff]
    %v774 = vld [vmem:[%s3 + $0x748] sm:$0xff]
    %v775 = vld [vmem:[%s3 + $0x750] sm:$0xff]
    %v776 = vld [vmem:[%s3 + $0x758] sm:$0xff]
    %v777 = vld [vmem:[%s3 + $0x760] sm:$0xff]
    %v778 = vld [vmem:[%s3 + $0x768] sm:$0xff]
    %v779 = vld [vmem:[%s3 + $0x770] sm:$0xff]
    %v780 = vld [vmem:[%s3 + $0x778] sm:$0xff]
    %v781 = vld [vmem:[%s3 + $0x780] sm:$0xff]
    %v782 = vld [vmem:[%s3 + $0x788] sm:$0xff]
    %v783 = vld [vmem:[%s3 + $0x790] sm:$0xff]
    %v784 = vld [vmem:[%s3 + $0x798] sm:$0xff]
    %v785 = vld [vmem:[%s3 + $0x7a0] sm:$0xff]
    %v786 = vld [vmem:[%s3 + $0x7a8] sm:$0xff]
    %v787 = vld [vmem:[%s3 + $0x7b0] sm:$0xff]
    %v788 = vld [vmem:[%s3 + $0x7b8] sm:$0xff]
    %v789 = vld [vmem:[%s3 + $0x7c0] sm:$0xff]
    %v790 = vld [vmem:[%s3 + $0x7c8] sm:$0xff]
    %v791 = vld [vmem:[%s3 + $0x7d0] sm:$0xff]
    %v792 = vld [vmem:[%s3 + $0x7d8] sm:$0xff]
    %v793 = vld [vmem:[%s3 + $0x7e0] sm:$0xff]
    %v794 = vld [vmem:[%s3 + $0x7e8] sm:$0xff]
    %v795 = vld [vmem:[%s3 + $0x7f0] sm:$0xff]
    %v796 = vld [vmem:[%s3 + $0x7f8] sm:$0xff]
    %v797 = vld [vmem:[%s4] sm:$0xff]
    %v798 = vld [vmem:[%s4 + $0x8] sm:$0xff]
    %v801 = vlaneseq
    %v802 = vshrl.u32 %v801, 7
    %v803 = vsub.s32 0, %v802
    %v804 = vrot.slane %v797, %v803
    %v805 = vlaneseq
    %v806 = vshrl.u32 %v805, 7
    %v807 = vsub.s32 1, %v806
    %v808 = vrot.slane %v797, %v807
    %v809 = vlaneseq
    %v810 = vshrl.u32 %v809, 7
    %v811 = vsub.s32 2, %v810
    %v812 = vrot.slane %v797, %v811
    %v813 = vlaneseq
    %v814 = vshrl.u32 %v813, 7
    %v815 = vsub.s32 3, %v814
    %v816 = vrot.slane %v797, %v815
    %v817 = vlaneseq
    %v818 = vshrl.u32 %v817, 7
    %v819 = vsub.s32 4, %v818
    %v820 = vrot.slane %v797, %v819
    %v821 = vlaneseq
    %v822 = vshrl.u32 %v821, 7
    %v823 = vsub.s32 5, %v822
    %v824 = vrot.slane %v797, %v823
    %v825 = vlaneseq
    %v826 = vshrl.u32 %v825, 7
    %v827 = vsub.s32 6, %v826
    %v828 = vrot.slane %v797, %v827
    %v829 = vlaneseq
    %v830 = vshrl.u32 %v829, 7
    %v831 = vsub.s32 7, %v830
    %v832 = vrot.slane %v797, %v831
    %v833 = vlaneseq
    %v834 = vshrl.u32 %v833, 7
    %v835 = vsub.s32 0, %v834
    %v836 = vrot.slane %v798, %v835
    %v837 = vlaneseq
    %v838 = vshrl.u32 %v837, 7
    %v839 = vsub.s32 1, %v838
    %v840 = vrot.slane %v798, %v839
    %v841 = vlaneseq
    %v842 = vshrl.u32 %v841, 7
    %v843 = vsub.s32 2, %v842
    %v844 = vrot.slane %v798, %v843
    %v845 = vlaneseq
    %v846 = vshrl.u32 %v845, 7
    %v847 = vsub.s32 3, %v846
    %v848 = vrot.slane %v798, %v847
    %v849 = vlaneseq
    %v850 = vshrl.u32 %v849, 7
    %v851 = vsub.s32 4, %v850
    %v852 = vrot.slane %v798, %v851
    %v853 = vlaneseq
    %v854 = vshrl.u32 %v853, 7
    %v855 = vsub.s32 5, %v854
    %v856 = vrot.slane %v798, %v855
    %v857 = vlaneseq
    %v858 = vshrl.u32 %v857, 7
    %v859 = vsub.s32 6, %v858
    %v860 = vrot.slane %v798, %v859
    %v861 = vlaneseq
    %v862 = vshrl.u32 %v861, 7
    %v863 = vsub.s32 7, %v862
    %v864 = vrot.slane %v798, %v863
    %v1137 = vunpack.c.l.b16 %v541
    %v1138 = vunpack.c.h.b16 %v541
    %v1139 = vunpack.c.l.b16 %v542
    %v1140 = vunpack.c.h.b16 %v542
    %v1141 = vunpack.c.l.b16 %v543
    %v1142 = vunpack.c.h.b16 %v543
    %v1143 = vunpack.c.l.b16 %v544
    %v1144 = vunpack.c.h.b16 %v544
    %v1145 = vunpack.c.l.b16 %v545
    %v1146 = vunpack.c.h.b16 %v545
    %v1147 = vunpack.c.l.b16 %v546
    %v1148 = vunpack.c.h.b16 %v546
    %v1149 = vunpack.c.l.b16 %v547
    %v1150 = vunpack.c.h.b16 %v547
    %v1151 = vunpack.c.l.b16 %v548
    %v1152 = vunpack.c.h.b16 %v548
    %v1153 = vunpack.c.l.b16 %v549
    %v1154 = vunpack.c.h.b16 %v549
    %v1155 = vunpack.c.l.b16 %v550
    %v1156 = vunpack.c.h.b16 %v550
    %v1157 = vunpack.c.l.b16 %v551
    %v1158 = vunpack.c.h.b16 %v551
    %v1159 = vunpack.c.l.b16 %v552
    %v1160 = vunpack.c.h.b16 %v552
    %v1161 = vunpack.c.l.b16 %v553
    %v1162 = vunpack.c.h.b16 %v553
    %v1163 = vunpack.c.l.b16 %v554
    %v1164 = vunpack.c.h.b16 %v554
    %v1165 = vunpack.c.l.b16 %v555
    %v1166 = vunpack.c.h.b16 %v555
    %v1167 = vunpack.c.l.b16 %v556
    %v1168 = vunpack.c.h.b16 %v556
    %v1169 = vunpack.c.l.b16 %v557
    %v1170 = vunpack.c.h.b16 %v557
    %v1171 = vunpack.c.l.b16 %v558
    %v1172 = vunpack.c.h.b16 %v558
    %v1173 = vunpack.c.l.b16 %v559
    %v1174 = vunpack.c.h.b16 %v559
    %v1175 = vunpack.c.l.b16 %v560
    %v1176 = vunpack.c.h.b16 %v560
    %v1177 = vunpack.c.l.b16 %v561
    %v1178 = vunpack.c.h.b16 %v561
    %v1179 = vunpack.c.l.b16 %v562
    %v1180 = vunpack.c.h.b16 %v562
    %v1181 = vunpack.c.l.b16 %v563
    %v1182 = vunpack.c.h.b16 %v563
    %v1183 = vunpack.c.l.b16 %v564
    %v1184 = vunpack.c.h.b16 %v564
    %v1185 = vunpack.c.l.b16 %v565
    %v1186 = vunpack.c.h.b16 %v565
    %v1187 = vunpack.c.l.b16 %v566
    %v1188 = vunpack.c.h.b16 %v566
    %v1189 = vunpack.c.l.b16 %v567
    %v1190 = vunpack.c.h.b16 %v567
    %v1191 = vunpack.c.l.b16 %v568
    %v1192 = vunpack.c.h.b16 %v568
    %v1193 = vunpack.c.l.b16 %v569
    %v1194 = vunpack.c.h.b16 %v569
    %v1195 = vunpack.c.l.b16 %v570
    %v1196 = vunpack.c.h.b16 %v570
    %v1197 = vunpack.c.l.b16 %v571
    %v1198 = vunpack.c.h.b16 %v571
    %v1199 = vunpack.c.l.b16 %v572
    %v1200 = vunpack.c.h.b16 %v572
    %v1201 = vunpack.c.l.b16 %v573
    %v1202 = vunpack.c.h.b16 %v573
    %v1203 = vunpack.c.l.b16 %v574
    %v1204 = vunpack.c.h.b16 %v574
    %v1205 = vunpack.c.l.b16 %v575
    %v1206 = vunpack.c.h.b16 %v575
    %v1207 = vunpack.c.l.b16 %v576
    %v1208 = vunpack.c.h.b16 %v576
    %v1209 = vunpack.c.l.b16 %v577
    %v1210 = vunpack.c.h.b16 %v577
    %v1211 = vunpack.c.l.b16 %v578
    %v1212 = vunpack.c.h.b16 %v578
    %v1213 = vunpack.c.l.b16 %v579
    %v1214 = vunpack.c.h.b16 %v579
    %v1215 = vunpack.c.l.b16 %v580
    %v1216 = vunpack.c.h.b16 %v580
    %v1217 = vunpack.c.l.b16 %v581
    %v1218 = vunpack.c.h.b16 %v581
    %v1219 = vunpack.c.l.b16 %v582
    %v1220 = vunpack.c.h.b16 %v582
    %v1221 = vunpack.c.l.b16 %v583
    %v1222 = vunpack.c.h.b16 %v583
    %v1223 = vunpack.c.l.b16 %v584
    %v1224 = vunpack.c.h.b16 %v584
    %v1225 = vunpack.c.l.b16 %v585
    %v1226 = vunpack.c.h.b16 %v585
    %v1227 = vunpack.c.l.b16 %v586
    %v1228 = vunpack.c.h.b16 %v586
    %v1229 = vunpack.c.l.b16 %v587
    %v1230 = vunpack.c.h.b16 %v587
    %v1231 = vunpack.c.l.b16 %v588
    %v1232 = vunpack.c.h.b16 %v588
    %v1233 = vunpack.c.l.b16 %v589
    %v1234 = vunpack.c.h.b16 %v589
    %v1235 = vunpack.c.l.b16 %v590
    %v1236 = vunpack.c.h.b16 %v590
    %v1237 = vunpack.c.l.b16 %v591
    %v1238 = vunpack.c.h.b16 %v591
    %v1239 = vunpack.c.l.b16 %v592
    %v1240 = vunpack.c.h.b16 %v592
    %v1241 = vunpack.c.l.b16 %v593
    %v1242 = vunpack.c.h.b16 %v593
    %v1243 = vunpack.c.l.b16 %v594
    %v1244 = vunpack.c.h.b16 %v594
    %v1245 = vunpack.c.l.b16 %v595
    %v1246 = vunpack.c.h.b16 %v595
    %v1247 = vunpack.c.l.b16 %v596
    %v1248 = vunpack.c.h.b16 %v596
    %v1249 = vunpack.c.l.b16 %v597
    %v1250 = vunpack.c.h.b16 %v597
    %v1251 = vunpack.c.l.b16 %v598
    %v1252 = vunpack.c.h.b16 %v598
    %v1253 = vunpack.c.l.b16 %v599
    %v1254 = vunpack.c.h.b16 %v599
    %v1255 = vunpack.c.l.b16 %v600
    %v1256 = vunpack.c.h.b16 %v600
    %v1257 = vunpack.c.l.b16 %v601
    %v1258 = vunpack.c.h.b16 %v601
    %v1259 = vunpack.c.l.b16 %v602
    %v1260 = vunpack.c.h.b16 %v602
    %v1261 = vunpack.c.l.b16 %v603
    %v1262 = vunpack.c.h.b16 %v603
    %v1263 = vunpack.c.l.b16 %v604
    %v1264 = vunpack.c.h.b16 %v604
    %v1265 = vunpack.c.l.b16 %v605
    %v1266 = vunpack.c.h.b16 %v605
    %v1267 = vunpack.c.l.b16 %v606
    %v1268 = vunpack.c.h.b16 %v606
    %v1269 = vunpack.c.l.b16 %v607
    %v1270 = vunpack.c.h.b16 %v607
    %v1271 = vunpack.c.l.b16 %v608
    %v1272 = vunpack.c.h.b16 %v608
    %v1273 = vunpack.c.l.b16 %v609
    %v1274 = vunpack.c.h.b16 %v609
    %v1275 = vunpack.c.l.b16 %v610
    %v1276 = vunpack.c.h.b16 %v610
    %v1277 = vunpack.c.l.b16 %v611
    %v1278 = vunpack.c.h.b16 %v611
    %v1279 = vunpack.c.l.b16 %v612
    %v1280 = vunpack.c.h.b16 %v612
    %v1281 = vunpack.c.l.b16 %v613
    %v1282 = vunpack.c.h.b16 %v613
    %v1283 = vunpack.c.l.b16 %v614
    %v1284 = vunpack.c.h.b16 %v614
    %v1285 = vunpack.c.l.b16 %v615
    %v1286 = vunpack.c.h.b16 %v615
    %v1287 = vunpack.c.l.b16 %v616
    %v1288 = vunpack.c.h.b16 %v616
    %v1289 = vunpack.c.l.b16 %v617
    %v1290 = vunpack.c.h.b16 %v617
    %v1291 = vunpack.c.l.b16 %v618
    %v1292 = vunpack.c.h.b16 %v618
    %v1293 = vunpack.c.l.b16 %v619
    %v1294 = vunpack.c.h.b16 %v619
    %v1295 = vunpack.c.l.b16 %v620
    %v1296 = vunpack.c.h.b16 %v620
    %v1297 = vunpack.c.l.b16 %v621
    %v1298 = vunpack.c.h.b16 %v621
    %v1299 = vunpack.c.l.b16 %v622
    %v1300 = vunpack.c.h.b16 %v622
    %v1301 = vunpack.c.l.b16 %v623
    %v1302 = vunpack.c.h.b16 %v623
    %v1303 = vunpack.c.l.b16 %v624
    %v1304 = vunpack.c.h.b16 %v624
    %v1305 = vunpack.c.l.b16 %v625
    %v1306 = vunpack.c.h.b16 %v625
    %v1307 = vunpack.c.l.b16 %v626
    %v1308 = vunpack.c.h.b16 %v626
    %v1309 = vunpack.c.l.b16 %v627
    %v1310 = vunpack.c.h.b16 %v627
    %v1311 = vunpack.c.l.b16 %v628
    %v1312 = vunpack.c.h.b16 %v628
    %v1313 = vunpack.c.l.b16 %v629
    %v1314 = vunpack.c.h.b16 %v629
    %v1315 = vunpack.c.l.b16 %v630
    %v1316 = vunpack.c.h.b16 %v630
    %v1317 = vunpack.c.l.b16 %v631
    %v1318 = vunpack.c.h.b16 %v631
    %v1319 = vunpack.c.l.b16 %v632
    %v1320 = vunpack.c.h.b16 %v632
    %v1321 = vunpack.c.l.b16 %v633
    %v1322 = vunpack.c.h.b16 %v633
    %v1323 = vunpack.c.l.b16 %v634
    %v1324 = vunpack.c.h.b16 %v634
    %v1325 = vunpack.c.l.b16 %v635
    %v1326 = vunpack.c.h.b16 %v635
    %v1327 = vunpack.c.l.b16 %v636
    %v1328 = vunpack.c.h.b16 %v636
    %v1329 = vunpack.c.l.b16 %v637
    %v1330 = vunpack.c.h.b16 %v637
    %v1331 = vunpack.c.l.b16 %v638
    %v1332 = vunpack.c.h.b16 %v638
    %v1333 = vunpack.c.l.b16 %v639
    %v1334 = vunpack.c.h.b16 %v639
    %v1335 = vunpack.c.l.b16 %v640
    %v1336 = vunpack.c.h.b16 %v640
    %v1337 = vunpack.c.l.b16 %v641
    %v1338 = vunpack.c.h.b16 %v641
    %v1339 = vunpack.c.l.b16 %v642
    %v1340 = vunpack.c.h.b16 %v642
    %v1341 = vunpack.c.l.b16 %v643
    %v1342 = vunpack.c.h.b16 %v643
    %v1343 = vunpack.c.l.b16 %v644
    %v1344 = vunpack.c.h.b16 %v644
    %v1345 = vunpack.c.l.b16 %v645
    %v1346 = vunpack.c.h.b16 %v645
    %v1347 = vunpack.c.l.b16 %v646
    %v1348 = vunpack.c.h.b16 %v646
    %v1349 = vunpack.c.l.b16 %v647
    %v1350 = vunpack.c.h.b16 %v647
    %v1351 = vunpack.c.l.b16 %v648
    %v1352 = vunpack.c.h.b16 %v648
    %v1353 = vunpack.c.l.b16 %v649
    %v1354 = vunpack.c.h.b16 %v649
    %v1355 = vunpack.c.l.b16 %v650
    %v1356 = vunpack.c.h.b16 %v650
    %v1357 = vunpack.c.l.b16 %v651
    %v1358 = vunpack.c.h.b16 %v651
    %v1359 = vunpack.c.l.b16 %v652
    %v1360 = vunpack.c.h.b16 %v652
    %v1361 = vunpack.c.l.b16 %v653
    %v1362 = vunpack.c.h.b16 %v653
    %v1363 = vunpack.c.l.b16 %v654
    %v1364 = vunpack.c.h.b16 %v654
    %v1365 = vunpack.c.l.b16 %v655
    %v1366 = vunpack.c.h.b16 %v655
    %v1367 = vunpack.c.l.b16 %v656
    %v1368 = vunpack.c.h.b16 %v656
    %v1369 = vunpack.c.l.b16 %v657
    %v1370 = vunpack.c.h.b16 %v657
    %v1371 = vunpack.c.l.b16 %v658
    %v1372 = vunpack.c.h.b16 %v658
    %v1373 = vunpack.c.l.b16 %v659
    %v1374 = vunpack.c.h.b16 %v659
    %v1375 = vunpack.c.l.b16 %v660
    %v1376 = vunpack.c.h.b16 %v660
    %v1377 = vunpack.c.l.b16 %v661
    %v1378 = vunpack.c.h.b16 %v661
    %v1379 = vunpack.c.l.b16 %v662
    %v1380 = vunpack.c.h.b16 %v662
    %v1381 = vunpack.c.l.b16 %v663
    %v1382 = vunpack.c.h.b16 %v663
    %v1383 = vunpack.c.l.b16 %v664
    %v1384 = vunpack.c.h.b16 %v664
    %v1385 = vunpack.c.l.b16 %v665
    %v1386 = vunpack.c.h.b16 %v665
    %v1387 = vunpack.c.l.b16 %v666
    %v1388 = vunpack.c.h.b16 %v666
    %v1389 = vunpack.c.l.b16 %v667
    %v1390 = vunpack.c.h.b16 %v667
    %v1391 = vunpack.c.l.b16 %v668
    %v1392 = vunpack.c.h.b16 %v668
    %v1393 = vunpack.c.l.b16 %v669
    %v1394 = vunpack.c.h.b16 %v669
    %v1395 = vunpack.c.l.b16 %v670
    %v1396 = vunpack.c.h.b16 %v670
    %v1397 = vunpack.c.l.b16 %v671
    %v1398 = vunpack.c.h.b16 %v671
    %v1399 = vunpack.c.l.b16 %v672
    %v1400 = vunpack.c.h.b16 %v672
    %v1401 = vunpack.c.l.b16 %v673
    %v1402 = vunpack.c.h.b16 %v673
    %v1403 = vunpack.c.l.b16 %v674
    %v1404 = vunpack.c.h.b16 %v674
    %v1405 = vunpack.c.l.b16 %v675
    %v1406 = vunpack.c.h.b16 %v675
    %v1407 = vunpack.c.l.b16 %v676
    %v1408 = vunpack.c.h.b16 %v676
    %v1409 = vunpack.c.l.b16 %v677
    %v1410 = vunpack.c.h.b16 %v677
    %v1411 = vunpack.c.l.b16 %v678
    %v1412 = vunpack.c.h.b16 %v678
    %v1413 = vunpack.c.l.b16 %v679
    %v1414 = vunpack.c.h.b16 %v679
    %v1415 = vunpack.c.l.b16 %v680
    %v1416 = vunpack.c.h.b16 %v680
    %v1417 = vunpack.c.l.b16 %v681
    %v1418 = vunpack.c.h.b16 %v681
    %v1419 = vunpack.c.l.b16 %v682
    %v1420 = vunpack.c.h.b16 %v682
    %v1421 = vunpack.c.l.b16 %v683
    %v1422 = vunpack.c.h.b16 %v683
    %v1423 = vunpack.c.l.b16 %v684
    %v1424 = vunpack.c.h.b16 %v684
    %v1425 = vunpack.c.l.b16 %v685
    %v1426 = vunpack.c.h.b16 %v685
    %v1427 = vunpack.c.l.b16 %v686
    %v1428 = vunpack.c.h.b16 %v686
    %v1429 = vunpack.c.l.b16 %v687
    %v1430 = vunpack.c.h.b16 %v687
    %v1431 = vunpack.c.l.b16 %v688
    %v1432 = vunpack.c.h.b16 %v688
    %v1433 = vunpack.c.l.b16 %v689
    %v1434 = vunpack.c.h.b16 %v689
    %v1435 = vunpack.c.l.b16 %v690
    %v1436 = vunpack.c.h.b16 %v690
    %v1437 = vunpack.c.l.b16 %v691
    %v1438 = vunpack.c.h.b16 %v691
    %v1439 = vunpack.c.l.b16 %v692
    %v1440 = vunpack.c.h.b16 %v692
    %v1441 = vunpack.c.l.b16 %v693
    %v1442 = vunpack.c.h.b16 %v693
    %v1443 = vunpack.c.l.b16 %v694
    %v1444 = vunpack.c.h.b16 %v694
    %v1445 = vunpack.c.l.b16 %v695
    %v1446 = vunpack.c.h.b16 %v695
    %v1447 = vunpack.c.l.b16 %v696
    %v1448 = vunpack.c.h.b16 %v696
    %v1449 = vunpack.c.l.b16 %v697
    %v1450 = vunpack.c.h.b16 %v697
    %v1451 = vunpack.c.l.b16 %v698
    %v1452 = vunpack.c.h.b16 %v698
    %v1453 = vunpack.c.l.b16 %v699
    %v1454 = vunpack.c.h.b16 %v699
    %v1455 = vunpack.c.l.b16 %v700
    %v1456 = vunpack.c.h.b16 %v700
    %v1457 = vunpack.c.l.b16 %v701
    %v1458 = vunpack.c.h.b16 %v701
    %v1459 = vunpack.c.l.b16 %v702
    %v1460 = vunpack.c.h.b16 %v702
    %v1461 = vunpack.c.l.b16 %v703
    %v1462 = vunpack.c.h.b16 %v703
    %v1463 = vunpack.c.l.b16 %v704
    %v1464 = vunpack.c.h.b16 %v704
    %v1465 = vunpack.c.l.b16 %v705
    %v1466 = vunpack.c.h.b16 %v705
    %v1467 = vunpack.c.l.b16 %v706
    %v1468 = vunpack.c.h.b16 %v706
    %v1469 = vunpack.c.l.b16 %v707
    %v1470 = vunpack.c.h.b16 %v707
    %v1471 = vunpack.c.l.b16 %v708
    %v1472 = vunpack.c.h.b16 %v708
    %v1473 = vunpack.c.l.b16 %v709
    %v1474 = vunpack.c.h.b16 %v709
    %v1475 = vunpack.c.l.b16 %v710
    %v1476 = vunpack.c.h.b16 %v710
    %v1477 = vunpack.c.l.b16 %v711
    %v1478 = vunpack.c.h.b16 %v711
    %v1479 = vunpack.c.l.b16 %v712
    %v1480 = vunpack.c.h.b16 %v712
    %v1481 = vunpack.c.l.b16 %v713
    %v1482 = vunpack.c.h.b16 %v713
    %v1483 = vunpack.c.l.b16 %v714
    %v1484 = vunpack.c.h.b16 %v714
    %v1485 = vunpack.c.l.b16 %v715
    %v1486 = vunpack.c.h.b16 %v715
    %v1487 = vunpack.c.l.b16 %v716
    %v1488 = vunpack.c.h.b16 %v716
    %v1489 = vunpack.c.l.b16 %v717
    %v1490 = vunpack.c.h.b16 %v717
    %v1491 = vunpack.c.l.b16 %v718
    %v1492 = vunpack.c.h.b16 %v718
    %v1493 = vunpack.c.l.b16 %v719
    %v1494 = vunpack.c.h.b16 %v719
    %v1495 = vunpack.c.l.b16 %v720
    %v1496 = vunpack.c.h.b16 %v720
    %v1497 = vunpack.c.l.b16 %v721
    %v1498 = vunpack.c.h.b16 %v721
    %v1499 = vunpack.c.l.b16 %v722
    %v1500 = vunpack.c.h.b16 %v722
    %v1501 = vunpack.c.l.b16 %v723
    %v1502 = vunpack.c.h.b16 %v723
    %v1503 = vunpack.c.l.b16 %v724
    %v1504 = vunpack.c.h.b16 %v724
    %v1505 = vunpack.c.l.b16 %v725
    %v1506 = vunpack.c.h.b16 %v725
    %v1507 = vunpack.c.l.b16 %v726
    %v1508 = vunpack.c.h.b16 %v726
    %v1509 = vunpack.c.l.b16 %v727
    %v1510 = vunpack.c.h.b16 %v727
    %v1511 = vunpack.c.l.b16 %v728
    %v1512 = vunpack.c.h.b16 %v728
    %v1513 = vunpack.c.l.b16 %v729
    %v1514 = vunpack.c.h.b16 %v729
    %v1515 = vunpack.c.l.b16 %v730
    %v1516 = vunpack.c.h.b16 %v730
    %v1517 = vunpack.c.l.b16 %v731
    %v1518 = vunpack.c.h.b16 %v731
    %v1519 = vunpack.c.l.b16 %v732
    %v1520 = vunpack.c.h.b16 %v732
    %v1521 = vunpack.c.l.b16 %v733
    %v1522 = vunpack.c.h.b16 %v733
    %v1523 = vunpack.c.l.b16 %v734
    %v1524 = vunpack.c.h.b16 %v734
    %v1525 = vunpack.c.l.b16 %v735
    %v1526 = vunpack.c.h.b16 %v735
    %v1527 = vunpack.c.l.b16 %v736
    %v1528 = vunpack.c.h.b16 %v736
    %v1529 = vunpack.c.l.b16 %v737
    %v1530 = vunpack.c.h.b16 %v737
    %v1531 = vunpack.c.l.b16 %v738
    %v1532 = vunpack.c.h.b16 %v738
    %v1533 = vunpack.c.l.b16 %v739
    %v1534 = vunpack.c.h.b16 %v739
    %v1535 = vunpack.c.l.b16 %v740
    %v1536 = vunpack.c.h.b16 %v740
    %v1537 = vunpack.c.l.b16 %v741
    %v1538 = vunpack.c.h.b16 %v741
    %v1539 = vunpack.c.l.b16 %v742
    %v1540 = vunpack.c.h.b16 %v742
    %v1541 = vunpack.c.l.b16 %v743
    %v1542 = vunpack.c.h.b16 %v743
    %v1543 = vunpack.c.l.b16 %v744
    %v1544 = vunpack.c.h.b16 %v744
    %v1545 = vunpack.c.l.b16 %v745
    %v1546 = vunpack.c.h.b16 %v745
    %v1547 = vunpack.c.l.b16 %v746
    %v1548 = vunpack.c.h.b16 %v746
    %v1549 = vunpack.c.l.b16 %v747
    %v1550 = vunpack.c.h.b16 %v747
    %v1551 = vunpack.c.l.b16 %v748
    %v1552 = vunpack.c.h.b16 %v748
    %v1553 = vunpack.c.l.b16 %v749
    %v1554 = vunpack.c.h.b16 %v749
    %v1555 = vunpack.c.l.b16 %v750
    %v1556 = vunpack.c.h.b16 %v750
    %v1557 = vunpack.c.l.b16 %v751
    %v1558 = vunpack.c.h.b16 %v751
    %v1559 = vunpack.c.l.b16 %v752
    %v1560 = vunpack.c.h.b16 %v752
    %v1561 = vunpack.c.l.b16 %v753
    %v1562 = vunpack.c.h.b16 %v753
    %v1563 = vunpack.c.l.b16 %v754
    %v1564 = vunpack.c.h.b16 %v754
    %v1565 = vunpack.c.l.b16 %v755
    %v1566 = vunpack.c.h.b16 %v755
    %v1567 = vunpack.c.l.b16 %v756
    %v1568 = vunpack.c.h.b16 %v756
    %v1569 = vunpack.c.l.b16 %v757
    %v1570 = vunpack.c.h.b16 %v757
    %v1571 = vunpack.c.l.b16 %v758
    %v1572 = vunpack.c.h.b16 %v758
    %v1573 = vunpack.c.l.b16 %v759
    %v1574 = vunpack.c.h.b16 %v759
    %v1575 = vunpack.c.l.b16 %v760
    %v1576 = vunpack.c.h.b16 %v760
    %v1577 = vunpack.c.l.b16 %v761
    %v1578 = vunpack.c.h.b16 %v761
    %v1579 = vunpack.c.l.b16 %v762
    %v1580 = vunpack.c.h.b16 %v762
    %v1581 = vunpack.c.l.b16 %v763
    %v1582 = vunpack.c.h.b16 %v763
    %v1583 = vunpack.c.l.b16 %v764
    %v1584 = vunpack.c.h.b16 %v764
    %v1585 = vunpack.c.l.b16 %v765
    %v1586 = vunpack.c.h.b16 %v765
    %v1587 = vunpack.c.l.b16 %v766
    %v1588 = vunpack.c.h.b16 %v766
    %v1589 = vunpack.c.l.b16 %v767
    %v1590 = vunpack.c.h.b16 %v767
    %v1591 = vunpack.c.l.b16 %v768
    %v1592 = vunpack.c.h.b16 %v768
    %v1593 = vunpack.c.l.b16 %v769
    %v1594 = vunpack.c.h.b16 %v769
    %v1595 = vunpack.c.l.b16 %v770
    %v1596 = vunpack.c.h.b16 %v770
    %v1597 = vunpack.c.l.b16 %v771
    %v1598 = vunpack.c.h.b16 %v771
    %v1599 = vunpack.c.l.b16 %v772
    %v1600 = vunpack.c.h.b16 %v772
    %v1601 = vunpack.c.l.b16 %v773
    %v1602 = vunpack.c.h.b16 %v773
    %v1603 = vunpack.c.l.b16 %v774
    %v1604 = vunpack.c.h.b16 %v774
    %v1605 = vunpack.c.l.b16 %v775
    %v1606 = vunpack.c.h.b16 %v775
    %v1607 = vunpack.c.l.b16 %v776
    %v1608 = vunpack.c.h.b16 %v776
    %v1609 = vunpack.c.l.b16 %v777
    %v1610 = vunpack.c.h.b16 %v777
    %v1611 = vunpack.c.l.b16 %v778
    %v1612 = vunpack.c.h.b16 %v778
    %v1613 = vunpack.c.l.b16 %v779
    %v1614 = vunpack.c.h.b16 %v779
    %v1615 = vunpack.c.l.b16 %v780
    %v1616 = vunpack.c.h.b16 %v780
    %v1617 = vunpack.c.l.b16 %v781
    %v1618 = vunpack.c.h.b16 %v781
    %v1619 = vunpack.c.l.b16 %v782
    %v1620 = vunpack.c.h.b16 %v782
    %v1621 = vunpack.c.l.b16 %v783
    %v1622 = vunpack.c.h.b16 %v783
    %v1623 = vunpack.c.l.b16 %v784
    %v1624 = vunpack.c.h.b16 %v784
    %v1625 = vunpack.c.l.b16 %v785
    %v1626 = vunpack.c.h.b16 %v785
    %v1627 = vunpack.c.l.b16 %v786
    %v1628 = vunpack.c.h.b16 %v786
    %v1629 = vunpack.c.l.b16 %v787
    %v1630 = vunpack.c.h.b16 %v787
    %v1631 = vunpack.c.l.b16 %v788
    %v1632 = vunpack.c.h.b16 %v788
    %v1633 = vunpack.c.l.b16 %v789
    %v1634 = vunpack.c.h.b16 %v789
    %v1635 = vunpack.c.l.b16 %v790
    %v1636 = vunpack.c.h.b16 %v790
    %v1637 = vunpack.c.l.b16 %v791
    %v1638 = vunpack.c.h.b16 %v791
    %v1639 = vunpack.c.l.b16 %v792
    %v1640 = vunpack.c.h.b16 %v792
    %v1641 = vunpack.c.l.b16 %v793
    %v1642 = vunpack.c.h.b16 %v793
    %v1643 = vunpack.c.l.b16 %v794
    %v1644 = vunpack.c.h.b16 %v794
    %v1645 = vunpack.c.l.b16 %v795
    %v1646 = vunpack.c.h.b16 %v795
    %v1647 = vunpack.c.l.b16 %v796
    %v1648 = vunpack.c.h.b16 %v796
    %v1649 = vpack.c.b16 %v1153, %v1137
    %v1650 = vpack.c.b16 %v1154, %v1138
    %v1651 = vpack.c.b16 %v1155, %v1139
    %v1652 = vpack.c.b16 %v1156, %v1140
    %v1653 = vpack.c.b16 %v1157, %v1141
    %v1654 = vpack.c.b16 %v1158, %v1142
    %v1655 = vpack.c.b16 %v1159, %v1143
    %v1656 = vpack.c.b16 %v1160, %v1144
    %v1657 = vpack.c.b16 %v1161, %v1145
    %v1658 = vpack.c.b16 %v1162, %v1146
    %v1659 = vpack.c.b16 %v1163, %v1147
    %v1660 = vpack.c.b16 %v1164, %v1148
    %v1661 = vpack.c.b16 %v1165, %v1149
    %v1662 = vpack.c.b16 %v1166, %v1150
    %v1663 = vpack.c.b16 %v1167, %v1151
    %v1664 = vpack.c.b16 %v1168, %v1152
    %v1665 = vpack.c.b16 %v1185, %v1169
    %v1666 = vpack.c.b16 %v1186, %v1170
    %v1667 = vpack.c.b16 %v1187, %v1171
    %v1668 = vpack.c.b16 %v1188, %v1172
    %v1669 = vpack.c.b16 %v1189, %v1173
    %v1670 = vpack.c.b16 %v1190, %v1174
    %v1671 = vpack.c.b16 %v1191, %v1175
    %v1672 = vpack.c.b16 %v1192, %v1176
    %v1673 = vpack.c.b16 %v1193, %v1177
    %v1674 = vpack.c.b16 %v1194, %v1178
    %v1675 = vpack.c.b16 %v1195, %v1179
    %v1676 = vpack.c.b16 %v1196, %v1180
    %v1677 = vpack.c.b16 %v1197, %v1181
    %v1678 = vpack.c.b16 %v1198, %v1182
    %v1679 = vpack.c.b16 %v1199, %v1183
    %v1680 = vpack.c.b16 %v1200, %v1184
    %v1681 = vpack.c.b16 %v1217, %v1201
    %v1682 = vpack.c.b16 %v1218, %v1202
    %v1683 = vpack.c.b16 %v1219, %v1203
    %v1684 = vpack.c.b16 %v1220, %v1204
    %v1685 = vpack.c.b16 %v1221, %v1205
    %v1686 = vpack.c.b16 %v1222, %v1206
    %v1687 = vpack.c.b16 %v1223, %v1207
    %v1688 = vpack.c.b16 %v1224, %v1208
    %v1689 = vpack.c.b16 %v1225, %v1209
    %v1690 = vpack.c.b16 %v1226, %v1210
    %v1691 = vpack.c.b16 %v1227, %v1211
    %v1692 = vpack.c.b16 %v1228, %v1212
    %v1693 = vpack.c.b16 %v1229, %v1213
    %v1694 = vpack.c.b16 %v1230, %v1214
    %v1695 = vpack.c.b16 %v1231, %v1215
    %v1696 = vpack.c.b16 %v1232, %v1216
    %v1697 = vpack.c.b16 %v1249, %v1233
    %v1698 = vpack.c.b16 %v1250, %v1234
    %v1699 = vpack.c.b16 %v1251, %v1235
    %v1700 = vpack.c.b16 %v1252, %v1236
    %v1701 = vpack.c.b16 %v1253, %v1237
    %v1702 = vpack.c.b16 %v1254, %v1238
    %v1703 = vpack.c.b16 %v1255, %v1239
    %v1704 = vpack.c.b16 %v1256, %v1240
    %v1705 = vpack.c.b16 %v1257, %v1241
    %v1706 = vpack.c.b16 %v1258, %v1242
    %v1707 = vpack.c.b16 %v1259, %v1243
    %v1708 = vpack.c.b16 %v1260, %v1244
    %v1709 = vpack.c.b16 %v1261, %v1245
    %v1710 = vpack.c.b16 %v1262, %v1246
    %v1711 = vpack.c.b16 %v1263, %v1247
    %v1712 = vpack.c.b16 %v1264, %v1248
    %v1713 = vpack.c.b16 %v1281, %v1265
    %v1714 = vpack.c.b16 %v1282, %v1266
    %v1715 = vpack.c.b16 %v1283, %v1267
    %v1716 = vpack.c.b16 %v1284, %v1268
    %v1717 = vpack.c.b16 %v1285, %v1269
    %v1718 = vpack.c.b16 %v1286, %v1270
    %v1719 = vpack.c.b16 %v1287, %v1271
    %v1720 = vpack.c.b16 %v1288, %v1272
    %v1721 = vpack.c.b16 %v1289, %v1273
    %v1722 = vpack.c.b16 %v1290, %v1274
    %v1723 = vpack.c.b16 %v1291, %v1275
    %v1724 = vpack.c.b16 %v1292, %v1276
    %v1725 = vpack.c.b16 %v1293, %v1277
    %v1726 = vpack.c.b16 %v1294, %v1278
    %v1727 = vpack.c.b16 %v1295, %v1279
    %v1728 = vpack.c.b16 %v1296, %v1280
    %v1729 = vpack.c.b16 %v1313, %v1297
    %v1730 = vpack.c.b16 %v1314, %v1298
    %v1731 = vpack.c.b16 %v1315, %v1299
    %v1732 = vpack.c.b16 %v1316, %v1300
    %v1733 = vpack.c.b16 %v1317, %v1301
    %v1734 = vpack.c.b16 %v1318, %v1302
    %v1735 = vpack.c.b16 %v1319, %v1303
    %v1736 = vpack.c.b16 %v1320, %v1304
    %v1737 = vpack.c.b16 %v1321, %v1305
    %v1738 = vpack.c.b16 %v1322, %v1306
    %v1739 = vpack.c.b16 %v1323, %v1307
    %v1740 = vpack.c.b16 %v1324, %v1308
    %v1741 = vpack.c.b16 %v1325, %v1309
    %v1742 = vpack.c.b16 %v1326, %v1310
    %v1743 = vpack.c.b16 %v1327, %v1311
    %v1744 = vpack.c.b16 %v1328, %v1312
    %v1745 = vpack.c.b16 %v1345, %v1329
    %v1746 = vpack.c.b16 %v1346, %v1330
    %v1747 = vpack.c.b16 %v1347, %v1331
    %v1748 = vpack.c.b16 %v1348, %v1332
    %v1749 = vpack.c.b16 %v1349, %v1333
    %v1750 = vpack.c.b16 %v1350, %v1334
    %v1751 = vpack.c.b16 %v1351, %v1335
    %v1752 = vpack.c.b16 %v1352, %v1336
    %v1753 = vpack.c.b16 %v1353, %v1337
    %v1754 = vpack.c.b16 %v1354, %v1338
    %v1755 = vpack.c.b16 %v1355, %v1339
    %v1756 = vpack.c.b16 %v1356, %v1340
    %v1757 = vpack.c.b16 %v1357, %v1341
    %v1758 = vpack.c.b16 %v1358, %v1342
    %v1759 = vpack.c.b16 %v1359, %v1343
    %v1760 = vpack.c.b16 %v1360, %v1344
    %v1761 = vpack.c.b16 %v1377, %v1361
    %v1762 = vpack.c.b16 %v1378, %v1362
    %v1763 = vpack.c.b16 %v1379, %v1363
    %v1764 = vpack.c.b16 %v1380, %v1364
    %v1765 = vpack.c.b16 %v1381, %v1365
    %v1766 = vpack.c.b16 %v1382, %v1366
    %v1767 = vpack.c.b16 %v1383, %v1367
    %v1768 = vpack.c.b16 %v1384, %v1368
    %v1769 = vpack.c.b16 %v1385, %v1369
    %v1770 = vpack.c.b16 %v1386, %v1370
    %v1771 = vpack.c.b16 %v1387, %v1371
    %v1772 = vpack.c.b16 %v1388, %v1372
    %v1773 = vpack.c.b16 %v1389, %v1373
    %v1774 = vpack.c.b16 %v1390, %v1374
    %v1775 = vpack.c.b16 %v1391, %v1375
    %v1776 = vpack.c.b16 %v1392, %v1376
    %v1777 = vpack.c.b16 %v1409, %v1393
    %v1778 = vpack.c.b16 %v1410, %v1394
    %v1779 = vpack.c.b16 %v1411, %v1395
    %v1780 = vpack.c.b16 %v1412, %v1396
    %v1781 = vpack.c.b16 %v1413, %v1397
    %v1782 = vpack.c.b16 %v1414, %v1398
    %v1783 = vpack.c.b16 %v1415, %v1399
    %v1784 = vpack.c.b16 %v1416, %v1400
    %v1785 = vpack.c.b16 %v1417, %v1401
    %v1786 = vpack.c.b16 %v1418, %v1402
    %v1787 = vpack.c.b16 %v1419, %v1403
    %v1788 = vpack.c.b16 %v1420, %v1404
    %v1789 = vpack.c.b16 %v1421, %v1405
    %v1790 = vpack.c.b16 %v1422, %v1406
    %v1791 = vpack.c.b16 %v1423, %v1407
    %v1792 = vpack.c.b16 %v1424, %v1408
    %v1793 = vpack.c.b16 %v1441, %v1425
    %v1794 = vpack.c.b16 %v1442, %v1426
    %v1795 = vpack.c.b16 %v1443, %v1427
    %v1796 = vpack.c.b16 %v1444, %v1428
    %v1797 = vpack.c.b16 %v1445, %v1429
    %v1798 = vpack.c.b16 %v1446, %v1430
    %v1799 = vpack.c.b16 %v1447, %v1431
    %v1800 = vpack.c.b16 %v1448, %v1432
    %v1801 = vpack.c.b16 %v1449, %v1433
    %v1802 = vpack.c.b16 %v1450, %v1434
    %v1803 = vpack.c.b16 %v1451, %v1435
    %v1804 = vpack.c.b16 %v1452, %v1436
    %v1805 = vpack.c.b16 %v1453, %v1437
    %v1806 = vpack.c.b16 %v1454, %v1438
    %v1807 = vpack.c.b16 %v1455, %v1439
    %v1808 = vpack.c.b16 %v1456, %v1440
    %v1809 = vpack.c.b16 %v1473, %v1457
    %v1810 = vpack.c.b16 %v1474, %v1458
    %v1811 = vpack.c.b16 %v1475, %v1459
    %v1812 = vpack.c.b16 %v1476, %v1460
    %v1813 = vpack.c.b16 %v1477, %v1461
    %v1814 = vpack.c.b16 %v1478, %v1462
    %v1815 = vpack.c.b16 %v1479, %v1463
    %v1816 = vpack.c.b16 %v1480, %v1464
    %v1817 = vpack.c.b16 %v1481, %v1465
    %v1818 = vpack.c.b16 %v1482, %v1466
    %v1819 = vpack.c.b16 %v1483, %v1467
    %v1820 = vpack.c.b16 %v1484, %v1468
    %v1821 = vpack.c.b16 %v1485, %v1469
    %v1822 = vpack.c.b16 %v1486, %v1470
    %v1823 = vpack.c.b16 %v1487, %v1471
    %v1824 = vpack.c.b16 %v1488, %v1472
    %v1825 = vpack.c.b16 %v1505, %v1489
    %v1826 = vpack.c.b16 %v1506, %v1490
    %v1827 = vpack.c.b16 %v1507, %v1491
    %v1828 = vpack.c.b16 %v1508, %v1492
    %v1829 = vpack.c.b16 %v1509, %v1493
    %v1830 = vpack.c.b16 %v1510, %v1494
    %v1831 = vpack.c.b16 %v1511, %v1495
    %v1832 = vpack.c.b16 %v1512, %v1496
    %v1833 = vpack.c.b16 %v1513, %v1497
    %v1834 = vpack.c.b16 %v1514, %v1498
    %v1835 = vpack.c.b16 %v1515, %v1499
    %v1836 = vpack.c.b16 %v1516, %v1500
    %v1837 = vpack.c.b16 %v1517, %v1501
    %v1838 = vpack.c.b16 %v1518, %v1502
    %v1839 = vpack.c.b16 %v1519, %v1503
    %v1840 = vpack.c.b16 %v1520, %v1504
    %v1841 = vpack.c.b16 %v1537, %v1521
    %v1842 = vpack.c.b16 %v1538, %v1522
    %v1843 = vpack.c.b16 %v1539, %v1523
    %v1844 = vpack.c.b16 %v1540, %v1524
    %v1845 = vpack.c.b16 %v1541, %v1525
    %v1846 = vpack.c.b16 %v1542, %v1526
    %v1847 = vpack.c.b16 %v1543, %v1527
    %v1848 = vpack.c.b16 %v1544, %v1528
    %v1849 = vpack.c.b16 %v1545, %v1529
    %v1850 = vpack.c.b16 %v1546, %v1530
    %v1851 = vpack.c.b16 %v1547, %v1531
    %v1852 = vpack.c.b16 %v1548, %v1532
    %v1853 = vpack.c.b16 %v1549, %v1533
    %v1854 = vpack.c.b16 %v1550, %v1534
    %v1855 = vpack.c.b16 %v1551, %v1535
    %v1856 = vpack.c.b16 %v1552, %v1536
    %v1857 = vpack.c.b16 %v1569, %v1553
    %v1858 = vpack.c.b16 %v1570, %v1554
    %v1859 = vpack.c.b16 %v1571, %v1555
    %v1860 = vpack.c.b16 %v1572, %v1556
    %v1861 = vpack.c.b16 %v1573, %v1557
    %v1862 = vpack.c.b16 %v1574, %v1558
    %v1863 = vpack.c.b16 %v1575, %v1559
    %v1864 = vpack.c.b16 %v1576, %v1560
    %v1865 = vpack.c.b16 %v1577, %v1561
    %v1866 = vpack.c.b16 %v1578, %v1562
    %v1867 = vpack.c.b16 %v1579, %v1563
    %v1868 = vpack.c.b16 %v1580, %v1564
    %v1869 = vpack.c.b16 %v1581, %v1565
    %v1870 = vpack.c.b16 %v1582, %v1566
    %v1871 = vpack.c.b16 %v1583, %v1567
    %v1872 = vpack.c.b16 %v1584, %v1568
    %v1873 = vpack.c.b16 %v1601, %v1585
    %v1874 = vpack.c.b16 %v1602, %v1586
    %v1875 = vpack.c.b16 %v1603, %v1587
    %v1876 = vpack.c.b16 %v1604, %v1588
    %v1877 = vpack.c.b16 %v1605, %v1589
    %v1878 = vpack.c.b16 %v1606, %v1590
    %v1879 = vpack.c.b16 %v1607, %v1591
    %v1880 = vpack.c.b16 %v1608, %v1592
    %v1881 = vpack.c.b16 %v1609, %v1593
    %v1882 = vpack.c.b16 %v1610, %v1594
    %v1883 = vpack.c.b16 %v1611, %v1595
    %v1884 = vpack.c.b16 %v1612, %v1596
    %v1885 = vpack.c.b16 %v1613, %v1597
    %v1886 = vpack.c.b16 %v1614, %v1598
    %v1887 = vpack.c.b16 %v1615, %v1599
    %v1888 = vpack.c.b16 %v1616, %v1600
    %v1889 = vpack.c.b16 %v1633, %v1617
    %v1890 = vpack.c.b16 %v1634, %v1618
    %v1891 = vpack.c.b16 %v1635, %v1619
    %v1892 = vpack.c.b16 %v1636, %v1620
    %v1893 = vpack.c.b16 %v1637, %v1621
    %v1894 = vpack.c.b16 %v1638, %v1622
    %v1895 = vpack.c.b16 %v1639, %v1623
    %v1896 = vpack.c.b16 %v1640, %v1624
    %v1897 = vpack.c.b16 %v1641, %v1625
    %v1898 = vpack.c.b16 %v1642, %v1626
    %v1899 = vpack.c.b16 %v1643, %v1627
    %v1900 = vpack.c.b16 %v1644, %v1628
    %v1901 = vpack.c.b16 %v1645, %v1629
    %v1902 = vpack.c.b16 %v1646, %v1630
    %v1903 = vpack.c.b16 %v1647, %v1631
    %v1904 = vpack.c.b16 %v1648, %v1632
    %2161 = vmatprep.subr.bf16.mxu0 %v1762
    %2162 = vmatpush1.bf16.msra.mxu0 %v1761
    %2163 = vmatprep.subr.bf16.mxu0 %v1746
    %2164 = vmatpush1.bf16.msra.mxu0 %v1745
    %2165 = vmatprep.subr.bf16.mxu0 %v1730
    %2166 = vmatpush1.bf16.msra.mxu0 %v1729
    %2167 = vmatprep.subr.bf16.mxu0 %v1714
    %2168 = vmatpush1.bf16.msra.mxu0 %v1713
    %2169 = vmatprep.subr.bf16.mxu0 %v1698
    %2170 = vmatpush1.bf16.msra.mxu0 %v1697
    %2171 = vmatprep.subr.bf16.mxu0 %v1682
    %2172 = vmatpush1.bf16.msra.mxu0 %v1681
    %2173 = vmatprep.subr.bf16.mxu0 %v1666
    %2174 = vmatpush1.bf16.msra.mxu0 %v1665
    %2175 = vmatprep.subr.bf16.mxu0 %v1650
    %2176 = vmatpush1.bf16.msra.mxu0 %v1649
    %2177 = vmatprep.subr.bf16.mxu0 %v1890
    %2178 = vmatpush2.bf16.msra.mxu0 %v1889
    %2179 = vmatprep.subr.bf16.mxu0 %v1874
    %2180 = vmatpush2.bf16.msra.mxu0 %v1873
    %2181 = vmatprep.subr.bf16.mxu0 %v1858
    %2182 = vmatpush2.bf16.msra.mxu0 %v1857
    %2183 = vmatprep.subr.bf16.mxu0 %v1842
    %2184 = vmatpush2.bf16.msra.mxu0 %v1841
    %2185 = vmatprep.subr.bf16.mxu0 %v1826
    %2186 = vmatpush2.bf16.msra.mxu0 %v1825
    %2187 = vmatprep.subr.bf16.mxu0 %v1810
    %2188 = vmatpush2.bf16.msra.mxu0 %v1809
    %2189 = vmatprep.subr.bf16.mxu0 %v1794
    %2190 = vmatpush2.bf16.msra.mxu0 %v1793
    %2191 = vmatprep.subr.bf16.mxu0 %v1778
    %2192 = vmatpush2.bf16.msra.mxu0 %v1777
    %2193 = vmatprep.mubr.bf16.mxu0 %v540
    %2194 = vmatmul.mubr.bf16.gmra.mxu0 %v539
    %v2195 = vpop.f32.mrf.mxu0
    %v2196 = vadd.f32 %v804, %v2195
    %v2197 = vpop.f32.mrf.mxu0
    %v2198 = vadd.f32 %v808, %v2197
    %v2199 = vpop.f32.mrf.mxu0
    %v2200 = vpop.f32.mrf.mxu0
    %2201 = vdwg.mxu0
    %2202 = vmatprep.subr.bf16.mxu0 %v1764
    %2203 = vmatpush1.bf16.msra.mxu0 %v1763
    %2204 = vmatprep.subr.bf16.mxu0 %v1748
    %2205 = vmatpush1.bf16.msra.mxu0 %v1747
    %2206 = vmatprep.subr.bf16.mxu0 %v1732
    %2207 = vmatpush1.bf16.msra.mxu0 %v1731
    %2208 = vmatprep.subr.bf16.mxu0 %v1716
    %2209 = vmatpush1.bf16.msra.mxu0 %v1715
    %2210 = vmatprep.subr.bf16.mxu0 %v1700
    %2211 = vmatpush1.bf16.msra.mxu0 %v1699
    %2212 = vmatprep.subr.bf16.mxu0 %v1684
    %2213 = vmatpush1.bf16.msra.mxu0 %v1683
    %2214 = vmatprep.subr.bf16.mxu0 %v1668
    %2215 = vmatpush1.bf16.msra.mxu0 %v1667
    %2216 = vmatprep.subr.bf16.mxu0 %v1652
    %2217 = vmatpush1.bf16.msra.mxu0 %v1651
    %2218 = vmatprep.subr.bf16.mxu0 %v1892
    %2219 = vmatpush2.bf16.msra.mxu0 %v1891
    %2220 = vmatprep.subr.bf16.mxu0 %v1876
    %2221 = vmatpush2.bf16.msra.mxu0 %v1875
    %2222 = vmatprep.subr.bf16.mxu0 %v1860
    %2223 = vmatpush2.bf16.msra.mxu0 %v1859
    %2224 = vmatprep.subr.bf16.mxu0 %v1844
    %2225 = vmatpush2.bf16.msra.mxu0 %v1843
    %2226 = vmatprep.subr.bf16.mxu0 %v1828
    %2227 = vmatpush2.bf16.msra.mxu0 %v1827
    %2228 = vmatprep.subr.bf16.mxu0 %v1812
    %2229 = vmatpush2.bf16.msra.mxu0 %v1811
    %2230 = vmatprep.subr.bf16.mxu0 %v1796
    %2231 = vmatpush2.bf16.msra.mxu0 %v1795
    %2232 = vmatprep.subr.bf16.mxu0 %v1780
    %2233 = vmatpush2.bf16.msra.mxu0 %v1779
    %2234 = vmatprep.mubr.bf16.mxu0 %v540
    %2235 = vmatmul.mubr.bf16.gmra.mxu0 %v539
    %v2236 = vpop.f32.mrf.mxu0
    %v2237 = vadd.f32 %v812, %v2236
    %v2238 = vpop.f32.mrf.mxu0
    %v2239 = vadd.f32 %v816, %v2238
    %v2240 = vpop.f32.mrf.mxu0
    %v2241 = vpop.f32.mrf.mxu0
    %2242 = vdwg.mxu0
    %2243 = vmatprep.subr.bf16.mxu0 %v1766
    %2244 = vmatpush1.bf16.msra.mxu0 %v1765
    %2245 = vmatprep.subr.bf16.mxu0 %v1750
    %2246 = vmatpush1.bf16.msra.mxu0 %v1749
    %2247 = vmatprep.subr.bf16.mxu0 %v1734
    %2248 = vmatpush1.bf16.msra.mxu0 %v1733
    %2249 = vmatprep.subr.bf16.mxu0 %v1718
    %2250 = vmatpush1.bf16.msra.mxu0 %v1717
    %2251 = vmatprep.subr.bf16.mxu0 %v1702
    %2252 = vmatpush1.bf16.msra.mxu0 %v1701
    %2253 = vmatprep.subr.bf16.mxu0 %v1686
    %2254 = vmatpush1.bf16.msra.mxu0 %v1685
    %2255 = vmatprep.subr.bf16.mxu0 %v1670
    %2256 = vmatpush1.bf16.msra.mxu0 %v1669
    %2257 = vmatprep.subr.bf16.mxu0 %v1654
    %2258 = vmatpush1.bf16.msra.mxu0 %v1653
    %2259 = vmatprep.subr.bf16.mxu0 %v1894
    %2260 = vmatpush2.bf16.msra.mxu0 %v1893
    %2261 = vmatprep.subr.bf16.mxu0 %v1878
    %2262 = vmatpush2.bf16.msra.mxu0 %v1877
    %2263 = vmatprep.subr.bf16.mxu0 %v1862
    %2264 = vmatpush2.bf16.msra.mxu0 %v1861
    %2265 = vmatprep.subr.bf16.mxu0 %v1846
    %2266 = vmatpush2.bf16.msra.mxu0 %v1845
    %2267 = vmatprep.subr.bf16.mxu0 %v1830
    %2268 = vmatpush2.bf16.msra.mxu0 %v1829
    %2269 = vmatprep.subr.bf16.mxu0 %v1814
    %2270 = vmatpush2.bf16.msra.mxu0 %v1813
    %2271 = vmatprep.subr.bf16.mxu0 %v1798
    %2272 = vmatpush2.bf16.msra.mxu0 %v1797
    %2273 = vmatprep.subr.bf16.mxu0 %v1782
    %2274 = vmatpush2.bf16.msra.mxu0 %v1781
    %2275 = vmatprep.mubr.bf16.mxu0 %v540
    %2276 = vmatmul.mubr.bf16.gmra.mxu0 %v539
    %v2277 = vpop.f32.mrf.mxu0
    %v2278 = vadd.f32 %v820, %v2277
    %v2279 = vpop.f32.mrf.mxu0
    %v2280 = vadd.f32 %v824, %v2279
    %v2281 = vpop.f32.mrf.mxu0
    %v2282 = vpop.f32.mrf.mxu0
    %2283 = vdwg.mxu0
    %2284 = vmatprep.subr.bf16.mxu0 %v1768
    %2285 = vmatpush1.bf16.msra.mxu0 %v1767
    %2286 = vmatprep.subr.bf16.mxu0 %v1752
    %2287 = vmatpush1.bf16.msra.mxu0 %v1751
    %2288 = vmatprep.subr.bf16.mxu0 %v1736
    %2289 = vmatpush1.bf16.msra.mxu0 %v1735
    %2290 = vmatprep.subr.bf16.mxu0 %v1720
    %2291 = vmatpush1.bf16.msra.mxu0 %v1719
    %2292 = vmatprep.subr.bf16.mxu0 %v1704
    %2293 = vmatpush1.bf16.msra.mxu0 %v1703
    %2294 = vmatprep.subr.bf16.mxu0 %v1688
    %2295 = vmatpush1.bf16.msra.mxu0 %v1687
    %2296 = vmatprep.subr.bf16.mxu0 %v1672
    %2297 = vmatpush1.bf16.msra.mxu0 %v1671
    %2298 = vmatprep.subr.bf16.mxu0 %v1656
    %2299 = vmatpush1.bf16.msra.mxu0 %v1655
    %2300 = vmatprep.subr.bf16.mxu0 %v1896
    %2301 = vmatpush2.bf16.msra.mxu0 %v1895
    %2302 = vmatprep.subr.bf16.mxu0 %v1880
    %2303 = vmatpush2.bf16.msra.mxu0 %v1879
    %2304 = vmatprep.subr.bf16.mxu0 %v1864
    %2305 = vmatpush2.bf16.msra.mxu0 %v1863
    %2306 = vmatprep.subr.bf16.mxu0 %v1848
    %2307 = vmatpush2.bf16.msra.mxu0 %v1847
    %2308 = vmatprep.subr.bf16.mxu0 %v1832
    %2309 = vmatpush2.bf16.msra.mxu0 %v1831
    %2310 = vmatprep.subr.bf16.mxu0 %v1816
    %2311 = vmatpush2.bf16.msra.mxu0 %v1815
    %2312 = vmatprep.subr.bf16.mxu0 %v1800
    %2313 = vmatpush2.bf16.msra.mxu0 %v1799
    %2314 = vmatprep.subr.bf16.mxu0 %v1784
    %2315 = vmatpush2.bf16.msra.mxu0 %v1783
    %2316 = vmatprep.mubr.bf16.mxu0 %v540
    %2317 = vmatmul.mubr.bf16.gmra.mxu0 %v539
    %v2318 = vpop.f32.mrf.mxu0
    %v2319 = vadd.f32 %v828, %v2318
    %v2320 = vpop.f32.mrf.mxu0
    %v2321 = vadd.f32 %v832, %v2320
    %v2322 = vpop.f32.mrf.mxu0
    %v2323 = vpop.f32.mrf.mxu0
    %2324 = vdwg.mxu0
    %2325 = vmatprep.subr.bf16.mxu0 %v1770
    %2326 = vmatpush1.bf16.msra.mxu0 %v1769
    %2327 = vmatprep.subr.bf16.mxu0 %v1754
    %2328 = vmatpush1.bf16.msra.mxu0 %v1753
    %2329 = vmatprep.subr.bf16.mxu0 %v1738
    %2330 = vmatpush1.bf16.msra.mxu0 %v1737
    %2331 = vmatprep.subr.bf16.mxu0 %v1722
    %2332 = vmatpush1.bf16.msra.mxu0 %v1721
    %2333 = vmatprep.subr.bf16.mxu0 %v1706
    %2334 = vmatpush1.bf16.msra.mxu0 %v1705
    %2335 = vmatprep.subr.bf16.mxu0 %v1690
    %2336 = vmatpush1.bf16.msra.mxu0 %v1689
    %2337 = vmatprep.subr.bf16.mxu0 %v1674
    %2338 = vmatpush1.bf16.msra.mxu0 %v1673
    %2339 = vmatprep.subr.bf16.mxu0 %v1658
    %2340 = vmatpush1.bf16.msra.mxu0 %v1657
    %2341 = vmatprep.subr.bf16.mxu0 %v1898
    %2342 = vmatpush2.bf16.msra.mxu0 %v1897
    %2343 = vmatprep.subr.bf16.mxu0 %v1882
    %2344 = vmatpush2.bf16.msra.mxu0 %v1881
    %2345 = vmatprep.subr.bf16.mxu0 %v1866
    %2346 = vmatpush2.bf16.msra.mxu0 %v1865
    %2347 = vmatprep.subr.bf16.mxu0 %v1850
    %2348 = vmatpush2.bf16.msra.mxu0 %v1849
    %2349 = vmatprep.subr.bf16.mxu0 %v1834
    %2350 = vmatpush2.bf16.msra.mxu0 %v1833
    %2351 = vmatprep.subr.bf16.mxu0 %v1818
    %2352 = vmatpush2.bf16.msra.mxu0 %v1817
    %2353 = vmatprep.subr.bf16.mxu0 %v1802
    %2354 = vmatpush2.bf16.msra.mxu0 %v1801
    %2355 = vmatprep.subr.bf16.mxu0 %v1786
    %2356 = vmatpush2.bf16.msra.mxu0 %v1785
    %2357 = vmatprep.mubr.bf16.mxu0 %v540
    %2358 = vmatmul.mubr.bf16.gmra.mxu0 %v539
    %v2359 = vpop.f32.mrf.mxu0
    %v2360 = vadd.f32 %v836, %v2359
    %v2361 = vpop.f32.mrf.mxu0
    %v2362 = vadd.f32 %v840, %v2361
    %v2363 = vpop.f32.mrf.mxu0
    %v2364 = vpop.f32.mrf.mxu0
    %2365 = vdwg.mxu0
    %2366 = vmatprep.subr.bf16.mxu0 %v1772
    %2367 = vmatpush1.bf16.msra.mxu0 %v1771
    %2368 = vmatprep.subr.bf16.mxu0 %v1756
    %2369 = vmatpush1.bf16.msra.mxu0 %v1755
    %2370 = vmatprep.subr.bf16.mxu0 %v1740
    %2371 = vmatpush1.bf16.msra.mxu0 %v1739
    %2372 = vmatprep.subr.bf16.mxu0 %v1724
    %2373 = vmatpush1.bf16.msra.mxu0 %v1723
    %2374 = vmatprep.subr.bf16.mxu0 %v1708
    %2375 = vmatpush1.bf16.msra.mxu0 %v1707
    %2376 = vmatprep.subr.bf16.mxu0 %v1692
    %2377 = vmatpush1.bf16.msra.mxu0 %v1691
    %2378 = vmatprep.subr.bf16.mxu0 %v1676
    %2379 = vmatpush1.bf16.msra.mxu0 %v1675
    %2380 = vmatprep.subr.bf16.mxu0 %v1660
    %2381 = vmatpush1.bf16.msra.mxu0 %v1659
    %2382 = vmatprep.subr.bf16.mxu0 %v1900
    %2383 = vmatpush2.bf16.msra.mxu0 %v1899
    %2384 = vmatprep.subr.bf16.mxu0 %v1884
    %2385 = vmatpush2.bf16.msra.mxu0 %v1883
    %2386 = vmatprep.subr.bf16.mxu0 %v1868
    %2387 = vmatpush2.bf16.msra.mxu0 %v1867
    %2388 = vmatprep.subr.bf16.mxu0 %v1852
    %2389 = vmatpush2.bf16.msra.mxu0 %v1851
    %2390 = vmatprep.subr.bf16.mxu0 %v1836
    %2391 = vmatpush2.bf16.msra.mxu0 %v1835
    %2392 = vmatprep.subr.bf16.mxu0 %v1820
    %2393 = vmatpush2.bf16.msra.mxu0 %v1819
    %2394 = vmatprep.subr.bf16.mxu0 %v1804
    %2395 = vmatpush2.bf16.msra.mxu0 %v1803
    %2396 = vmatprep.subr.bf16.mxu0 %v1788
    %2397 = vmatpush2.bf16.msra.mxu0 %v1787
    %2398 = vmatprep.mubr.bf16.mxu0 %v540
    %2399 = vmatmul.mubr.bf16.gmra.mxu0 %v539
    %v2400 = vpop.f32.mrf.mxu0
    %v2401 = vadd.f32 %v844, %v2400
    %v2402 = vpop.f32.mrf.mxu0
    %v2403 = vadd.f32 %v848, %v2402
    %v2404 = vpop.f32.mrf.mxu0
    %v2405 = vpop.f32.mrf.mxu0
    %2406 = vdwg.mxu0
    %2407 = vmatprep.subr.bf16.mxu0 %v1774
    %2408 = vmatpush1.bf16.msra.mxu0 %v1773
    %2409 = vmatprep.subr.bf16.mxu0 %v1758
    %2410 = vmatpush1.bf16.msra.mxu0 %v1757
    %2411 = vmatprep.subr.bf16.mxu0 %v1742
    %2412 = vmatpush1.bf16.msra.mxu0 %v1741
    %2413 = vmatprep.subr.bf16.mxu0 %v1726
    %2414 = vmatpush1.bf16.msra.mxu0 %v1725
    %2415 = vmatprep.subr.bf16.mxu0 %v1710
    %2416 = vmatpush1.bf16.msra.mxu0 %v1709
    %2417 = vmatprep.subr.bf16.mxu0 %v1694
    %2418 = vmatpush1.bf16.msra.mxu0 %v1693
    %2419 = vmatprep.subr.bf16.mxu0 %v1678
    %2420 = vmatpush1.bf16.msra.mxu0 %v1677
    %2421 = vmatprep.subr.bf16.mxu0 %v1662
    %2422 = vmatpush1.bf16.msra.mxu0 %v1661
    %2423 = vmatprep.subr.bf16.mxu0 %v1902
    %2424 = vmatpush2.bf16.msra.mxu0 %v1901
    %2425 = vmatprep.subr.bf16.mxu0 %v1886
    %2426 = vmatpush2.bf16.msra.mxu0 %v1885
    %2427 = vmatprep.subr.bf16.mxu0 %v1870
    %2428 = vmatpush2.bf16.msra.mxu0 %v1869
    %2429 = vmatprep.subr.bf16.mxu0 %v1854
    %2430 = vmatpush2.bf16.msra.mxu0 %v1853
    %2431 = vmatprep.subr.bf16.mxu0 %v1838
    %2432 = vmatpush2.bf16.msra.mxu0 %v1837
    %2433 = vmatprep.subr.bf16.mxu0 %v1822
    %2434 = vmatpush2.bf16.msra.mxu0 %v1821
    %2435 = vmatprep.subr.bf16.mxu0 %v1806
    %2436 = vmatpush2.bf16.msra.mxu0 %v1805
    %2437 = vmatprep.subr.bf16.mxu0 %v1790
    %2438 = vmatpush2.bf16.msra.mxu0 %v1789
    %2439 = vmatprep.mubr.bf16.mxu0 %v540
    %2440 = vmatmul.mubr.bf16.gmra.mxu0 %v539
    %v2441 = vpop.f32.mrf.mxu0
    %v2442 = vadd.f32 %v852, %v2441
    %v2443 = vpop.f32.mrf.mxu0
    %v2444 = vadd.f32 %v856, %v2443
    %v2445 = vpop.f32.mrf.mxu0
    %v2446 = vpop.f32.mrf.mxu0
    %2447 = vdwg.mxu0
    %2448 = vmatprep.subr.bf16.mxu0 %v1776
    %2449 = vmatpush1.bf16.msra.mxu0 %v1775
    %2450 = vmatprep.subr.bf16.mxu0 %v1760
    %2451 = vmatpush1.bf16.msra.mxu0 %v1759
    %2452 = vmatprep.subr.bf16.mxu0 %v1744
    %2453 = vmatpush1.bf16.msra.mxu0 %v1743
    %2454 = vmatprep.subr.bf16.mxu0 %v1728
    %2455 = vmatpush1.bf16.msra.mxu0 %v1727
    %2456 = vmatprep.subr.bf16.mxu0 %v1712
    %2457 = vmatpush1.bf16.msra.mxu0 %v1711
    %2458 = vmatprep.subr.bf16.mxu0 %v1696
    %2459 = vmatpush1.bf16.msra.mxu0 %v1695
    %2460 = vmatprep.subr.bf16.mxu0 %v1680
    %2461 = vmatpush1.bf16.msra.mxu0 %v1679
    %2462 = vmatprep.subr.bf16.mxu0 %v1664
    %2463 = vmatpush1.bf16.msra.mxu0 %v1663
    %2464 = vmatprep.subr.bf16.mxu0 %v1904
    %2465 = vmatpush2.bf16.msra.mxu0 %v1903
    %2466 = vmatprep.subr.bf16.mxu0 %v1888
    %2467 = vmatpush2.bf16.msra.mxu0 %v1887
    %2468 = vmatprep.subr.bf16.mxu0 %v1872
    %2469 = vmatpush2.bf16.msra.mxu0 %v1871
    %2470 = vmatprep.subr.bf16.mxu0 %v1856
    %2471 = vmatpush2.bf16.msra.mxu0 %v1855
    %2472 = vmatprep.subr.bf16.mxu0 %v1840
    %2473 = vmatpush2.bf16.msra.mxu0 %v1839
    %2474 = vmatprep.subr.bf16.mxu0 %v1824
    %2475 = vmatpush2.bf16.msra.mxu0 %v1823
    %2476 = vmatprep.subr.bf16.mxu0 %v1808
    %2477 = vmatpush2.bf16.msra.mxu0 %v1807
    %2478 = vmatprep.subr.bf16.mxu0 %v1792
    %2479 = vmatpush2.bf16.msra.mxu0 %v1791
    %2480 = vmatprep.mubr.bf16.mxu0 %v540
    %2481 = vmatmul.mubr.bf16.gmra.mxu0 %v539
    %v2482 = vpop.f32.mrf.mxu0
    %v2483 = vadd.f32 %v860, %v2482
    %v2484 = vpop.f32.mrf.mxu0
    %v2485 = vadd.f32 %v864, %v2484
    %v2486 = vpop.f32.mrf.mxu0
    %v2487 = vpop.f32.mrf.mxu0
    %2488 = vdwg.mxu0
    %v2489 = vmax.f32 %v2196, 0.0
    %v2490 = vmax.f32 %v2198, 0.0
    %v2491 = vmax.f32 %v2237, 0.0
    %v2492 = vmax.f32 %v2239, 0.0
    %v2493 = vmax.f32 %v2278, 0.0
    %v2494 = vmax.f32 %v2280, 0.0
    %v2495 = vmax.f32 %v2319, 0.0
    %v2496 = vmax.f32 %v2321, 0.0
    %v2497 = vmax.f32 %v2360, 0.0
    %v2498 = vmax.f32 %v2362, 0.0
    %v2499 = vmax.f32 %v2401, 0.0
    %v2500 = vmax.f32 %v2403, 0.0
    %v2501 = vmax.f32 %v2442, 0.0
    %v2502 = vmax.f32 %v2444, 0.0
    %v2503 = vmax.f32 %v2483, 0.0
    %v2504 = vmax.f32 %v2485, 0.0
    %v2521 = vcombine.low %v2489, %v2490
    %v2522 = vcombine.low %v2491, %v2492
    %v2524 = vunpack.c.l.s4 1983009808
    %v2525 = vunpack.c.0.s8 %v2524
    %v2526 = vlaneseq
    %v2527 = vshrl.u32 %v2526, 7
    %v2528 = vsub.s32 %v2525, %v2527
    %v2529 = vrot.slane %v2521, %v2528
    %v2531 = vunpack.c.l.s4 1983009808
    %v2532 = vunpack.c.0.s8 %v2531
    %v2533 = vlaneseq
    %v2534 = vshrl.u32 %v2533, 7
    %v2535 = vsub.s32 %v2532, %v2534
    %v2536 = vrot.slane %v2522, %v2535
    %v2537 = vcombine.low %v2529, %v2536
    %v2538 = vcombine.low %v2493, %v2494
    %v2539 = vcombine.low %v2495, %v2496
    %v2541 = vunpack.c.l.s4 1983009808
    %v2542 = vunpack.c.0.s8 %v2541
    %v2543 = vlaneseq
    %v2544 = vshrl.u32 %v2543, 7
    %v2545 = vsub.s32 %v2542, %v2544
    %v2546 = vrot.slane %v2538, %v2545
    %v2548 = vunpack.c.l.s4 1983009808
    %v2549 = vunpack.c.0.s8 %v2548
    %v2550 = vlaneseq
    %v2551 = vshrl.u32 %v2550, 7
    %v2552 = vsub.s32 %v2549, %v2551
    %v2553 = vrot.slane %v2539, %v2552
    %v2554 = vcombine.low %v2546, %v2553
    %v2555 = vcombine.low %v2497, %v2498
    %v2556 = vcombine.low %v2499, %v2500
    %v2558 = vunpack.c.l.s4 1983009808
    %v2559 = vunpack.c.0.s8 %v2558
    %v2560 = vlaneseq
    %v2561 = vshrl.u32 %v2560, 7
    %v2562 = vsub.s32 %v2559, %v2561
    %v2563 = vrot.slane %v2555, %v2562
    %v2565 = vunpack.c.l.s4 1983009808
    %v2566 = vunpack.c.0.s8 %v2565
    %v2567 = vlaneseq
    %v2568 = vshrl.u32 %v2567, 7
    %v2569 = vsub.s32 %v2566, %v2568
    %v2570 = vrot.slane %v2556, %v2569
    %v2571 = vcombine.low %v2563, %v2570
    %v2572 = vcombine.low %v2501, %v2502
    %v2573 = vcombine.low %v2503, %v2504
    %v2575 = vunpack.c.l.s4 1983009808
    %v2576 = vunpack.c.0.s8 %v2575
    %v2577 = vlaneseq
    %v2578 = vshrl.u32 %v2577, 7
    %v2579 = vsub.s32 %v2576, %v2578
    %v2580 = vrot.slane %v2572, %v2579
    %v2582 = vunpack.c.l.s4 1983009808
    %v2583 = vunpack.c.0.s8 %v2582
    %v2584 = vlaneseq
    %v2585 = vshrl.u32 %v2584, 7
    %v2586 = vsub.s32 %v2583, %v2585
    %v2587 = vrot.slane %v2573, %v2586
    %v2588 = vcombine.low %v2580, %v2587
    %2593 = vst [vmem:[#allocation2] sm:$0xff] %v2537
    %2594 = vst [vmem:[#allocation2 + $0x8] sm:$0xff] %v2554
    %2595 = vst [vmem:[#allocation2 + $0x10] sm:$0xff] %v2571
    %2596 = vst [vmem:[#allocation2 + $0x18] sm:$0xff] %v2588
    // Predicated region
    $region22: #{private_forward.5} parent=1 // pred_check
      _
    $region23: #{private_forward.5} parent=1 // pred_check_branch
      %2598 = sbr.rel (0) target = $region25
    $region24: #{private_forward.5} parent=1 // pred_region
      %s2600 = ssub.s32 512, 512
      %2601 = vsyncadd [#allocation3], %s2600
      %s2603 = sshll.u32 [#allocation2], 4
      %s2604 = int_to_ptr.vmem [resolvable:$true] %s2603
      %2606 = dma.vmem_to_hbm [thread:$0]  %s2604, 512, %s5, [#allocation3]
    $region25: #{private_forward.5} parent=1 // pred_fallthru
      _
    // Predicated region
    $region26: #{private_forward.5} parent=1 // pred_check
      _
    $region27: #{private_forward.5} parent=1 // pred_check_branch
      %2608 = sbr.rel (0) target = $region29
    $region28: #{private_forward.5} parent=1 // pred_region
      %2609 = dma.done [#allocation3], 512
    $region29: #{private_forward.5} parent=1 // pred_fallthru
      _
    %2610 = vsyncpa [#allocation3], 1

</llo_original>
